<compile_context>
chip_gen: v7x
topology: tpu7x:2x2x1
jax: 0.10.0
libtpu: 0.0.40
codegen_flags: <defaults>
</compile_context>

<pallas_src>
import functools
import math

import jax
import jax.numpy as jnp
from jax import lax
from jax.experimental import pallas as pl
from jax.experimental.pallas import tpu as pltpu

_BN_EPS = 1e-5


def _attn_kernel(*refs, nh, hc, c1, has_ec):
    """Fused MaxSigmoidAttnBlock forward for one (batch, spatial-tile) step.

    refs (inputs, then output):
      x9_ref     (1, t_hw, 9*c1)  bf16 im2col block, CENTER TAP FIRST
      guide_ref  (1, n, gc)       bf16
      w_gl_ref   (gc, ec) bf16, b_gl_ref (1, ec) f32        guide Linear
      [w_ec_ref  (c1, ec) bf16, b_ec_ref (1, ec) f32]       folded 1x1 conv+BN
      w_proj_ref (9*c1, c2p) bf16, b_proj_ref (1, c2p) f32  folded 3x3 conv+BN
      expand_ref (nh, c2p) f32    head -> lane 0/1 expansion matrix
      bias_ref   (1, nh) f32      per-head attention bias
      scale_ref  (1, nh) f32      per-head output scale
      out_ref    (1, t_hw, c2p)
    """
    it = iter(refs)
    x9_ref, guide_ref, w_gl_ref, b_gl_ref = next(it), next(it), next(it), next(it)
    if has_ec:
        w_ec_ref, b_ec_ref = next(it), next(it)
    (w_proj_ref, b_proj_ref, expand_ref, bias_ref, scale_ref, out_ref) = (
        next(it), next(it), next(it), next(it), next(it), next(it))

    x9 = x9_ref[0]                                        # (t_hw, 9*c1) bf16

    # ---- 3x3 projection conv (+ folded BN): one wide-K MXU matmul ----------
    proj = jnp.dot(x9, w_proj_ref[...], preferred_element_type=jnp.float32)
    proj = proj + b_proj_ref[...]                         # (t_hw, c2p) f32

    # ---- guide Linear (tiny MXU matmul) -------------------------------------
    gp = jnp.dot(guide_ref[0], w_gl_ref[...], preferred_element_type=jnp.float32)
    gp = gp + b_gl_ref[...]                               # (n, ec) f32

    # ---- 1x1 embed conv (+ folded BN); reuses the center-tap im2col columns -
    xc = x9[:, :c1]                                       # (t_hw, c1) bf16
    if has_ec:
        embed = jnp.dot(xc, w_ec_ref[...], preferred_element_type=jnp.float32)
        embed = embed + b_ec_ref[...]                     # (t_hw, ec) f32
    else:
        embed = xc.astype(jnp.float32)                    # module uses x when c1 == ec

    # ---- per-head max attention scalars -> (t_hw, nh) ------------------------
    embed_b = embed.astype(jnp.bfloat16)
    gp_b = gp.astype(jnp.bfloat16)
    cols = []
    for m in range(nh):
        e_m = embed_b[:, m * hc:(m + 1) * hc]             # (t_hw, hc)
        g_m = gp_b[:, m * hc:(m + 1) * hc]                # (n, hc)
        s_m = lax.dot_general(e_m, g_m, (((1,), (1,)), ((), ())),
                              preferred_element_type=jnp.float32)   # (t_hw, n)
        cols.append(jnp.max(s_m, axis=-1, keepdims=True))
    aw = cols[0] if nh == 1 else jnp.concatenate(cols, axis=-1)     # (t_hw, nh)

    # ---- sigmoid(aw / sqrt(hc) + bias) * scale (EUP exp + approx reciprocal) -
    z = aw * (1.0 / math.sqrt(hc)) + bias_ref[...]
    aw = pl.reciprocal(1.0 + jnp.exp(-z), approx=True) * scale_ref[...]

    # ---- expand per-head scalars to full lane width, modulate, store --------
    aw_full = jnp.dot(aw, expand_ref[...],
                      preferred_element_type=jnp.float32)           # (t_hw, c2p)
    out_ref[0] = (proj * aw_full).astype(out_ref.dtype)


def _fold_bn(w, gamma, beta, mean, var, eps=_BN_EPS):
    """Fold inference-mode BatchNorm into a bias-free conv: returns (w', b')."""
    s = gamma / jnp.sqrt(var + eps)
    return w * s[:, None, None, None], beta - mean * s


def _round_up(v, m):
    return (v + m - 1) // m * m


def _pick_spatial_tile(hw, bytes_per_row, target_bytes=4 << 20):
    """Largest multiple-of-8 divisor of hw whose per-step block fits the target."""
    if hw % 8 != 0:
        return hw
    divisors = [d for d in range(8, hw + 1, 8) if hw % d == 0]
    fitting = [d for d in divisors if d * bytes_per_row <= target_bytes]
    return max(fitting) if fitting else min(divisors)


def max_sigmoid_attn_block(x, guide, params, *, nh):
    """Pallas MaxSigmoidAttnBlock forward.

    x:     (bs, c1, h, w) NCHW.  guide: (bs, n, gc).
    params: gl_w (ec,gc), gl_b (ec,), [ec_w (ec,c1,1,1) + ec_bn_{g,b,m,v}],
            proj_w (c2,c1,3,3) + proj_bn_{g,b,m,v}, bias (nh,), [scale (1,nh,1,1)].
    Returns (bs, c2, h, w) NCHW.
    """
    bs, c1, h, w = map(int, x.shape)
    n, gc = int(guide.shape[1]), int(guide.shape[2])
    ec = int(params['gl_w'].shape[0])
    c2 = int(params['proj_w'].shape[0])
    assert c2 % nh == 0
    hc = c2 // nh
    assert ec == nh * hc, "MaxSigmoidAttnBlock requires ec == c2"
    has_ec = 'ec_w' in params
    assert has_ec == (c1 != ec)
    hw = h * w
    c2p = _round_up(c2, 128)                      # lane-dense output width
    cdt = jnp.bfloat16                            # MXU operand dtype

    # ---- layout plumbing: channels-last bf16 im2col (CENTER TAP FIRST) ------
    taps = [(1, 1)] + [(dy, dx) for dy in range(3) for dx in range(3)
                       if (dy, dx) != (1, 1)]
    x_cl = jnp.transpose(x, (0, 2, 3, 1)).astype(cdt)                # (bs,h,w,c1)
    x_pad = jnp.pad(x_cl, ((0, 0), (1, 1), (1, 1), (0, 0)))          # zero pad 1
    x9 = jnp.concatenate([x_pad[:, dy:dy + h, dx:dx + w, :] for dy, dx in taps],
                         axis=-1).reshape(bs, hw, 9 * c1)            # (bs,hw,9c1)

    # ---- fold BN, lay weights out for channels-last matmuls -----------------
    w_gl = params['gl_w'].astype(jnp.float32).T.astype(cdt)          # (gc, ec)
    b_gl = params['gl_b'].astype(jnp.float32).reshape(1, ec)

    if has_ec:
        wef, bef = _fold_bn(params['ec_w'].astype(jnp.float32),
                            params['ec_bn_g'], params['ec_bn_b'],
                            params['ec_bn_m'], params['ec_bn_v'])
        w_ec = wef[:, :, 0, 0].T.astype(cdt)                         # (c1, ec)
        b_ec = bef.reshape(1, ec).astype(jnp.float32)

    wpf, bpf = _fold_bn(params['proj_w'].astype(jnp.float32),
                        params['proj_bn_g'], params['proj_bn_b'],
                        params['proj_bn_m'], params['proj_bn_v'])
    w_proj = jnp.stack([wpf[:, :, dy, dx].T for dy, dx in taps], 0)  # (9,c1,c2)
    w_proj = w_proj.reshape(9 * c1, c2)
    w_proj = jnp.pad(w_proj, ((0, 0), (0, c2p - c2))).astype(cdt)    # (9c1,c2p)
    b_proj = jnp.pad(bpf.reshape(1, c2).astype(jnp.float32),
                     ((0, 0), (0, c2p - c2)))                        # (1,c2p)

    # head -> lane 0/1 expansion matrix (padded lanes stay zero)
    expand = (jnp.arange(nh)[:, None] ==
              (jnp.arange(c2p)[None, :] // hc)).astype(jnp.float32)  # (nh,c2p)

    bias_row = params['bias'].reshape(1, nh).astype(jnp.float32)
    if 'scale' in params:
        scale_row = jnp.asarray(params['scale'], jnp.float32).reshape(1, nh)
    else:
        scale_row = jnp.ones((1, nh), jnp.float32)

    args = [x9, guide.astype(cdt), w_gl, b_gl]
    if has_ec:
        args += [w_ec, b_ec]
    args += [w_proj, b_proj, expand, bias_row, scale_row]

    # ---- spatial tiling: rows of hw per grid step (no halo after im2col) ----
    out_itemsize = jnp.dtype(x.dtype).itemsize
    bytes_per_row = 9 * c1 * 2 + c2p * out_itemsize
    t_hw = _pick_spatial_tile(hw, bytes_per_row)
    n_s = hw // t_hw

    # ---- VMEM budget (generous), clamped to the chip's physical capacity ----
    def nb(a):
        return int(a.size) * a.dtype.itemsize

    weight_bytes = sum(nb(a) for a in args[2:])
    per_step = (2 * (t_hw * 9 * c1 * 2 + n * gc * 2 + t_hw * c2p * out_itemsize)
                + 2 * weight_bytes                        # assume double-buffered
                + t_hw * (ec + 2 * c2p + n + nh) * 4)     # f32 temporaries
    try:
        vmem_cap = int(getattr(pltpu.get_tpu_info(), 'vmem_capacity_bytes',
                               64 << 20))
    except Exception:                                     # pragma: no cover
        vmem_cap = 64 << 20                               # v7x-safe fallback
    vmem_limit = int(min(max(per_step + (8 << 20), 32 << 20),
                         (vmem_cap * 3) // 4))

    cost = pl.CostEstimate(
        flops=(2 * bs * hw * (9 * c1 * c2p + (c1 * ec if has_ec else 0)
                              + ec * n + nh * c2p)
               + 2 * bs * n_s * n * gc * ec),
        transcendentals=2 * bs * hw * nh,
        bytes_accessed=sum(nb(a) for a in args) + bs * hw * c2p * out_itemsize,
    )

    kernel = functools.partial(_attn_kernel, nh=nh, hc=hc, c1=c1, has_ec=has_ec)

    def build_and_run(single_buffer_consts):
        const_kw = ({'pipeline_mode': pl.Buffered(1)}
                    if single_buffer_consts else {})

        def const_spec(shape):
            return pl.BlockSpec(shape, lambda b, s: (0,) * len(shape), **const_kw)

        in_specs = [
            pl.BlockSpec((1, t_hw, 9 * c1), lambda b, s: (b, s, 0)),
            pl.BlockSpec((1, n, gc), lambda b, s: (b, 0, 0)),
            const_spec((gc, ec)), const_spec((1, ec)),
        ]
        if has_ec:
            in_specs += [const_spec((c1, ec)), const_spec((1, ec))]
        in_specs += [const_spec((9 * c1, c2p)), const_spec((1, c2p)),
                     const_spec((nh, c2p)), const_spec((1, nh)),
                     const_spec((1, nh))]

        return pl.pallas_call(
            kernel,
            out_shape=jax.ShapeDtypeStruct((bs, hw, c2p), x.dtype),
            grid=(bs, n_s),
            in_specs=in_specs,
            out_specs=pl.BlockSpec((1, t_hw, c2p), lambda b, s: (b, s, 0)),
            compiler_params=pltpu.CompilerParams(
                dimension_semantics=("parallel", "parallel"),
                vmem_limit_bytes=vmem_limit),
            cost_estimate=cost,
        )(*args)

    try:
        out_flat = build_and_run(True)
    except Exception:
        # TODO(synk): pipeline_mode=pl.Buffered(1) (single-buffered constant
        # weights) unsupported by this jax version; fall back to the default
        # double-buffered weight blocks (correctness identical).
        out_flat = build_and_run(False)

    out_cl = out_flat[:, :, :c2].reshape(bs, h, w, c2)
    return jnp.transpose(out_cl, (0, 3, 1, 2))


# ---------------------------------------------------------------------------
# Pure-JAX reference (mirrors the PyTorch forward exactly, explicit BN, f32).
def _conv_bn_ref(x, w, gamma, beta, mean, var, padding, eps=_BN_EPS):
    y = lax.conv_general_dilated(x, w, window_strides=(1, 1), padding=padding,
                                 dimension_numbers=('NCHW', 'OIHW', 'NCHW'))
    s = gamma / jnp.sqrt(var + eps)
    return y * s[None, :, None, None] + (beta - mean * s)[None, :, None, None]


def max_sigmoid_attn_block_ref(x, guide, params, *, nh):
    bs, c1, h, w = x.shape
    c2 = params['proj_w'].shape[0]
    hc = c2 // nh
    gp = guide @ params['gl_w'].T + params['gl_b']                   # (bs, n, ec)
    gp = gp.reshape(bs, -1, nh, hc)
    if 'ec_w' in params:
        embed = _conv_bn_ref(x, params['ec_w'], params['ec_bn_g'], params['ec_bn_b'],
                             params['ec_bn_m'], params['ec_bn_v'], ((0, 0), (0, 0)))
    else:
        embed = x
    embed = embed.reshape(bs, nh, hc, h, w)
    aw = jnp.einsum('bmchw,bnmc->bmhwn', embed, gp)
    aw = jnp.max(aw, axis=-1)
    aw = aw / math.sqrt(hc) + params['bias'][None, :, None, None]
    aw = jax.nn.sigmoid(aw)
    if 'scale' in params:
        aw = aw * params['scale'].reshape(1, nh, 1, 1)
    y = _conv_bn_ref(x, params['proj_w'], params['proj_bn_g'], params['proj_bn_b'],
                     params['proj_bn_m'], params['proj_bn_v'], ((1, 1), (1, 1)))
    y = y.reshape(bs, nh, hc, h, w) * aw[:, :, None]
    return y.reshape(bs, c2, h, w)


if __name__ == "__main__":
    key = jax.random.PRNGKey(0)
    keys = jax.random.split(key, 16)

    bs, c1, c2 = 2, 16, 32
    nh, ec, gc = 2, 32, 64          # hc = 16; ec == c2, c1 != ec -> ec conv active
    h = w = 16
    n_guide = 8

    x = jax.random.normal(keys[0], (bs, c1, h, w), jnp.float32)
    guide = jax.random.normal(keys[1], (bs, n_guide, gc), jnp.float32)

    params = {
        'gl_w': jax.random.normal(keys[2], (ec, gc), jnp.float32) * 0.1,
        'gl_b': jax.random.normal(keys[3], (ec,), jnp.float32) * 0.1,
        'ec_w': jax.random.normal(keys[4], (ec, c1, 1, 1), jnp.float32) * 0.1,
        'ec_bn_g': jax.random.uniform(keys[5], (ec,), jnp.float32, 0.5, 1.5),
        'ec_bn_b': jax.random.normal(keys[6], (ec,), jnp.float32) * 0.1,
        'ec_bn_m': jax.random.normal(keys[7], (ec,), jnp.float32) * 0.1,
        'ec_bn_v': jax.random.uniform(keys[8], (ec,), jnp.float32, 0.5, 1.5),
        'proj_w': jax.random.normal(keys[9], (c2, c1, 3, 3), jnp.float32) * 0.1,
        'proj_bn_g': jax.random.uniform(keys[10], (c2,), jnp.float32, 0.5, 1.5),
        'proj_bn_b': jax.random.normal(keys[11], (c2,), jnp.float32) * 0.1,
        'proj_bn_m': jax.random.normal(keys[12], (c2,), jnp.float32) * 0.1,
        'proj_bn_v': jax.random.uniform(keys[13], (c2,), jnp.float32, 0.5, 1.5),
        'bias': jax.random.normal(keys[14], (nh,), jnp.float32) * 0.1,
        'scale': jax.random.uniform(keys[15], (1, nh, 1, 1), jnp.float32, 0.5, 1.5),
    }

    out = max_sigmoid_attn_block(x, guide, params, nh=nh)
    out = jax.block_until_ready(out)

    ref = max_sigmoid_attn_block_ref(x, guide, params, nh=nh)
    assert out.shape == ref.shape == (bs, c2, h, w)
    err = float(jnp.max(jnp.abs(out - ref)))
    # bf16 MXU operands + approx reciprocal -> bf16-level tolerance vs f32 ref.
    assert jnp.allclose(out, ref, atol=5e-2, rtol=5e-2), f"max abs err {err}"

    print("KERNEL_OK")
</pallas_src>

<mosaic_0001>
module attributes {stable_mosaic.version = 11 : i64} {
  func.func @_attn_kernel(%arg0: i32, %arg1: i32, %arg2: memref<1x256x144xbf16, #tpu.memory_space<vmem>>, %arg3: memref<1x8x64xbf16, #tpu.memory_space<vmem>>, %arg4: memref<64x32xbf16, #tpu.memory_space<vmem>>, %arg5: memref<1x32xf32, #tpu.memory_space<vmem>>, %arg6: memref<16x32xbf16, #tpu.memory_space<vmem>>, %arg7: memref<1x32xf32, #tpu.memory_space<vmem>>, %arg8: memref<144x128xbf16, #tpu.memory_space<vmem>>, %arg9: memref<1x128xf32, #tpu.memory_space<vmem>>, %arg10: memref<2x128xf32, #tpu.memory_space<vmem>>, %arg11: memref<1x2xf32, #tpu.memory_space<vmem>>, %arg12: memref<1x2xf32, #tpu.memory_space<vmem>>, %arg13: memref<1x256x128xf32, #tpu.memory_space<vmem>>) attributes {dimension_semantics = [#tpu.dimension_semantics<parallel>, #tpu.dimension_semantics<parallel>], iteration_bounds = array<i64: 2, 1>, scalar_prefetch = 0 : i64, scratch_operands = 0 : i64, tpu.core_type = #tpu.core_type<tc>, window_params = [{transform_indices = @transform_0, window_bounds = array<i64: 1, 256, 144>}, {transform_indices = @transform_1, window_bounds = array<i64: 1, 8, 64>}, {pipeline_mode = #tpu.pipeline_mode<synchronous>, transform_indices = @transform_2, window_bounds = array<i64: 64, 32>}, {pipeline_mode = #tpu.pipeline_mode<synchronous>, transform_indices = @transform_3, window_bounds = array<i64: 1, 32>}, {pipeline_mode = #tpu.pipeline_mode<synchronous>, transform_indices = @transform_4, window_bounds = array<i64: 16, 32>}, {pipeline_mode = #tpu.pipeline_mode<synchronous>, transform_indices = @transform_5, window_bounds = array<i64: 1, 32>}, {pipeline_mode = #tpu.pipeline_mode<synchronous>, transform_indices = @transform_6, window_bounds = array<i64: 144, 128>}, {pipeline_mode = #tpu.pipeline_mode<synchronous>, transform_indices = @transform_7, window_bounds = array<i64: 1, 128>}, {pipeline_mode = #tpu.pipeline_mode<synchronous>, transform_indices = @transform_8, window_bounds = array<i64: 2, 128>}, {pipeline_mode = #tpu.pipeline_mode<synchronous>, transform_indices = @transform_9, window_bounds = array<i64: 1, 2>}, {pipeline_mode = #tpu.pipeline_mode<synchronous>, transform_indices = @transform_10, window_bounds = array<i64: 1, 2>}, {transform_indices = @transform_11, window_bounds = array<i64: 1, 256, 128>}]} {
    %c0 = arith.constant 0 : index
    %c0_0 = arith.constant 0 : index
    %c0_1 = arith.constant 0 : index
    %0 = vector.load %arg2[%c0, %c0_0, %c0_1] : memref<1x256x144xbf16, #tpu.memory_space<vmem>>, vector<1x256x144xbf16>
    %1 = vector.shape_cast %0 : vector<1x256x144xbf16> to vector<256x144xbf16>
    %c0_2 = arith.constant 0 : index
    %c0_3 = arith.constant 0 : index
    %2 = vector.load %arg8[%c0_2, %c0_3] : memref<144x128xbf16, #tpu.memory_space<vmem>>, vector<144x128xbf16>
    %cst = arith.constant dense<0.000000e+00> : vector<256x128xf32>
    %3 = tpu.matmul %1, %2, %cst {dimension_numbers = #tpu.dot_dimension_numbers<[1], [0], [0], [1], [0, 0, 1, 1], [], []>} : vector<256x144xbf16>, vector<144x128xbf16>, vector<256x128xf32> -> vector<256x128xf32>
    %c0_4 = arith.constant 0 : index
    %c0_5 = arith.constant 0 : index
    %4 = vector.load %arg9[%c0_4, %c0_5] : memref<1x128xf32, #tpu.memory_space<vmem>>, vector<1x128xf32>
    %5 = vector.broadcast %4 : vector<1x128xf32> to vector<256x128xf32>
    %6 = arith.addf %3, %5 : vector<256x128xf32>
    %c0_6 = arith.constant 0 : index
    %c0_7 = arith.constant 0 : index
    %c0_8 = arith.constant 0 : index
    %7 = vector.load %arg3[%c0_6, %c0_7, %c0_8] : memref<1x8x64xbf16, #tpu.memory_space<vmem>>, vector<1x8x64xbf16>
    %8 = vector.shape_cast %7 : vector<1x8x64xbf16> to vector<8x64xbf16>
    %c0_9 = arith.constant 0 : index
    %c0_10 = arith.constant 0 : index
    %9 = vector.load %arg4[%c0_9, %c0_10] : memref<64x32xbf16, #tpu.memory_space<vmem>>, vector<64x32xbf16>
    %cst_11 = arith.constant dense<0.000000e+00> : vector<8x32xf32>
    %10 = tpu.matmul %8, %9, %cst_11 {dimension_numbers = #tpu.dot_dimension_numbers<[1], [0], [0], [1], [0, 0, 1, 1], [], []>} : vector<8x64xbf16>, vector<64x32xbf16>, vector<8x32xf32> -> vector<8x32xf32>
    %c0_12 = arith.constant 0 : index
    %c0_13 = arith.constant 0 : index
    %11 = vector.load %arg5[%c0_12, %c0_13] : memref<1x32xf32, #tpu.memory_space<vmem>>, vector<1x32xf32>
    %12 = vector.broadcast %11 : vector<1x32xf32> to vector<8x32xf32>
    %13 = arith.addf %10, %12 : vector<8x32xf32>
    %14 = vector.extract_strided_slice %1 {offsets = [0, 0], sizes = [256, 16], strides = [1, 1]} : vector<256x144xbf16> to vector<256x16xbf16>
    %c0_14 = arith.constant 0 : index
    %c0_15 = arith.constant 0 : index
    %15 = vector.load %arg6[%c0_14, %c0_15] : memref<16x32xbf16, #tpu.memory_space<vmem>>, vector<16x32xbf16>
    %cst_16 = arith.constant dense<0.000000e+00> : vector<256x32xf32>
    %16 = tpu.matmul %14, %15, %cst_16 {dimension_numbers = #tpu.dot_dimension_numbers<[1], [0], [0], [1], [0, 0, 1, 1], [], []>} : vector<256x16xbf16>, vector<16x32xbf16>, vector<256x32xf32> -> vector<256x32xf32>
    %c0_17 = arith.constant 0 : index
    %c0_18 = arith.constant 0 : index
    %17 = vector.load %arg7[%c0_17, %c0_18] : memref<1x32xf32, #tpu.memory_space<vmem>>, vector<1x32xf32>
    %18 = vector.broadcast %17 : vector<1x32xf32> to vector<256x32xf32>
    %19 = arith.addf %16, %18 : vector<256x32xf32>
    %20 = arith.truncf %19 : vector<256x32xf32> to vector<256x32xbf16>
    %21 = arith.truncf %13 : vector<8x32xf32> to vector<8x32xbf16>
    %22 = vector.extract_strided_slice %20 {offsets = [0, 0], sizes = [256, 16], strides = [1, 1]} : vector<256x32xbf16> to vector<256x16xbf16>
    %23 = vector.extract_strided_slice %21 {offsets = [0, 0], sizes = [8, 16], strides = [1, 1]} : vector<8x32xbf16> to vector<8x16xbf16>
    %cst_19 = arith.constant dense<0.000000e+00> : vector<256x8xf32>
    %24 = tpu.matmul %22, %23, %cst_19 {dimension_numbers = #tpu.dot_dimension_numbers<[1], [1], [0], [0], [0, 0, 1, 0], [], []>} : vector<256x16xbf16>, vector<8x16xbf16>, vector<256x8xf32> -> vector<256x8xf32>
    %cst_20 = arith.constant dense<0xFF800000> : vector<256xf32>
    %25 = vector.multi_reduction <maximumf>, %24, %cst_20 [1] : vector<256x8xf32> to vector<256xf32>
    %26 = vector.shape_cast %25 : vector<256xf32> to vector<256x1xf32>
    %27 = vector.extract_strided_slice %20 {offsets = [0, 16], sizes = [256, 16], strides = [1, 1]} : vector<256x32xbf16> to vector<256x16xbf16>
    %28 = vector.extract_strided_slice %21 {offsets = [0, 16], sizes = [8, 16], strides = [1, 1]} : vector<8x32xbf16> to vector<8x16xbf16>
    %cst_21 = arith.constant dense<0.000000e+00> : vector<256x8xf32>
    %29 = tpu.matmul %27, %28, %cst_21 {dimension_numbers = #tpu.dot_dimension_numbers<[1], [1], [0], [0], [0, 0, 1, 0], [], []>} : vector<256x16xbf16>, vector<8x16xbf16>, vector<256x8xf32> -> vector<256x8xf32>
    %cst_22 = arith.constant dense<0xFF800000> : vector<256xf32>
    %30 = vector.multi_reduction <maximumf>, %29, %cst_22 [1] : vector<256x8xf32> to vector<256xf32>
    %31 = vector.shape_cast %30 : vector<256xf32> to vector<256x1xf32>
    %32 = tpu.concatenate %26, %31 in 1 : vector<256x1xf32>, vector<256x1xf32> -> vector<256x2xf32>
    %cst_23 = arith.constant 2.500000e-01 : f32
    %33 = vector.broadcast %cst_23 : f32 to vector<256x2xf32>
    %34 = arith.mulf %32, %33 : vector<256x2xf32>
    %c0_24 = arith.constant 0 : index
    %c0_25 = arith.constant 0 : index
    %35 = vector.load %arg11[%c0_24, %c0_25] : memref<1x2xf32, #tpu.memory_space<vmem>>, vector<1x2xf32>
    %36 = vector.broadcast %35 : vector<1x2xf32> to vector<256x2xf32>
    %37 = arith.addf %34, %36 : vector<256x2xf32>
    %cst_26 = arith.constant 0.000000e+00 : f32
    %38 = vector.broadcast %cst_26 : f32 to vector<256x2xf32>
    %39 = arith.subf %38, %37 : vector<256x2xf32>
    %40 = math.exp %39 : vector<256x2xf32>
    %cst_27 = arith.constant 1.000000e+00 : f32
    %41 = vector.broadcast %cst_27 : f32 to vector<256x2xf32>
    %42 = arith.addf %41, %40 : vector<256x2xf32>
    %43 = tpu.reciprocal %42 {approx = true} : vector<256x2xf32> -> vector<256x2xf32>
    %c0_28 = arith.constant 0 : index
    %c0_29 = arith.constant 0 : index
    %44 = vector.load %arg12[%c0_28, %c0_29] : memref<1x2xf32, #tpu.memory_space<vmem>>, vector<1x2xf32>
    %45 = vector.broadcast %44 : vector<1x2xf32> to vector<256x2xf32>
    %46 = arith.mulf %43, %45 : vector<256x2xf32>
    %c0_30 = arith.constant 0 : index
    %c0_31 = arith.constant 0 : index
    %47 = vector.load %arg10[%c0_30, %c0_31] : memref<2x128xf32, #tpu.memory_space<vmem>>, vector<2x128xf32>
    %cst_32 = arith.constant dense<0.000000e+00> : vector<256x128xf32>
    %48 = tpu.matmul %46, %47, %cst_32 {dimension_numbers = #tpu.dot_dimension_numbers<[1], [0], [0], [1], [0, 0, 1, 1], [], []>} : vector<256x2xf32>, vector<2x128xf32>, vector<256x128xf32> -> vector<256x128xf32>
    %49 = arith.mulf %6, %48 : vector<256x128xf32>
    %c0_33 = arith.constant 0 : index
    %c0_34 = arith.constant 0 : index
    %c0_35 = arith.constant 0 : index
    %50 = vector.load %arg13[%c0_33, %c0_34, %c0_35] : memref<1x256x128xf32, #tpu.memory_space<vmem>>, vector<1x256x128xf32>
    %51 = vector.shape_cast %50 : vector<1x256x128xf32> to vector<256x128xf32>
    %52 = vector.shape_cast %49 : vector<256x128xf32> to vector<1x256x128xf32>
    tpu.vector_store %arg13[%c0_33, %c0_34, %c0_35], %52 {strides = array<i32>} : memref<1x256x128xf32, #tpu.memory_space<vmem>>, vector<1x256x128xf32>,
    return
  }
  func.func @transform_0(%arg0: i32, %arg1: i32) -> (i32, i32, i32) {
    %c0_i32 = arith.constant 0 : i32
    %c0_i32_0 = arith.constant 0 : i32
    return %arg0, %arg1, %c0_i32 : i32, i32, i32
  }
  func.func @transform_1(%arg0: i32, %arg1: i32) -> (i32, i32, i32) {
    %c0_i32 = arith.constant 0 : i32
    %c0_i32_0 = arith.constant 0 : i32
    %c0_i32_1 = arith.constant 0 : i32
    return %arg0, %c0_i32, %c0_i32_0 : i32, i32, i32
  }
  func.func @transform_2(%arg0: i32, %arg1: i32) -> (i32, i32) {
    %c0_i32 = arith.constant 0 : i32
    %c0_i32_0 = arith.constant 0 : i32
    %c0_i32_1 = arith.constant 0 : i32
    return %c0_i32, %c0_i32_0 : i32, i32
  }
  func.func @transform_3(%arg0: i32, %arg1: i32) -> (i32, i32) {
    %c0_i32 = arith.constant 0 : i32
    %c0_i32_0 = arith.constant 0 : i32
    %c0_i32_1 = arith.constant 0 : i32
    return %c0_i32, %c0_i32_0 : i32, i32
  }
  func.func @transform_4(%arg0: i32, %arg1: i32) -> (i32, i32) {
    %c0_i32 = arith.constant 0 : i32
    %c0_i32_0 = arith.constant 0 : i32
    %c0_i32_1 = arith.constant 0 : i32
    return %c0_i32, %c0_i32_0 : i32, i32
  }
  func.func @transform_5(%arg0: i32, %arg1: i32) -> (i32, i32) {
    %c0_i32 = arith.constant 0 : i32
    %c0_i32_0 = arith.constant 0 : i32
    %c0_i32_1 = arith.constant 0 : i32
    return %c0_i32, %c0_i32_0 : i32, i32
  }
  func.func @transform_6(%arg0: i32, %arg1: i32) -> (i32, i32) {
    %c0_i32 = arith.constant 0 : i32
    %c0_i32_0 = arith.constant 0 : i32
    %c0_i32_1 = arith.constant 0 : i32
    return %c0_i32, %c0_i32_0 : i32, i32
  }
  func.func @transform_7(%arg0: i32, %arg1: i32) -> (i32, i32) {
    %c0_i32 = arith.constant 0 : i32
    %c0_i32_0 = arith.constant 0 : i32
    %c0_i32_1 = arith.constant 0 : i32
    return %c0_i32, %c0_i32_0 : i32, i32
  }
  func.func @transform_8(%arg0: i32, %arg1: i32) -> (i32, i32) {
    %c0_i32 = arith.constant 0 : i32
    %c0_i32_0 = arith.constant 0 : i32
    %c0_i32_1 = arith.constant 0 : i32
    return %c0_i32, %c0_i32_0 : i32, i32
  }
  func.func @transform_9(%arg0: i32, %arg1: i32) -> (i32, i32) {
    %c0_i32 = arith.constant 0 : i32
    %c0_i32_0 = arith.constant 0 : i32
    %c0_i32_1 = arith.constant 0 : i32
    return %c0_i32, %c0_i32_0 : i32, i32
  }
  func.func @transform_10(%arg0: i32, %arg1: i32) -> (i32, i32) {
    %c0_i32 = arith.constant 0 : i32
    %c0_i32_0 = arith.constant 0 : i32
    %c0_i32_1 = arith.constant 0 : i32
    return %c0_i32, %c0_i32_0 : i32, i32
  }
  func.func @transform_11(%arg0: i32, %arg1: i32) -> (i32, i32, i32) {
    %c0_i32 = arith.constant 0 : i32
    %c0_i32_0 = arith.constant 0 : i32
    return %arg0, %arg1, %c0_i32 : i32, i32, i32
  }
}

module attributes {stable_mosaic.version = 11 : i64} {
  func.func @_attn_kernel(%arg0: i32, %arg1: i32, %arg2: memref<1x256x144xbf16, #tpu.memory_space<vmem>>, %arg3: memref<1x8x64xbf16, #tpu.memory_space<vmem>>, %arg4: memref<64x32xbf16, #tpu.memory_space<vmem>>, %arg5: memref<1x32xf32, #tpu.memory_space<vmem>>, %arg6: memref<16x32xbf16, #tpu.memory_space<vmem>>, %arg7: memref<1x32xf32, #tpu.memory_space<vmem>>, %arg8: memref<144x128xbf16, #tpu.memory_space<vmem>>, %arg9: memref<1x128xf32, #tpu.memory_space<vmem>>, %arg10: memref<2x128xf32, #tpu.memory_space<vmem>>, %arg11: memref<1x2xf32, #tpu.memory_space<vmem>>, %arg12: memref<1x2xf32, #tpu.memory_space<vmem>>, %arg13: memref<1x256x128xf32, #tpu.memory_space<vmem>>) attributes {dimension_semantics = [#tpu.dimension_semantics<parallel>, #tpu.dimension_semantics<parallel>], iteration_bounds = array<i64: 2, 1>, scalar_prefetch = 0 : i64, scratch_operands = 0 : i64, tpu.core_type = #tpu.core_type<tc>, window_params = [{transform_indices = @transform_0, window_bounds = array<i64: 1, 256, 144>}, {transform_indices = @transform_1, window_bounds = array<i64: 1, 8, 64>}, {pipeline_mode = #tpu.pipeline_mode<synchronous>, transform_indices = @transform_2, window_bounds = array<i64: 64, 32>}, {pipeline_mode = #tpu.pipeline_mode<synchronous>, transform_indices = @transform_3, window_bounds = array<i64: 1, 32>}, {pipeline_mode = #tpu.pipeline_mode<synchronous>, transform_indices = @transform_4, window_bounds = array<i64: 16, 32>}, {pipeline_mode = #tpu.pipeline_mode<synchronous>, transform_indices = @transform_5, window_bounds = array<i64: 1, 32>}, {pipeline_mode = #tpu.pipeline_mode<synchronous>, transform_indices = @transform_6, window_bounds = array<i64: 144, 128>}, {pipeline_mode = #tpu.pipeline_mode<synchronous>, transform_indices = @transform_7, window_bounds = array<i64: 1, 128>}, {pipeline_mode = #tpu.pipeline_mode<synchronous>, transform_indices = @transform_8, window_bounds = array<i64: 2, 128>}, {pipeline_mode = #tpu.pipeline_mode<synchronous>, transform_indices = @transform_9, window_bounds = array<i64: 1, 2>}, {pipeline_mode = #tpu.pipeline_mode<synchronous>, transform_indices = @transform_10, window_bounds = array<i64: 1, 2>}, {transform_indices = @transform_11, window_bounds = array<i64: 1, 256, 128>}]} {
    %c0 = arith.constant 0 : index
    %c0_0 = arith.constant 0 : index
    %c0_1 = arith.constant 0 : index
    %0 = vector.load %arg2[%c0, %c0_0, %c0_1] : memref<1x256x144xbf16, #tpu.memory_space<vmem>>, vector<1x256x144xbf16>
    %1 = vector.shape_cast %0 : vector<1x256x144xbf16> to vector<256x144xbf16>
    %c0_2 = arith.constant 0 : index
    %c0_3 = arith.constant 0 : index
    %2 = vector.load %arg8[%c0_2, %c0_3] : memref<144x128xbf16, #tpu.memory_space<vmem>>, vector<144x128xbf16>
    %cst = arith.constant dense<0.000000e+00> : vector<256x128xf32>
    %3 = tpu.matmul %1, %2, %cst {dimension_numbers = #tpu.dot_dimension_numbers<[1], [0], [0], [1], [0, 0, 1, 1], [], []>} : vector<256x144xbf16>, vector<144x128xbf16>, vector<256x128xf32> -> vector<256x128xf32>
    %c0_4 = arith.constant 0 : index
    %c0_5 = arith.constant 0 : index
    %4 = vector.load %arg9[%c0_4, %c0_5] : memref<1x128xf32, #tpu.memory_space<vmem>>, vector<1x128xf32>
    %5 = vector.broadcast %4 : vector<1x128xf32> to vector<256x128xf32>
    %6 = arith.addf %3, %5 : vector<256x128xf32>
    %c0_6 = arith.constant 0 : index
    %c0_7 = arith.constant 0 : index
    %c0_8 = arith.constant 0 : index
    %7 = vector.load %arg3[%c0_6, %c0_7, %c0_8] : memref<1x8x64xbf16, #tpu.memory_space<vmem>>, vector<1x8x64xbf16>
    %8 = vector.shape_cast %7 : vector<1x8x64xbf16> to vector<8x64xbf16>
    %c0_9 = arith.constant 0 : index
    %c0_10 = arith.constant 0 : index
    %9 = vector.load %arg4[%c0_9, %c0_10] : memref<64x32xbf16, #tpu.memory_space<vmem>>, vector<64x32xbf16>
    %cst_11 = arith.constant dense<0.000000e+00> : vector<8x32xf32>
    %10 = tpu.matmul %8, %9, %cst_11 {dimension_numbers = #tpu.dot_dimension_numbers<[1], [0], [0], [1], [0, 0, 1, 1], [], []>} : vector<8x64xbf16>, vector<64x32xbf16>, vector<8x32xf32> -> vector<8x32xf32>
    %c0_12 = arith.constant 0 : index
    %c0_13 = arith.constant 0 : index
    %11 = vector.load %arg5[%c0_12, %c0_13] : memref<1x32xf32, #tpu.memory_space<vmem>>, vector<1x32xf32>
    %12 = vector.broadcast %11 : vector<1x32xf32> to vector<8x32xf32>
    %13 = arith.addf %10, %12 : vector<8x32xf32>
    %14 = vector.extract_strided_slice %1 {offsets = [0, 0], sizes = [256, 16], strides = [1, 1]} : vector<256x144xbf16> to vector<256x16xbf16>
    %c0_14 = arith.constant 0 : index
    %c0_15 = arith.constant 0 : index
    %15 = vector.load %arg6[%c0_14, %c0_15] : memref<16x32xbf16, #tpu.memory_space<vmem>>, vector<16x32xbf16>
    %cst_16 = arith.constant dense<0.000000e+00> : vector<256x32xf32>
    %16 = tpu.matmul %14, %15, %cst_16 {dimension_numbers = #tpu.dot_dimension_numbers<[1], [0], [0], [1], [0, 0, 1, 1], [], []>} : vector<256x16xbf16>, vector<16x32xbf16>, vector<256x32xf32> -> vector<256x32xf32>
    %c0_17 = arith.constant 0 : index
    %c0_18 = arith.constant 0 : index
    %17 = vector.load %arg7[%c0_17, %c0_18] : memref<1x32xf32, #tpu.memory_space<vmem>>, vector<1x32xf32>
    %18 = vector.broadcast %17 : vector<1x32xf32> to vector<256x32xf32>
    %19 = arith.addf %16, %18 : vector<256x32xf32>
    %20 = arith.truncf %19 : vector<256x32xf32> to vector<256x32xbf16>
    %21 = arith.truncf %13 : vector<8x32xf32> to vector<8x32xbf16>
    %22 = vector.extract_strided_slice %20 {offsets = [0, 0], sizes = [256, 16], strides = [1, 1]} : vector<256x32xbf16> to vector<256x16xbf16>
    %23 = vector.extract_strided_slice %21 {offsets = [0, 0], sizes = [8, 16], strides = [1, 1]} : vector<8x32xbf16> to vector<8x16xbf16>
    %cst_19 = arith.constant dense<0.000000e+00> : vector<256x8xf32>
    %24 = tpu.matmul %22, %23, %cst_19 {dimension_numbers = #tpu.dot_dimension_numbers<[1], [1], [0], [0], [0, 0, 1, 0], [], []>} : vector<256x16xbf16>, vector<8x16xbf16>, vector<256x8xf32> -> vector<256x8xf32>
    %cst_20 = arith.constant dense<0xFF800000> : vector<256xf32>
    %25 = vector.multi_reduction <maximumf>, %24, %cst_20 [1] : vector<256x8xf32> to vector<256xf32>
    %26 = vector.shape_cast %25 : vector<256xf32> to vector<256x1xf32>
    %27 = vector.extract_strided_slice %20 {offsets = [0, 16], sizes = [256, 16], strides = [1, 1]} : vector<256x32xbf16> to vector<256x16xbf16>
    %28 = vector.extract_strided_slice %21 {offsets = [0, 16], sizes = [8, 16], strides = [1, 1]} : vector<8x32xbf16> to vector<8x16xbf16>
    %cst_21 = arith.constant dense<0.000000e+00> : vector<256x8xf32>
    %29 = tpu.matmul %27, %28, %cst_21 {dimension_numbers = #tpu.dot_dimension_numbers<[1], [1], [0], [0], [0, 0, 1, 0], [], []>} : vector<256x16xbf16>, vector<8x16xbf16>, vector<256x8xf32> -> vector<256x8xf32>
    %cst_22 = arith.constant dense<0xFF800000> : vector<256xf32>
    %30 = vector.multi_reduction <maximumf>, %29, %cst_22 [1] : vector<256x8xf32> to vector<256xf32>
    %31 = vector.shape_cast %30 : vector<256xf32> to vector<256x1xf32>
    %32 = tpu.concatenate %26, %31 in 1 : vector<256x1xf32>, vector<256x1xf32> -> vector<256x2xf32>
    %cst_23 = arith.constant 2.500000e-01 : f32
    %33 = vector.broadcast %cst_23 : f32 to vector<256x2xf32>
    %34 = arith.mulf %32, %33 : vector<256x2xf32>
    %c0_24 = arith.constant 0 : index
    %c0_25 = arith.constant 0 : index
    %35 = vector.load %arg11[%c0_24, %c0_25] : memref<1x2xf32, #tpu.memory_space<vmem>>, vector<1x2xf32>
    %36 = vector.broadcast %35 : vector<1x2xf32> to vector<256x2xf32>
    %37 = arith.addf %34, %36 : vector<256x2xf32>
    %cst_26 = arith.constant 0.000000e+00 : f32
    %38 = vector.broadcast %cst_26 : f32 to vector<256x2xf32>
    %39 = arith.subf %38, %37 : vector<256x2xf32>
    %40 = math.exp %39 : vector<256x2xf32>
    %cst_27 = arith.constant 1.000000e+00 : f32
    %41 = vector.broadcast %cst_27 : f32 to vector<256x2xf32>
    %42 = arith.addf %41, %40 : vector<256x2xf32>
    %43 = tpu.reciprocal %42 {approx = true} : vector<256x2xf32> -> vector<256x2xf32>
    %c0_28 = arith.constant 0 : index
    %c0_29 = arith.constant 0 : index
    %44 = vector.load %arg12[%c0_28, %c0_29] : memref<1x2xf32, #tpu.memory_space<vmem>>, vector<1x2xf32>
    %45 = vector.broadcast %44 : vector<1x2xf32> to vector<256x2xf32>
    %46 = arith.mulf %43, %45 : vector<256x2xf32>
    %c0_30 = arith.constant 0 : index
    %c0_31 = arith.constant 0 : index
    %47 = vector.load %arg10[%c0_30, %c0_31] : memref<2x128xf32, #tpu.memory_space<vmem>>, vector<2x128xf32>
    %cst_32 = arith.constant dense<0.000000e+00> : vector<256x128xf32>
    %48 = tpu.matmul %46, %47, %cst_32 {dimension_numbers = #tpu.dot_dimension_numbers<[1], [0], [0], [1], [0, 0, 1, 1], [], []>} : vector<256x2xf32>, vector<2x128xf32>, vector<256x128xf32> -> vector<256x128xf32>
    %49 = arith.mulf %6, %48 : vector<256x128xf32>
    %c0_33 = arith.constant 0 : index
    %c0_34 = arith.constant 0 : index
    %c0_35 = arith.constant 0 : index
    %50 = vector.load %arg13[%c0_33, %c0_34, %c0_35] : memref<1x256x128xf32, #tpu.memory_space<vmem>>, vector<1x256x128xf32>
    %51 = vector.shape_cast %50 : vector<1x256x128xf32> to vector<256x128xf32>
    %52 = vector.shape_cast %49 : vector<256x128xf32> to vector<1x256x128xf32>
    tpu.vector_store %arg13[%c0_33, %c0_34, %c0_35], %52 {strides = array<i32>} : memref<1x256x128xf32, #tpu.memory_space<vmem>>, vector<1x256x128xf32>,
    return
  }
  func.func @transform_0(%arg0: i32, %arg1: i32) -> (i32, i32, i32) {
    %c0_i32 = arith.constant 0 : i32
    %c0_i32_0 = arith.constant 0 : i32
    return %arg0, %arg1, %c0_i32 : i32, i32, i32
  }
  func.func @transform_1(%arg0: i32, %arg1: i32) -> (i32, i32, i32) {
    %c0_i32 = arith.constant 0 : i32
    %c0_i32_0 = arith.constant 0 : i32
    %c0_i32_1 = arith.constant 0 : i32
    return %arg0, %c0_i32, %c0_i32_0 : i32, i32, i32
  }
  func.func @transform_2(%arg0: i32, %arg1: i32) -> (i32, i32) {
    %c0_i32 = arith.constant 0 : i32
    %c0_i32_0 = arith.constant 0 : i32
    %c0_i32_1 = arith.constant 0 : i32
    return %c0_i32, %c0_i32_0 : i32, i32
  }
  func.func @transform_3(%arg0: i32, %arg1: i32) -> (i32, i32) {
    %c0_i32 = arith.constant 0 : i32
    %c0_i32_0 = arith.constant 0 : i32
    %c0_i32_1 = arith.constant 0 : i32
    return %c0_i32, %c0_i32_0 : i32, i32
  }
  func.func @transform_4(%arg0: i32, %arg1: i32) -> (i32, i32) {
    %c0_i32 = arith.constant 0 : i32
    %c0_i32_0 = arith.constant 0 : i32
    %c0_i32_1 = arith.constant 0 : i32
    return %c0_i32, %c0_i32_0 : i32, i32
  }
  func.func @transform_5(%arg0: i32, %arg1: i32) -> (i32, i32) {
    %c0_i32 = arith.constant 0 : i32
    %c0_i32_0 = arith.constant 0 : i32
    %c0_i32_1 = arith.constant 0 : i32
    return %c0_i32, %c0_i32_0 : i32, i32
  }
  func.func @transform_6(%arg0: i32, %arg1: i32) -> (i32, i32) {
    %c0_i32 = arith.constant 0 : i32
    %c0_i32_0 = arith.constant 0 : i32
    %c0_i32_1 = arith.constant 0 : i32
    return %c0_i32, %c0_i32_0 : i32, i32
  }
  func.func @transform_7(%arg0: i32, %arg1: i32) -> (i32, i32) {
    %c0_i32 = arith.constant 0 : i32
    %c0_i32_0 = arith.constant 0 : i32
    %c0_i32_1 = arith.constant 0 : i32
    return %c0_i32, %c0_i32_0 : i32, i32
  }
  func.func @transform_8(%arg0: i32, %arg1: i32) -> (i32, i32) {
    %c0_i32 = arith.constant 0 : i32
    %c0_i32_0 = arith.constant 0 : i32
    %c0_i32_1 = arith.constant 0 : i32
    return %c0_i32, %c0_i32_0 : i32, i32
  }
  func.func @transform_9(%arg0: i32, %arg1: i32) -> (i32, i32) {
    %c0_i32 = arith.constant 0 : i32
    %c0_i32_0 = arith.constant 0 : i32
    %c0_i32_1 = arith.constant 0 : i32
    return %c0_i32, %c0_i32_0 : i32, i32
  }
  func.func @transform_10(%arg0: i32, %arg1: i32) -> (i32, i32) {
    %c0_i32 = arith.constant 0 : i32
    %c0_i32_0 = arith.constant 0 : i32
    %c0_i32_1 = arith.constant 0 : i32
    return %c0_i32, %c0_i32_0 : i32, i32
  }
  func.func @transform_11(%arg0: i32, %arg1: i32) -> (i32, i32, i32) {
    %c0_i32 = arith.constant 0 : i32
    %c0_i32_0 = arith.constant 0 : i32
    return %arg0, %arg1, %c0_i32 : i32, i32, i32
  }
}

</mosaic_0001>

<llo_original>
// kernel: tpu_custom_call.1
$region0: #{tpu_custom_call.1}
  #allocation0 [shape = 'u32[]', space=smem, size = 0x4, offset = 0x4, fixed_abs, tag = 'smem constant byte address 0x4 - core index']
  #allocation1 [shape = 'u32[144,128]{1,0:T(1,128)}', space=vmem, size = 0x12000, scoped, tag = 'internal scratch']
  %s0 = inlined_call_operand.vmem [shape: bf16[2,256,144], index: 0, kind: input, shape index: {}]
  %s1 = inlined_call_operand.vmem [shape: bf16[2,8,64], index: 1, kind: input, shape index: {}]
  %s2 = inlined_call_operand.vmem [shape: bf16[64,32], index: 2, kind: input, shape index: {}]
  %s3 = inlined_call_operand.vmem [shape: f32[1,32], index: 3, kind: input, shape index: {}]
  %s4 = inlined_call_operand.vmem [shape: bf16[16,32], index: 4, kind: input, shape index: {}]
  %s5 = inlined_call_operand.vmem [shape: f32[1,32], index: 5, kind: input, shape index: {}]
  %s6 = inlined_call_operand.vmem [shape: bf16[144,128], index: 6, kind: input, shape index: {}]
  %s7 = inlined_call_operand.vmem [shape: f32[1,128], index: 7, kind: input, shape index: {}]
  %s8 = inlined_call_operand.vmem [shape: f32[2,128], index: 8, kind: input, shape index: {}]
  %s9 = inlined_call_operand.vmem [shape: f32[1,2], index: 9, kind: input, shape index: {}]
  %s10 = inlined_call_operand.vmem [shape: f32[1,2], index: 10, kind: input, shape index: {}]
  %s11 = inlined_call_operand.hbm [shape: f32[2,256,128], index: 11, kind: output, shape index: {}]
  %s12 = sld [smem:[#allocation0]]
  $region77: #{tpu_custom_call.1} parent=0
    _
  %s14 = ssub.s32 1, %s12
  %s15 = scalar_select 0, %s14, %s12
  $region1: #{tpu_custom_call.1} parent=0
    #allocation2 [shape = 'u8[262144]{0}', space=vmem, size = 0x40000, scoped, tag = 'output window, operand 0']
    #allocation3 [shape = 's32[2]{0}', space=sflag, size = 0x8, scoped, tag = 'scoped memory for tpu_custom_call.1']
    %16 = vsyncpa [#allocation3], 0
    %s17 = scalar_lea.sflag [#allocation3], 1
    %18 = vsyncpa %s17, 0
    loop: start=0, step=1, limit=4
    $region2: #{tpu_custom_call.1} parent=1 // loop_pre_header
      _
    $region3: #{tpu_custom_call.1} parent=1 // loop_header
      %s20 = sphi 0, %s24
      %p21 = scmp.ge.s32.totalorder %s20, 4
      %s27 = sphi 0, %s39
      %s28 = sphi 0, %s35
      %s29 = sphi 0, %s27
      %s30 = sphi 0, %s28
      %s31 = sphi 0, %s29
      %s32 = sphi 0, %s30
      %s44 = sphi 0, %s46
      %s47 = sphi 0, %s44
      %s48 = sphi 0, %s47
      %s64 = sphi 0, %s48
      %s70 = sphi 0, %s72
      %s73 = sphi 0, %s70
      %s74 = sphi 0, %s73
      %s90 = sphi 0, %s74
      %s94 = sphi 0, %s94
      %s96 = sphi 0, %s94
      %s97 = sphi 0, %s96
      %s111 = sphi 0, %s97
      %s115 = sphi 0, %s115
      %s117 = sphi 0, %s115
      %s118 = sphi 0, %s117
      %s132 = sphi 0, %s118
      %s136 = sphi 0, %s136
      %s138 = sphi 0, %s136
      %s139 = sphi 0, %s138
      %s153 = sphi 0, %s139
      %s157 = sphi 0, %s157
      %s159 = sphi 0, %s157
      %s160 = sphi 0, %s159
      %s174 = sphi 0, %s160
      %s178 = sphi 0, %s178
      %s180 = sphi 0, %s178
      %s181 = sphi 0, %s180
      %s195 = sphi 0, %s181
      %s199 = sphi 0, %s199
      %s201 = sphi 0, %s199
      %s202 = sphi 0, %s201
      %s216 = sphi 0, %s202
      %s220 = sphi 0, %s220
      %s222 = sphi 0, %s220
      %s223 = sphi 0, %s222
      %s237 = sphi 0, %s223
      %s241 = sphi 0, %s241
      %s243 = sphi 0, %s241
      %s244 = sphi 0, %s243
      %s258 = sphi 0, %s244
      %s262 = sphi 0, %s262
      %s264 = sphi 0, %s262
      %s265 = sphi 0, %s264
      %s279 = sphi 0, %s265
      %s287 = sphi 0, %s289
      %s290 = sphi 0, %s287
      %s291 = sphi 0, %s290
      %s307 = sphi 0, %s291
    $region4: #{tpu_custom_call.1} parent=1 // loop_header_branch
      %23 = sbr.rel (%p21) target = $region8
    $region5: #{tpu_custom_call.1} parent=1 // loop_body
      %s25 = ssub.s32 %s20, 1
      %s26 = ssub.s32 %s20, 2
      %s33 = sadd.s32 1, %s28
      %p34 = scmp.ge.s32.totalorder %s33, 1
      %s35 = scalar_select %p34, 0, %s33
      %s36 = sadd.s32 1, %s27
      %s37 = scalar_select %p34, %s36, %s27
      %p38 = scmp.ge.s32.totalorder %s37, 2
      %s39 = scalar_select %p38, 0, %s37
      %s40 = ssub.s32 %s27, %s39
      %s41 = ssub.s32 %s28, %s35
      %s42 = sor.u32 %s40, %s41
      %p43 = scmp.eq.s32.totalorder %s42, 0
      %s45 = sadd.s32 %s44, 1
      %s46 = scalar_select %p43, %s44, %s45
      %p49 = pneg %p43
      %p50 = scmp.eq.s32.totalorder %s20, 1
      %p51 = por %p49, %p50
      %p52 = scmp.ne.s32.totalorder %s44, %s47
      %p53 = scmp.eq.s32.totalorder %s20, 0
      %p54 = por %p52, %p53
      %p55 = scmp.ne.s32.totalorder %s44, %s47
      %p56 = scmp.eq.s32.totalorder %s25, 1
      %p57 = por %p55, %p56
      %p58 = scmp.ne.s32.totalorder %s47, %s48
      %p59 = scmp.eq.s32.totalorder %s25, 0
      %p60 = por %p58, %p59
      %p61 = scmp.ne.s32.totalorder %s47, %s48
      %p62 = scmp.eq.s32.totalorder %s26, 1
      %p63 = por %p61, %p62
      %p65 = scmp.ne.s32.totalorder %s48, %s64
      %p66 = scmp.eq.s32.totalorder %s26, 0
      %p67 = por %p65, %p66
      %s68 = ssub.s32 %s27, %s39
      %p69 = scmp.eq.s32.totalorder %s68, 0
      %s71 = sadd.s32 %s70, 1
      %s72 = scalar_select %p69, %s70, %s71
      %p75 = pneg %p69
      %p76 = scmp.eq.s32.totalorder %s20, 1
      %p77 = por %p75, %p76
      %p78 = scmp.ne.s32.totalorder %s70, %s73
      %p79 = scmp.eq.s32.totalorder %s20, 0
      %p80 = por %p78, %p79
      %p81 = scmp.ne.s32.totalorder %s70, %s73
      %p82 = scmp.eq.s32.totalorder %s25, 1
      %p83 = por %p81, %p82
      %p84 = scmp.ne.s32.totalorder %s73, %s74
      %p85 = scmp.eq.s32.totalorder %s25, 0
      %p86 = por %p84, %p85
      %p87 = scmp.ne.s32.totalorder %s73, %s74
      %p88 = scmp.eq.s32.totalorder %s26, 1
      %p89 = por %p87, %p88
      %p91 = scmp.ne.s32.totalorder %s74, %s90
      %p92 = scmp.eq.s32.totalorder %s26, 0
      %p93 = por %p91, %p92
      %s95 = sadd.s32 %s94, 1
      %p98 = scmp.eq.s32.totalorder %s20, 1
      %p99 = scmp.ne.s32.totalorder %s94, %s96
      %p100 = scmp.eq.s32.totalorder %s20, 0
      %p101 = por %p99, %p100
      %p102 = scmp.ne.s32.totalorder %s94, %s96
      %p103 = scmp.eq.s32.totalorder %s25, 1
      %p104 = por %p102, %p103
      %p105 = scmp.ne.s32.totalorder %s96, %s97
      %p106 = scmp.eq.s32.totalorder %s25, 0
      %p107 = por %p105, %p106
      %p108 = scmp.ne.s32.totalorder %s96, %s97
      %p109 = scmp.eq.s32.totalorder %s26, 1
      %p110 = por %p108, %p109
      %p112 = scmp.ne.s32.totalorder %s97, %s111
      %p113 = scmp.eq.s32.totalorder %s26, 0
      %p114 = por %p112, %p113
      %s116 = sadd.s32 %s115, 1
      %p119 = scmp.eq.s32.totalorder %s20, 1
      %p120 = scmp.ne.s32.totalorder %s115, %s117
      %p121 = scmp.eq.s32.totalorder %s20, 0
      %p122 = por %p120, %p121
      %p123 = scmp.ne.s32.totalorder %s115, %s117
      %p124 = scmp.eq.s32.totalorder %s25, 1
      %p125 = por %p123, %p124
      %p126 = scmp.ne.s32.totalorder %s117, %s118
      %p127 = scmp.eq.s32.totalorder %s25, 0
      %p128 = por %p126, %p127
      %p129 = scmp.ne.s32.totalorder %s117, %s118
      %p130 = scmp.eq.s32.totalorder %s26, 1
      %p131 = por %p129, %p130
      %p133 = scmp.ne.s32.totalorder %s118, %s132
      %p134 = scmp.eq.s32.totalorder %s26, 0
      %p135 = por %p133, %p134
      %s137 = sadd.s32 %s136, 1
      %p140 = scmp.eq.s32.totalorder %s20, 1
      %p141 = scmp.ne.s32.totalorder %s136, %s138
      %p142 = scmp.eq.s32.totalorder %s20, 0
      %p143 = por %p141, %p142
      %p144 = scmp.ne.s32.totalorder %s136, %s138
      %p145 = scmp.eq.s32.totalorder %s25, 1
      %p146 = por %p144, %p145
      %p147 = scmp.ne.s32.totalorder %s138, %s139
      %p148 = scmp.eq.s32.totalorder %s25, 0
      %p149 = por %p147, %p148
      %p150 = scmp.ne.s32.totalorder %s138, %s139
      %p151 = scmp.eq.s32.totalorder %s26, 1
      %p152 = por %p150, %p151
      %p154 = scmp.ne.s32.totalorder %s139, %s153
      %p155 = scmp.eq.s32.totalorder %s26, 0
      %p156 = por %p154, %p155
      %s158 = sadd.s32 %s157, 1
      %p161 = scmp.eq.s32.totalorder %s20, 1
      %p162 = scmp.ne.s32.totalorder %s157, %s159
      %p163 = scmp.eq.s32.totalorder %s20, 0
      %p164 = por %p162, %p163
      %p165 = scmp.ne.s32.totalorder %s157, %s159
      %p166 = scmp.eq.s32.totalorder %s25, 1
      %p167 = por %p165, %p166
      %p168 = scmp.ne.s32.totalorder %s159, %s160
      %p169 = scmp.eq.s32.totalorder %s25, 0
      %p170 = por %p168, %p169
      %p171 = scmp.ne.s32.totalorder %s159, %s160
      %p172 = scmp.eq.s32.totalorder %s26, 1
      %p173 = por %p171, %p172
      %p175 = scmp.ne.s32.totalorder %s160, %s174
      %p176 = scmp.eq.s32.totalorder %s26, 0
      %p177 = por %p175, %p176
      %s179 = sadd.s32 %s178, 1
      %p182 = scmp.eq.s32.totalorder %s20, 1
      %p183 = scmp.ne.s32.totalorder %s178, %s180
      %p184 = scmp.eq.s32.totalorder %s20, 0
      %p185 = por %p183, %p184
      %p186 = scmp.ne.s32.totalorder %s178, %s180
      %p187 = scmp.eq.s32.totalorder %s25, 1
      %p188 = por %p186, %p187
      %p189 = scmp.ne.s32.totalorder %s180, %s181
      %p190 = scmp.eq.s32.totalorder %s25, 0
      %p191 = por %p189, %p190
      %p192 = scmp.ne.s32.totalorder %s180, %s181
      %p193 = scmp.eq.s32.totalorder %s26, 1
      %p194 = por %p192, %p193
      %p196 = scmp.ne.s32.totalorder %s181, %s195
      %p197 = scmp.eq.s32.totalorder %s26, 0
      %p198 = por %p196, %p197
      %s200 = sadd.s32 %s199, 1
      %p203 = scmp.eq.s32.totalorder %s20, 1
      %p204 = scmp.ne.s32.totalorder %s199, %s201
      %p205 = scmp.eq.s32.totalorder %s20, 0
      %p206 = por %p204, %p205
      %p207 = scmp.ne.s32.totalorder %s199, %s201
      %p208 = scmp.eq.s32.totalorder %s25, 1
      %p209 = por %p207, %p208
      %p210 = scmp.ne.s32.totalorder %s201, %s202
      %p211 = scmp.eq.s32.totalorder %s25, 0
      %p212 = por %p210, %p211
      %p213 = scmp.ne.s32.totalorder %s201, %s202
      %p214 = scmp.eq.s32.totalorder %s26, 1
      %p215 = por %p213, %p214
      %p217 = scmp.ne.s32.totalorder %s202, %s216
      %p218 = scmp.eq.s32.totalorder %s26, 0
      %p219 = por %p217, %p218
      %s221 = sadd.s32 %s220, 1
      %p224 = scmp.eq.s32.totalorder %s20, 1
      %p225 = scmp.ne.s32.totalorder %s220, %s222
      %p226 = scmp.eq.s32.totalorder %s20, 0
      %p227 = por %p225, %p226
      %p228 = scmp.ne.s32.totalorder %s220, %s222
      %p229 = scmp.eq.s32.totalorder %s25, 1
      %p230 = por %p228, %p229
      %p231 = scmp.ne.s32.totalorder %s222, %s223
      %p232 = scmp.eq.s32.totalorder %s25, 0
      %p233 = por %p231, %p232
      %p234 = scmp.ne.s32.totalorder %s222, %s223
      %p235 = scmp.eq.s32.totalorder %s26, 1
      %p236 = por %p234, %p235
      %p238 = scmp.ne.s32.totalorder %s223, %s237
      %p239 = scmp.eq.s32.totalorder %s26, 0
      %p240 = por %p238, %p239
      %s242 = sadd.s32 %s241, 1
      %p245 = scmp.eq.s32.totalorder %s20, 1
      %p246 = scmp.ne.s32.totalorder %s241, %s243
      %p247 = scmp.eq.s32.totalorder %s20, 0
      %p248 = por %p246, %p247
      %p249 = scmp.ne.s32.totalorder %s241, %s243
      %p250 = scmp.eq.s32.totalorder %s25, 1
      %p251 = por %p249, %p250
      %p252 = scmp.ne.s32.totalorder %s243, %s244
      %p253 = scmp.eq.s32.totalorder %s25, 0
      %p254 = por %p252, %p253
      %p255 = scmp.ne.s32.totalorder %s243, %s244
      %p256 = scmp.eq.s32.totalorder %s26, 1
      %p257 = por %p255, %p256
      %p259 = scmp.ne.s32.totalorder %s244, %s258
      %p260 = scmp.eq.s32.totalorder %s26, 0
      %p261 = por %p259, %p260
      %s263 = sadd.s32 %s262, 1
      %p266 = scmp.eq.s32.totalorder %s20, 1
      %p267 = scmp.ne.s32.totalorder %s262, %s264
      %p268 = scmp.eq.s32.totalorder %s20, 0
      %p269 = por %p267, %p268
      %p270 = scmp.ne.s32.totalorder %s262, %s264
      %p271 = scmp.eq.s32.totalorder %s25, 1
      %p272 = por %p270, %p271
      %p273 = scmp.ne.s32.totalorder %s264, %s265
      %p274 = scmp.eq.s32.totalorder %s25, 0
      %p275 = por %p273, %p274
      %p276 = scmp.ne.s32.totalorder %s264, %s265
      %p277 = scmp.eq.s32.totalorder %s26, 1
      %p278 = por %p276, %p277
      %p280 = scmp.ne.s32.totalorder %s265, %s279
      %p281 = scmp.eq.s32.totalorder %s26, 0
      %p282 = por %p280, %p281
      %s283 = ssub.s32 %s27, %s39
      %s284 = ssub.s32 %s28, %s35
      %s285 = sor.u32 %s283, %s284
      %p286 = scmp.eq.s32.totalorder %s285, 0
      %s288 = sadd.s32 %s287, 1
      %s289 = scalar_select %p286, %s287, %s288
      %p292 = pneg %p286
      %p293 = scmp.eq.s32.totalorder %s20, 1
      %p294 = por %p292, %p293
      %p295 = scmp.ne.s32.totalorder %s287, %s290
      %p296 = scmp.eq.s32.totalorder %s20, 0
      %p297 = por %p295, %p296
      %p298 = scmp.ne.s32.totalorder %s287, %s290
      %p299 = scmp.eq.s32.totalorder %s25, 1
      %p300 = por %p298, %p299
      %p301 = scmp.ne.s32.totalorder %s290, %s291
      %p302 = scmp.eq.s32.totalorder %s25, 0
      %p303 = por %p301, %p302
      %p304 = scmp.ne.s32.totalorder %s290, %s291
      %p305 = scmp.eq.s32.totalorder %s26, 1
      %p306 = por %p304, %p305
      %p308 = scmp.ne.s32.totalorder %s291, %s307
      %p309 = scmp.eq.s32.totalorder %s26, 0
      %p310 = por %p308, %p309
      %p311 = scmp.le.s32.totalorder 1, %s20
      %p312 = scmp.lt.s32.totalorder %s20, 3
      %p313 = pnand %p311, %p312
      %p314 = pneg %p313
      // Predicated region
      $region9: #{tpu_custom_call.1} parent=5 // pred_check
        _
      $region10: #{tpu_custom_call.1} parent=5 // pred_check_branch
        %316 = sbr.rel (%p313) target = $region12
      $region11: #{tpu_custom_call.1} parent=5 // pred_region
        %s317 = ssub.s32 %s20, 1
        // Predicated region
        $region13: #{tpu_custom_call.1} parent=11 // pred_check
          %p318 = pneg %p107
        $region14: #{tpu_custom_call.1} parent=11 // pred_check_branch
          %320 = sbr.rel (%p318) target = $region16
        $region15: #{tpu_custom_call.1} parent=11 // pred_region
          _
        $region16: #{tpu_custom_call.1} parent=11 // pred_fallthru
          _
        // Predicated region
        $region17: #{tpu_custom_call.1} parent=11 // pred_check
          %p321 = pneg %p128
        $region18: #{tpu_custom_call.1} parent=11 // pred_check_branch
          %323 = sbr.rel (%p321) target = $region20
        $region19: #{tpu_custom_call.1} parent=11 // pred_region
          _
        $region20: #{tpu_custom_call.1} parent=11 // pred_fallthru
          _
        // Predicated region
        $region21: #{tpu_custom_call.1} parent=11 // pred_check
          %p324 = pneg %p149
        $region22: #{tpu_custom_call.1} parent=11 // pred_check_branch
          %326 = sbr.rel (%p324) target = $region24
        $region23: #{tpu_custom_call.1} parent=11 // pred_region
          _
        $region24: #{tpu_custom_call.1} parent=11 // pred_fallthru
          _
        // Predicated region
        $region25: #{tpu_custom_call.1} parent=11 // pred_check
          %p327 = pneg %p170
        $region26: #{tpu_custom_call.1} parent=11 // pred_check_branch
          %329 = sbr.rel (%p327) target = $region28
        $region27: #{tpu_custom_call.1} parent=11 // pred_region
          _
        $region28: #{tpu_custom_call.1} parent=11 // pred_fallthru
          _
        // Predicated region
        $region29: #{tpu_custom_call.1} parent=11 // pred_check
          %p330 = pneg %p191
        $region30: #{tpu_custom_call.1} parent=11 // pred_check_branch
          %332 = sbr.rel (%p330) target = $region32
        $region31: #{tpu_custom_call.1} parent=11 // pred_region
          _
        $region32: #{tpu_custom_call.1} parent=11 // pred_fallthru
          _
        // Predicated region
        $region33: #{tpu_custom_call.1} parent=11 // pred_check
          %p333 = pneg %p212
        $region34: #{tpu_custom_call.1} parent=11 // pred_check_branch
          %335 = sbr.rel (%p333) target = $region36
        $region35: #{tpu_custom_call.1} parent=11 // pred_region
          _
        $region36: #{tpu_custom_call.1} parent=11 // pred_fallthru
          _
        // Predicated region
        $region37: #{tpu_custom_call.1} parent=11 // pred_check
          %p336 = pneg %p233
        $region38: #{tpu_custom_call.1} parent=11 // pred_check_branch
          %338 = sbr.rel (%p336) target = $region40
        $region39: #{tpu_custom_call.1} parent=11 // pred_region
          _
        $region40: #{tpu_custom_call.1} parent=11 // pred_fallthru
          _
        // Predicated region
        $region41: #{tpu_custom_call.1} parent=11 // pred_check
          %p339 = pneg %p254
        $region42: #{tpu_custom_call.1} parent=11 // pred_check_branch
          %341 = sbr.rel (%p339) target = $region44
        $region43: #{tpu_custom_call.1} parent=11 // pred_region
          _
        $region44: #{tpu_custom_call.1} parent=11 // pred_fallthru
          _
        // Predicated region
        $region45: #{tpu_custom_call.1} parent=11 // pred_check
          %p342 = pneg %p275
        $region46: #{tpu_custom_call.1} parent=11 // pred_check_branch
          %344 = sbr.rel (%p342) target = $region48
        $region47: #{tpu_custom_call.1} parent=11 // pred_region
          _
        $region48: #{tpu_custom_call.1} parent=11 // pred_fallthru
          _
      $region12: #{tpu_custom_call.1} parent=5 // pred_fallthru
        _
      %p345 = scmp.lt.s32.totalorder %s20, 2
      // Predicated region
      $region49: #{tpu_custom_call.1} parent=5 // pred_check
        %p346 = pneg %p345
      $region50: #{tpu_custom_call.1} parent=5 // pred_check_branch
        %348 = sbr.rel (%p346) target = $region52
      $region51: #{tpu_custom_call.1} parent=5 // pred_region
        // Predicated region
        $region53: #{tpu_custom_call.1} parent=51 // pred_check
          %p349 = pneg %p54
        $region54: #{tpu_custom_call.1} parent=51 // pred_check_branch
          %351 = sbr.rel (%p349) target = $region56
        $region55: #{tpu_custom_call.1} parent=51 // pred_region
          %s352 = smul.u32 32, %s28
          %p353 = scmp.lt.s32.totalorder %s27, 1
          %s354 = scalar_select %p353, %s27, 1
          %p355 = scmp.lt.s32.totalorder %s352, 31
          %s356 = scalar_select %p355, %s352, 31
          %s357 = smul.addr %s356, 2
          %s358 = smul.addr %s354, 64
          %s359 = sadd.s32 %s357, %s358
          %s360 = smul.addr %s359, 4
          %s361 = scalar_lea.vmem %s0, %s360
          %s362 = smul.u32 32, %s28
        $region56: #{tpu_custom_call.1} parent=51 // pred_fallthru
          _
        // Predicated region
        $region57: #{tpu_custom_call.1} parent=51 // pred_check
          %p363 = pneg %p80
        $region58: #{tpu_custom_call.1} parent=51 // pred_check_branch
          %365 = sbr.rel (%p363) target = $region60
        $region59: #{tpu_custom_call.1} parent=51 // pred_region
          %p366 = scmp.lt.s32.totalorder %s27, 1
          %s367 = scalar_select %p366, %s27, 1
          %s368 = smul.addr %s367, 4
          %s369 = scalar_lea.vmem %s1, %s368
        $region60: #{tpu_custom_call.1} parent=51 // pred_fallthru
          _
      $region52: #{tpu_custom_call.1} parent=5 // pred_fallthru
        _
      %p370 = scmp.le.s32.totalorder 1, %s20
      %p371 = scmp.lt.s32.totalorder %s20, 3
      %p372 = pnand %p370, %p371
      %p373 = pneg %p372
      // Predicated region
      $region61: #{tpu_custom_call.1} parent=5 // pred_check
        _
      $region62: #{tpu_custom_call.1} parent=5 // pred_check_branch
        %375 = sbr.rel (%p372) target = $region64
      $region63: #{tpu_custom_call.1} parent=5 // pred_region
        %s376 = ssub.s32 %s20, 1
        %s377 = smul.u32 32, %s30
        %p378 = scmp.lt.s32.totalorder %s29, 1
        %s379 = scalar_select %p378, %s29, 1
        %p380 = scmp.lt.s32.totalorder %s377, 31
        %s381 = scalar_select %p380, %s377, 31
        %s382 = smul.addr %s381, 2
        %s383 = smul.addr %s379, 64
        %s384 = sadd.s32 %s382, %s383
        %s385 = smul.addr %s384, 4
        %s386 = scalar_lea.vmem %s0, %s385
        %p387 = pneg %p60
        %p388 = pneg %p57
        %p389 = scmp.lt.s32.totalorder %s29, 1
        %s390 = scalar_select %p389, %s29, 1
        %s391 = smul.addr %s390, 4
        %s392 = scalar_lea.vmem %s1, %s391
        %p393 = pneg %p86
        %p394 = pneg %p83
        %p395 = pneg %p107
        %p396 = pneg %p104
        %p397 = pneg %p128
        %p398 = pneg %p125
        %p399 = pneg %p149
        %p400 = pneg %p146
        %p401 = pneg %p170
        %p402 = pneg %p167
        %p403 = pneg %p191
        %p404 = pneg %p188
        %p405 = pneg %p212
        %p406 = pneg %p209
        %p407 = pneg %p233
        %p408 = pneg %p230
        %p409 = pneg %p254
        %p410 = pneg %p251
        %p411 = pneg %p275
        %p412 = pneg %p272
        %p413 = pneg %p303
        %p414 = pneg %p300
        %s415 = sand.u32 %s290, 1
        %s416 = scalar_lea.sflag [#allocation3], %s415
        %s417 = sand.u32 %s290, 1
        %s418 = smul.addr %s417, 256
        %s419 = scalar_lea.vmem [#allocation2], %s418
        %s420 = smul.u32 32, %s30
        %p421 = scmp.lt.s32.totalorder %s29, 1
        %s422 = scalar_select %p421, %s29, 1
        %p423 = scmp.lt.s32.totalorder %s420, 31
        %s424 = scalar_select %p423, %s420, 31
        %s425 = smul.addr %s424, 2
        %s426 = smul.addr %s422, 64
        %s427 = sadd.s32 %s425, %s426
        %s428 = smul.addr %s427, 4
        %s429 = scalar_lea.vmem %s0, %s428
        %s430 = smul.u32 32, %s30
        %p431 = scmp.lt.s32.totalorder %s29, 1
        %s432 = scalar_select %p431, %s29, 1
        %s433 = smul.addr %s432, 4
        %s434 = scalar_lea.vmem %s1, %s433
        %s435 = smul.u32 32, %s30
        %v437 = vld [vmem:[%s429] sm:$0xff]
        %v438 = vld [vmem:[%s429 + $0x8] sm:$0xff]
        %v439 = vld [vmem:[%s429 + $0x10] sm:$0xff]
        %v440 = vld [vmem:[%s429 + $0x18] sm:$0xff]
        %v441 = vld [vmem:[%s429 + $0x20] sm:$0xff]
        %v442 = vld [vmem:[%s429 + $0x28] sm:$0xff]
        %v443 = vld [vmem:[%s429 + $0x30] sm:$0xff]
        %v444 = vld [vmem:[%s429 + $0x38] sm:$0xff]
        %v445 = vld [vmem:[%s429 + $0x40] sm:$0xff]
        %v446 = vld [vmem:[%s429 + $0x48] sm:$0xff]
        %v447 = vld [vmem:[%s429 + $0x50] sm:$0xff]
        %v448 = vld [vmem:[%s429 + $0x58] sm:$0xff]
        %v449 = vld [vmem:[%s429 + $0x60] sm:$0xff]
        %v450 = vld [vmem:[%s429 + $0x68] sm:$0xff]
        %v451 = vld [vmem:[%s429 + $0x70] sm:$0xff]
        %v452 = vld [vmem:[%s429 + $0x78] sm:$0xff]
        %v453 = vld [vmem:[%s429 + $0x80] sm:$0xff]
        %v454 = vld [vmem:[%s429 + $0x88] sm:$0xff]
        %v455 = vld [vmem:[%s429 + $0x90] sm:$0xff]
        %v456 = vld [vmem:[%s429 + $0x98] sm:$0xff]
        %v457 = vld [vmem:[%s429 + $0xa0] sm:$0xff]
        %v458 = vld [vmem:[%s429 + $0xa8] sm:$0xff]
        %v459 = vld [vmem:[%s429 + $0xb0] sm:$0xff]
        %v460 = vld [vmem:[%s429 + $0xb8] sm:$0xff]
        %v461 = vld [vmem:[%s429 + $0xc0] sm:$0xff]
        %v462 = vld [vmem:[%s429 + $0xc8] sm:$0xff]
        %v463 = vld [vmem:[%s429 + $0xd0] sm:$0xff]
        %v464 = vld [vmem:[%s429 + $0xd8] sm:$0xff]
        %v465 = vld [vmem:[%s429 + $0xe0] sm:$0xff]
        %v466 = vld [vmem:[%s429 + $0xe8] sm:$0xff]
        %v467 = vld [vmem:[%s429 + $0xf0] sm:$0xff]
        %v468 = vld [vmem:[%s429 + $0xf8] sm:$0xff]
        %v469 = vld [vmem:[%s6] sm:$0xf]
        %v470 = vld [vmem:[%s6 + $0x4] sm:$0xf]
        %v471 = vld [vmem:[%s6 + $0x8] sm:$0xf]
        %v472 = vld [vmem:[%s6 + $0xc] sm:$0xf]
        %v473 = vld [vmem:[%s6 + $0x10] sm:$0xf]
        %v474 = vld [vmem:[%s6 + $0x14] sm:$0xf]
        %v475 = vld [vmem:[%s6 + $0x18] sm:$0xf]
        %v476 = vld [vmem:[%s6 + $0x1c] sm:$0xf]
        %v477 = vld [vmem:[%s6 + $0x20] sm:$0xf]
        %v478 = vld [vmem:[%s6 + $0x24] sm:$0xf]
        %v479 = vld [vmem:[%s6 + $0x28] sm:$0xf]
        %v480 = vld [vmem:[%s6 + $0x2c] sm:$0xf]
        %v481 = vld [vmem:[%s6 + $0x30] sm:$0xf]
        %v482 = vld [vmem:[%s6 + $0x34] sm:$0xf]
        %v483 = vld [vmem:[%s6 + $0x38] sm:$0xf]
        %v484 = vld [vmem:[%s6 + $0x3c] sm:$0xf]
        %v485 = vld [vmem:[%s6 + $0x40] sm:$0xf]
        %v486 = vld [vmem:[%s6 + $0x44] sm:$0xf]
        %v487 = vld [vmem:[%s7] sm:$0x1]
        %v489 = vlaneseq
        %v490 = vshrl.u32 %v489, 7
        %v491 = vsub.s32 0, %v490
        %v492 = vrot.slane %v487, %v491
        %v526 = vunpack.c.l.b16 %v437
        %v527 = vunpack.c.h.b16 %v437
        %v528 = vunpack.c.l.b16 %v438
        %v529 = vunpack.c.h.b16 %v438
        %v530 = vunpack.c.l.b16 %v439
        %v531 = vunpack.c.h.b16 %v439
        %v532 = vunpack.c.l.b16 %v440
        %v533 = vunpack.c.h.b16 %v440
        %v534 = vunpack.c.l.b16 %v441
        %v535 = vunpack.c.h.b16 %v441
        %v536 = vunpack.c.l.b16 %v442
        %v537 = vunpack.c.h.b16 %v442
        %v538 = vunpack.c.l.b16 %v443
        %v539 = vunpack.c.h.b16 %v443
        %v540 = vunpack.c.l.b16 %v444
        %v541 = vunpack.c.h.b16 %v444
        %v542 = vunpack.c.l.b16 %v445
        %v543 = vunpack.c.h.b16 %v445
        %v544 = vunpack.c.l.b16 %v446
        %v545 = vunpack.c.h.b16 %v446
        %v546 = vunpack.c.l.b16 %v447
        %v547 = vunpack.c.h.b16 %v447
        %v548 = vunpack.c.l.b16 %v448
        %v549 = vunpack.c.h.b16 %v448
        %v550 = vunpack.c.l.b16 %v449
        %v551 = vunpack.c.h.b16 %v449
        %v552 = vunpack.c.l.b16 %v450
        %v553 = vunpack.c.h.b16 %v450
        %v554 = vunpack.c.l.b16 %v451
        %v555 = vunpack.c.h.b16 %v451
        %v556 = vunpack.c.l.b16 %v452
        %v557 = vunpack.c.h.b16 %v452
        %v558 = vunpack.c.l.b16 %v453
        %v559 = vunpack.c.h.b16 %v453
        %v560 = vunpack.c.l.b16 %v454
        %v561 = vunpack.c.h.b16 %v454
        %v562 = vunpack.c.l.b16 %v455
        %v563 = vunpack.c.h.b16 %v455
        %v564 = vunpack.c.l.b16 %v456
        %v565 = vunpack.c.h.b16 %v456
        %v566 = vunpack.c.l.b16 %v457
        %v567 = vunpack.c.h.b16 %v457
        %v568 = vunpack.c.l.b16 %v458
        %v569 = vunpack.c.h.b16 %v458
        %v570 = vunpack.c.l.b16 %v459
        %v571 = vunpack.c.h.b16 %v459
        %v572 = vunpack.c.l.b16 %v460
        %v573 = vunpack.c.h.b16 %v460
        %v574 = vunpack.c.l.b16 %v461
        %v575 = vunpack.c.h.b16 %v461
        %v576 = vunpack.c.l.b16 %v462
        %v577 = vunpack.c.h.b16 %v462
        %v578 = vunpack.c.l.b16 %v463
        %v579 = vunpack.c.h.b16 %v463
        %v580 = vunpack.c.l.b16 %v464
        %v581 = vunpack.c.h.b16 %v464
        %v582 = vunpack.c.l.b16 %v465
        %v583 = vunpack.c.h.b16 %v465
        %v584 = vunpack.c.l.b16 %v466
        %v585 = vunpack.c.h.b16 %v466
        %v586 = vunpack.c.l.b16 %v467
        %v587 = vunpack.c.h.b16 %v467
        %v588 = vunpack.c.l.b16 %v468
        %v589 = vunpack.c.h.b16 %v468
        %v590 = vpack.c.b16 %v528, %v526
        %v591 = vpack.c.b16 %v529, %v527
        %v592 = vpack.c.b16 %v532, %v530
        %v593 = vpack.c.b16 %v533, %v531
        %v594 = vpack.c.b16 %v536, %v534
        %v595 = vpack.c.b16 %v537, %v535
        %v596 = vpack.c.b16 %v540, %v538
        %v597 = vpack.c.b16 %v541, %v539
        %v598 = vpack.c.b16 %v544, %v542
        %v599 = vpack.c.b16 %v545, %v543
        %v600 = vpack.c.b16 %v548, %v546
        %v601 = vpack.c.b16 %v549, %v547
        %v602 = vpack.c.b16 %v552, %v550
        %v603 = vpack.c.b16 %v553, %v551
        %v604 = vpack.c.b16 %v556, %v554
        %v605 = vpack.c.b16 %v557, %v555
        %v606 = vpack.c.b16 %v560, %v558
        %v607 = vpack.c.b16 %v561, %v559
        %v608 = vpack.c.b16 %v564, %v562
        %v609 = vpack.c.b16 %v565, %v563
        %v610 = vpack.c.b16 %v568, %v566
        %v611 = vpack.c.b16 %v569, %v567
        %v612 = vpack.c.b16 %v572, %v570
        %v613 = vpack.c.b16 %v573, %v571
        %v614 = vpack.c.b16 %v576, %v574
        %v615 = vpack.c.b16 %v577, %v575
        %v616 = vpack.c.b16 %v580, %v578
        %v617 = vpack.c.b16 %v581, %v579
        %v618 = vpack.c.b16 %v584, %v582
        %v619 = vpack.c.b16 %v585, %v583
        %v620 = vpack.c.b16 %v588, %v586
        %v621 = vpack.c.b16 %v589, %v587
        %v656 = vunpack.c.l.b16 %v469
        %v657 = vunpack.c.l.b16 %v470
        %v658 = vunpack.c.l.b16 %v471
        %v659 = vunpack.c.l.b16 %v472
        %v660 = vunpack.c.l.b16 %v473
        %v661 = vunpack.c.l.b16 %v474
        %v662 = vunpack.c.l.b16 %v475
        %v663 = vunpack.c.l.b16 %v476
        %v664 = vunpack.c.l.b16 %v477
        %v665 = vunpack.c.l.b16 %v478
        %v666 = vunpack.c.l.b16 %v479
        %v667 = vunpack.c.l.b16 %v480
        %v668 = vunpack.c.l.b16 %v481
        %v669 = vunpack.c.l.b16 %v482
        %v670 = vunpack.c.l.b16 %v483
        %v671 = vunpack.c.l.b16 %v484
        %v672 = vunpack.c.l.b16 %v485
        %v673 = vunpack.c.l.b16 %v486
        %v674 = vpack.c.b16 %v657, %v656
        %v675 = vpack.c.b16 %v659, %v658
        %v676 = vpack.c.b16 %v661, %v660
        %v677 = vpack.c.b16 %v663, %v662
        %v678 = vpack.c.b16 %v665, %v664
        %v679 = vpack.c.b16 %v667, %v666
        %v680 = vpack.c.b16 %v669, %v668
        %v681 = vpack.c.b16 %v671, %v670
        %v682 = vpack.c.b16 %v673, %v672
        %vm692 = vcmask 130048
        %v694 = vsel %vm692, %v591, 0
        %v697 = vsel %vm692, %v593, 0
        %v700 = vsel %vm692, %v595, 0
        %v703 = vsel %vm692, %v597, 0
        %v706 = vsel %vm692, %v599, 0
        %v709 = vsel %vm692, %v601, 0
        %v712 = vsel %vm692, %v603, 0
        %v715 = vsel %vm692, %v605, 0
        %v718 = vsel %vm692, %v607, 0
        %v721 = vsel %vm692, %v609, 0
        %v724 = vsel %vm692, %v611, 0
        %v727 = vsel %vm692, %v613, 0
        %v730 = vsel %vm692, %v615, 0
        %v733 = vsel %vm692, %v617, 0
        %v736 = vsel %vm692, %v619, 0
        %v739 = vsel %vm692, %v621, 0
        %741 = vmatprep.subr.bf16.mxu0 0
        %742 = vmatpush1.bf16.msra.mxu0 %v674
        %743 = vmatprep.subr.bf16.mxu0 0
        %744 = vmatpush1.bf16.msra.mxu0 %v675
        %745 = vmatprep.subr.bf16.mxu0 0
        %746 = vmatpush1.bf16.msra.mxu0 %v676
        %747 = vmatprep.subr.bf16.mxu0 0
        %748 = vmatpush1.bf16.msra.mxu0 %v677
        %749 = vmatprep.subr.bf16.mxu0 0
        %750 = vmatpush1.bf16.msra.mxu0 %v678
        %751 = vmatprep.subr.bf16.mxu0 0
        %752 = vmatpush1.bf16.msra.mxu0 %v679
        %753 = vmatprep.subr.bf16.mxu0 0
        %754 = vmatpush1.bf16.msra.mxu0 %v680
        %755 = vmatprep.subr.bf16.mxu0 0
        %756 = vmatpush1.bf16.msra.mxu0 %v681
        %757 = vmatprep.subr.bf16.mxu0 0
        %758 = vmatpush1.bf16.msra.mxu0 %v682
        %759 = vmatprep.subr.bf16.mxu0 0
        %760 = vmatpush1.bf16.msra.mxu0 0
        %761 = vmatprep.subr.bf16.mxu0 0
        %762 = vmatpush1.bf16.msra.mxu0 0
        %763 = vmatprep.subr.bf16.mxu0 0
        %764 = vmatpush1.bf16.msra.mxu0 0
        %765 = vmatprep.subr.bf16.mxu0 0
        %766 = vmatpush1.bf16.msra.mxu0 0
        %767 = vmatprep.subr.bf16.mxu0 0
        %768 = vmatpush1.bf16.msra.mxu0 0
        %769 = vmatprep.subr.bf16.mxu0 0
        %770 = vmatpush1.bf16.msra.mxu0 0
        %771 = vmatprep.subr.bf16.mxu0 0
        %772 = vmatpush1.bf16.msra.mxu0 0
        %773 = vmatprep.mubr.bf16.mxu0 %v694
        %774 = vmatmul.mubr.bf16.gmra.mrb[0].mxu0 %v590
        %v775 = vpop.f32.mrb[0].mxu0
        %v776 = vadd.f32 %v492, %v775
        %v777 = vpop.f32.mrb[0].mxu0
        %v778 = vpop.f32.mrb[0].mxu0
        %v779 = vadd.f32 %v492, %v778
        %v780 = vpop.f32.mrb[0].mxu0
        %781 = vmatprep.mubr.bf16.mxu0 %v697
        %782 = vmatmul.mubr.bf16.gmra.mrb[0].mxu0 %v592
        %v783 = vpop.f32.mrb[0].mxu0
        %v784 = vadd.f32 %v492, %v783
        %v785 = vpop.f32.mrb[0].mxu0
        %v786 = vpop.f32.mrb[0].mxu0
        %v787 = vadd.f32 %v492, %v786
        %v788 = vpop.f32.mrb[0].mxu0
        %789 = vmatprep.mubr.bf16.mxu0 %v700
        %790 = vmatmul.mubr.bf16.gmra.mrb[0].mxu0 %v594
        %v791 = vpop.f32.mrb[0].mxu0
        %v792 = vadd.f32 %v492, %v791
        %v793 = vpop.f32.mrb[0].mxu0
        %v794 = vpop.f32.mrb[0].mxu0
        %v795 = vadd.f32 %v492, %v794
        %v796 = vpop.f32.mrb[0].mxu0
        %797 = vmatprep.mubr.bf16.mxu0 %v703
        %798 = vmatmul.mubr.bf16.gmra.mrb[0].mxu0 %v596
        %v799 = vpop.f32.mrb[0].mxu0
        %v800 = vadd.f32 %v492, %v799
        %v801 = vpop.f32.mrb[0].mxu0
        %v802 = vpop.f32.mrb[0].mxu0
        %v803 = vadd.f32 %v492, %v802
        %v804 = vpop.f32.mrb[0].mxu0
        %805 = vmatprep.mubr.bf16.mxu0 %v706
        %806 = vmatmul.mubr.bf16.gmra.mrb[0].mxu0 %v598
        %v807 = vpop.f32.mrb[0].mxu0
        %v808 = vadd.f32 %v492, %v807
        %v809 = vpop.f32.mrb[0].mxu0
        %v810 = vpop.f32.mrb[0].mxu0
        %v811 = vadd.f32 %v492, %v810
        %v812 = vpop.f32.mrb[0].mxu0
        %813 = vmatprep.mubr.bf16.mxu0 %v709
        %814 = vmatmul.mubr.bf16.gmra.mrb[0].mxu0 %v600
        %v815 = vpop.f32.mrb[0].mxu0
        %v816 = vadd.f32 %v492, %v815
        %v817 = vpop.f32.mrb[0].mxu0
        %v818 = vpop.f32.mrb[0].mxu0
        %v819 = vadd.f32 %v492, %v818
        %v820 = vpop.f32.mrb[0].mxu0
        %821 = vmatprep.mubr.bf16.mxu0 %v712
        %822 = vmatmul.mubr.bf16.gmra.mrb[0].mxu0 %v602
        %v823 = vpop.f32.mrb[0].mxu0
        %v824 = vadd.f32 %v492, %v823
        %v825 = vpop.f32.mrb[0].mxu0
        %v826 = vpop.f32.mrb[0].mxu0
        %v827 = vadd.f32 %v492, %v826
        %v828 = vpop.f32.mrb[0].mxu0
        %829 = vmatprep.mubr.bf16.mxu0 %v715
        %830 = vmatmul.mubr.bf16.gmra.mrb[0].mxu0 %v604
        %v831 = vpop.f32.mrb[0].mxu0
        %v832 = vadd.f32 %v492, %v831
        %v833 = vpop.f32.mrb[0].mxu0
        %v834 = vpop.f32.mrb[0].mxu0
        %v835 = vadd.f32 %v492, %v834
        %v836 = vpop.f32.mrb[0].mxu0
        %837 = vmatprep.mubr.bf16.mxu0 %v718
        %838 = vmatmul.mubr.bf16.gmra.mrb[0].mxu0 %v606
        %v839 = vpop.f32.mrb[0].mxu0
        %v840 = vadd.f32 %v492, %v839
        %v841 = vpop.f32.mrb[0].mxu0
        %v842 = vpop.f32.mrb[0].mxu0
        %v843 = vadd.f32 %v492, %v842
        %v844 = vpop.f32.mrb[0].mxu0
        %845 = vmatprep.mubr.bf16.mxu0 %v721
        %846 = vmatmul.mubr.bf16.gmra.mrb[0].mxu0 %v608
        %v847 = vpop.f32.mrb[0].mxu0
        %v848 = vadd.f32 %v492, %v847
        %v849 = vpop.f32.mrb[0].mxu0
        %v850 = vpop.f32.mrb[0].mxu0
        %v851 = vadd.f32 %v492, %v850
        %v852 = vpop.f32.mrb[0].mxu0
        %853 = vmatprep.mubr.bf16.mxu0 %v724
        %854 = vmatmul.mubr.bf16.gmra.mrb[0].mxu0 %v610
        %v855 = vpop.f32.mrb[0].mxu0
        %v856 = vadd.f32 %v492, %v855
        %v857 = vpop.f32.mrb[0].mxu0
        %v858 = vpop.f32.mrb[0].mxu0
        %v859 = vadd.f32 %v492, %v858
        %v860 = vpop.f32.mrb[0].mxu0
        %861 = vmatprep.mubr.bf16.mxu0 %v727
        %862 = vmatmul.mubr.bf16.gmra.mrb[0].mxu0 %v612
        %v863 = vpop.f32.mrb[0].mxu0
        %v864 = vadd.f32 %v492, %v863
        %v865 = vpop.f32.mrb[0].mxu0
        %v866 = vpop.f32.mrb[0].mxu0
        %v867 = vadd.f32 %v492, %v866
        %v868 = vpop.f32.mrb[0].mxu0
        %869 = vmatprep.mubr.bf16.mxu0 %v730
        %870 = vmatmul.mubr.bf16.gmra.mrb[0].mxu0 %v614
        %v871 = vpop.f32.mrb[0].mxu0
        %v872 = vadd.f32 %v492, %v871
        %v873 = vpop.f32.mrb[0].mxu0
        %v874 = vpop.f32.mrb[0].mxu0
        %v875 = vadd.f32 %v492, %v874
        %v876 = vpop.f32.mrb[0].mxu0
        %877 = vmatprep.mubr.bf16.mxu0 %v733
        %878 = vmatmul.mubr.bf16.gmra.mrb[0].mxu0 %v616
        %v879 = vpop.f32.mrb[0].mxu0
        %v880 = vadd.f32 %v492, %v879
        %v881 = vpop.f32.mrb[0].mxu0
        %v882 = vpop.f32.mrb[0].mxu0
        %v883 = vadd.f32 %v492, %v882
        %v884 = vpop.f32.mrb[0].mxu0
        %885 = vmatprep.mubr.bf16.mxu0 %v736
        %886 = vmatmul.mubr.bf16.gmra.mrb[0].mxu0 %v618
        %v887 = vpop.f32.mrb[0].mxu0
        %v888 = vadd.f32 %v492, %v887
        %v889 = vpop.f32.mrb[0].mxu0
        %v890 = vpop.f32.mrb[0].mxu0
        %v891 = vadd.f32 %v492, %v890
        %v892 = vpop.f32.mrb[0].mxu0
        %893 = vmatprep.mubr.bf16.mxu0 %v739
        %894 = vmatmul.mubr.bf16.gmra.mrb[0].mxu0 %v620
        %v895 = vpop.f32.mrb[0].mxu0
        %v896 = vadd.f32 %v492, %v895
        %v897 = vpop.f32.mrb[0].mxu0
        %v898 = vpop.f32.mrb[0].mxu0
        %v899 = vadd.f32 %v492, %v898
        %v900 = vpop.f32.mrb[0].mxu0
        %901 = vdwg.mxu0
        %v902 = vld [vmem:[%s434] sm:$0xf]
        %v903 = vld [vmem:[%s2] sm:$0xf]
        %v904 = vld [vmem:[%s2 + $0x4] sm:$0xf]
        %v905 = vld [vmem:[%s2 + $0x8] sm:$0xf]
        %v906 = vld [vmem:[%s2 + $0xc] sm:$0xf]
        %v907 = vld [vmem:[%s2 + $0x10] sm:$0xf]
        %v908 = vld [vmem:[%s2 + $0x14] sm:$0xf]
        %v909 = vld [vmem:[%s2 + $0x18] sm:$0xf]
        %v910 = vld [vmem:[%s2 + $0x1c] sm:$0xf]
        %v911 = vld [vmem:[%s3] sm:$0x1]
        %v913 = vlaneseq
        %v914 = vshrl.u32 %v913, 7
        %v915 = vsub.s32 0, %v914
        %v916 = vrot.slane %v911, %v915
        %v926 = vunpack.c.l.b16 %v903
        %v927 = vunpack.c.l.b16 %v904
        %v928 = vunpack.c.l.b16 %v905
        %v929 = vunpack.c.l.b16 %v906
        %v930 = vunpack.c.l.b16 %v907
        %v931 = vunpack.c.l.b16 %v908
        %v932 = vunpack.c.l.b16 %v909
        %v933 = vunpack.c.l.b16 %v910
        %v934 = vpack.c.b16 %v927, %v926
        %v935 = vpack.c.b16 %v929, %v928
        %v936 = vpack.c.b16 %v931, %v930
        %v937 = vpack.c.b16 %v933, %v932
        %vm942 = vcmask 523264
        %v944 = vsel %vm942, %v902, 0
        %946 = vmatprep.subr.bf16.mxu0 0
        %947 = vmatpush1.bf16.msra.mxu0 %v934
        %948 = vmatprep.subr.bf16.mxu0 0
        %949 = vmatpush1.bf16.msra.mxu0 %v935
        %950 = vmatprep.subr.bf16.mxu0 0
        %951 = vmatpush1.bf16.msra.mxu0 %v936
        %952 = vmatprep.subr.bf16.mxu0 0
        %953 = vmatpush1.bf16.msra.mxu0 %v937
        %954 = vmatprep.subr.bf16.mxu0 0
        %955 = vmatpush1.bf16.msra.mxu0 0
        %956 = vmatprep.subr.bf16.mxu0 0
        %957 = vmatpush1.bf16.msra.mxu0 0
        %958 = vmatprep.subr.bf16.mxu0 0
        %959 = vmatpush1.bf16.msra.mxu0 0
        %960 = vmatprep.subr.bf16.mxu0 0
        %961 = vmatpush1.bf16.msra.mxu0 0
        %962 = vmatprep.subr.bf16.mxu0 0
        %963 = vmatpush1.bf16.msra.mxu0 0
        %964 = vmatprep.subr.bf16.mxu0 0
        %965 = vmatpush1.bf16.msra.mxu0 0
        %966 = vmatprep.subr.bf16.mxu0 0
        %967 = vmatpush1.bf16.msra.mxu0 0
        %968 = vmatprep.subr.bf16.mxu0 0
        %969 = vmatpush1.bf16.msra.mxu0 0
        %970 = vmatprep.subr.bf16.mxu0 0
        %971 = vmatpush1.bf16.msra.mxu0 0
        %972 = vmatprep.subr.bf16.mxu0 0
        %973 = vmatpush1.bf16.msra.mxu0 0
        %974 = vmatprep.subr.bf16.mxu0 0
        %975 = vmatpush1.bf16.msra.mxu0 0
        %976 = vmatprep.subr.bf16.mxu0 0
        %977 = vmatpush1.bf16.msra.mxu0 0
        %978 = vmatprep.mubr.bf16.mxu0 0
        %979 = vmatmul.mubr.bf16.gmra.mrb[0].mxu0 %v944
        %v980 = vpop.f32.mrb[0].mxu0
        %v981 = vadd.f32 %v916, %v980
        %v982 = vpop.f32.mrb[0].mxu0
        %v983 = vpop.f32.mrb[0].mxu0
        %v984 = vpop.f32.mrb[0].mxu0
        %985 = vdwg.mxu0
        %v986 = vld [vmem:[%s4] sm:$0xf]
        %v987 = vld [vmem:[%s4 + $0x4] sm:$0xf]
        %v988 = vld [vmem:[%s5] sm:$0x1]
        %v990 = vlaneseq
        %v991 = vshrl.u32 %v990, 7
        %v992 = vsub.s32 0, %v991
        %v993 = vrot.slane %v988, %v992
        %v997 = vunpack.c.l.b16 %v986
        %v998 = vunpack.c.l.b16 %v987
        %v999 = vpack.c.b16 %v998, %v997
        %v1002 = vsel %vm692, %v590, 0
        %v1005 = vsel %vm692, %v592, 0
        %v1008 = vsel %vm692, %v594, 0
        %v1011 = vsel %vm692, %v596, 0
        %v1014 = vsel %vm692, %v598, 0
        %v1017 = vsel %vm692, %v600, 0
        %v1020 = vsel %vm692, %v602, 0
        %v1023 = vsel %vm692, %v604, 0
        %v1026 = vsel %vm692, %v606, 0
        %v1029 = vsel %vm692, %v608, 0
        %v1032 = vsel %vm692, %v610, 0
        %v1035 = vsel %vm692, %v612, 0
        %v1038 = vsel %vm692, %v614, 0
        %v1041 = vsel %vm692, %v616, 0
        %v1044 = vsel %vm692, %v618, 0
        %v1047 = vsel %vm692, %v620, 0
        %1049 = vmatprep.subr.bf16.mxu0 0
        %1050 = vmatpush1.bf16.msra.mxu0 %v999
        %1051 = vmatprep.subr.bf16.mxu0 0
        %1052 = vmatpush1.bf16.msra.mxu0 0
        %1053 = vmatprep.subr.bf16.mxu0 0
        %1054 = vmatpush1.bf16.msra.mxu0 0
        %1055 = vmatprep.subr.bf16.mxu0 0
        %1056 = vmatpush1.bf16.msra.mxu0 0
        %1057 = vmatprep.subr.bf16.mxu0 0
        %1058 = vmatpush1.bf16.msra.mxu0 0
        %1059 = vmatprep.subr.bf16.mxu0 0
        %1060 = vmatpush1.bf16.msra.mxu0 0
        %1061 = vmatprep.subr.bf16.mxu0 0
        %1062 = vmatpush1.bf16.msra.mxu0 0
        %1063 = vmatprep.subr.bf16.mxu0 0
        %1064 = vmatpush1.bf16.msra.mxu0 0
        %1065 = vmatprep.subr.bf16.mxu0 0
        %1066 = vmatpush1.bf16.msra.mxu0 0
        %1067 = vmatprep.subr.bf16.mxu0 0
        %1068 = vmatpush1.bf16.msra.mxu0 0
        %1069 = vmatprep.subr.bf16.mxu0 0
        %1070 = vmatpush1.bf16.msra.mxu0 0
        %1071 = vmatprep.subr.bf16.mxu0 0
        %1072 = vmatpush1.bf16.msra.mxu0 0
        %1073 = vmatprep.subr.bf16.mxu0 0
        %1074 = vmatpush1.bf16.msra.mxu0 0
        %1075 = vmatprep.subr.bf16.mxu0 0
        %1076 = vmatpush1.bf16.msra.mxu0 0
        %1077 = vmatprep.subr.bf16.mxu0 0
        %1078 = vmatpush1.bf16.msra.mxu0 0
        %1079 = vmatprep.subr.bf16.mxu0 0
        %1080 = vmatpush1.bf16.msra.mxu0 0
        %1081 = vmatprep.mubr.bf16.mxu0 0
        %1082 = vmatmul.mubr.bf16.gmra.mrb[0].mxu0 %v1002
        %v1083 = vpop.f32.mrb[0].mxu0
        %v1084 = vadd.f32 %v993, %v1083
        %v1085 = vpop.f32.mrb[0].mxu0
        %v1086 = vpop.f32.mrb[0].mxu0
        %v1087 = vadd.f32 %v993, %v1086
        %v1088 = vpop.f32.mrb[0].mxu0
        %1089 = vmatprep.mubr.bf16.mxu0 0
        %1090 = vmatmul.mubr.bf16.gmra.mrb[0].mxu0 %v1005
        %v1091 = vpop.f32.mrb[0].mxu0
        %v1092 = vadd.f32 %v993, %v1091
        %v1093 = vpop.f32.mrb[0].mxu0
        %v1094 = vpop.f32.mrb[0].mxu0
        %v1095 = vadd.f32 %v993, %v1094
        %v1096 = vpop.f32.mrb[0].mxu0
        %1097 = vmatprep.mubr.bf16.mxu0 0
        %1098 = vmatmul.mubr.bf16.gmra.mrb[0].mxu0 %v1008
        %v1099 = vpop.f32.mrb[0].mxu0
        %v1100 = vadd.f32 %v993, %v1099
        %v1101 = vpop.f32.mrb[0].mxu0
        %v1102 = vpop.f32.mrb[0].mxu0
        %v1103 = vadd.f32 %v993, %v1102
        %v1104 = vpop.f32.mrb[0].mxu0
        %1105 = vmatprep.mubr.bf16.mxu0 0
        %1106 = vmatmul.mubr.bf16.gmra.mrb[0].mxu0 %v1011
        %v1107 = vpop.f32.mrb[0].mxu0
        %v1108 = vadd.f32 %v993, %v1107
        %v1109 = vpop.f32.mrb[0].mxu0
        %v1110 = vpop.f32.mrb[0].mxu0
        %v1111 = vadd.f32 %v993, %v1110
        %v1112 = vpop.f32.mrb[0].mxu0
        %1113 = vmatprep.mubr.bf16.mxu0 0
        %1114 = vmatmul.mubr.bf16.gmra.mrb[0].mxu0 %v1014
        %v1115 = vpop.f32.mrb[0].mxu0
        %v1116 = vadd.f32 %v993, %v1115
        %v1117 = vpop.f32.mrb[0].mxu0
        %v1118 = vpop.f32.mrb[0].mxu0
        %v1119 = vadd.f32 %v993, %v1118
        %v1120 = vpop.f32.mrb[0].mxu0
        %1121 = vmatprep.mubr.bf16.mxu0 0
        %1122 = vmatmul.mubr.bf16.gmra.mrb[0].mxu0 %v1017
        %v1123 = vpop.f32.mrb[0].mxu0
        %v1124 = vadd.f32 %v993, %v1123
        %v1125 = vpop.f32.mrb[0].mxu0
        %v1126 = vpop.f32.mrb[0].mxu0
        %v1127 = vadd.f32 %v993, %v1126
        %v1128 = vpop.f32.mrb[0].mxu0
        %1129 = vmatprep.mubr.bf16.mxu0 0
        %1130 = vmatmul.mubr.bf16.gmra.mrb[0].mxu0 %v1020
        %v1131 = vpop.f32.mrb[0].mxu0
        %v1132 = vadd.f32 %v993, %v1131
        %v1133 = vpop.f32.mrb[0].mxu0
        %v1134 = vpop.f32.mrb[0].mxu0
        %v1135 = vadd.f32 %v993, %v1134
        %v1136 = vpop.f32.mrb[0].mxu0
        %1137 = vmatprep.mubr.bf16.mxu0 0
        %1138 = vmatmul.mubr.bf16.gmra.mrb[0].mxu0 %v1023
        %v1139 = vpop.f32.mrb[0].mxu0
        %v1140 = vadd.f32 %v993, %v1139
        %v1141 = vpop.f32.mrb[0].mxu0
        %v1142 = vpop.f32.mrb[0].mxu0
        %v1143 = vadd.f32 %v993, %v1142
        %v1144 = vpop.f32.mrb[0].mxu0
        %1145 = vmatprep.mubr.bf16.mxu0 0
        %1146 = vmatmul.mubr.bf16.gmra.mrb[0].mxu0 %v1026
        %v1147 = vpop.f32.mrb[0].mxu0
        %v1148 = vadd.f32 %v993, %v1147
        %v1149 = vpop.f32.mrb[0].mxu0
        %v1150 = vpop.f32.mrb[0].mxu0
        %v1151 = vadd.f32 %v993, %v1150
        %v1152 = vpop.f32.mrb[0].mxu0
        %1153 = vmatprep.mubr.bf16.mxu0 0
        %1154 = vmatmul.mubr.bf16.gmra.mrb[0].mxu0 %v1029
        %v1155 = vpop.f32.mrb[0].mxu0
        %v1156 = vadd.f32 %v993, %v1155
        %v1157 = vpop.f32.mrb[0].mxu0
        %v1158 = vpop.f32.mrb[0].mxu0
        %v1159 = vadd.f32 %v993, %v1158
        %v1160 = vpop.f32.mrb[0].mxu0
        %1161 = vmatprep.mubr.bf16.mxu0 0
        %1162 = vmatmul.mubr.bf16.gmra.mrb[0].mxu0 %v1032
        %v1163 = vpop.f32.mrb[0].mxu0
        %v1164 = vadd.f32 %v993, %v1163
        %v1165 = vpop.f32.mrb[0].mxu0
        %v1166 = vpop.f32.mrb[0].mxu0
        %v1167 = vadd.f32 %v993, %v1166
        %v1168 = vpop.f32.mrb[0].mxu0
        %1169 = vmatprep.mubr.bf16.mxu0 0
        %1170 = vmatmul.mubr.bf16.gmra.mrb[0].mxu0 %v1035
        %v1171 = vpop.f32.mrb[0].mxu0
        %v1172 = vadd.f32 %v993, %v1171
        %v1173 = vpop.f32.mrb[0].mxu0
        %v1174 = vpop.f32.mrb[0].mxu0
        %v1175 = vadd.f32 %v993, %v1174
        %v1176 = vpop.f32.mrb[0].mxu0
        %1177 = vmatprep.mubr.bf16.mxu0 0
        %1178 = vmatmul.mubr.bf16.gmra.mrb[0].mxu0 %v1038
        %v1179 = vpop.f32.mrb[0].mxu0
        %v1180 = vadd.f32 %v993, %v1179
        %v1181 = vpop.f32.mrb[0].mxu0
        %v1182 = vpop.f32.mrb[0].mxu0
        %v1183 = vadd.f32 %v993, %v1182
        %v1184 = vpop.f32.mrb[0].mxu0
        %1185 = vmatprep.mubr.bf16.mxu0 0
        %1186 = vmatmul.mubr.bf16.gmra.mrb[0].mxu0 %v1041
        %v1187 = vpop.f32.mrb[0].mxu0
        %v1188 = vadd.f32 %v993, %v1187
        %v1189 = vpop.f32.mrb[0].mxu0
        %v1190 = vpop.f32.mrb[0].mxu0
        %v1191 = vadd.f32 %v993, %v1190
        %v1192 = vpop.f32.mrb[0].mxu0
        %1193 = vmatprep.mubr.bf16.mxu0 0
        %1194 = vmatmul.mubr.bf16.gmra.mrb[0].mxu0 %v1044
        %v1195 = vpop.f32.mrb[0].mxu0
        %v1196 = vadd.f32 %v993, %v1195
        %v1197 = vpop.f32.mrb[0].mxu0
        %v1198 = vpop.f32.mrb[0].mxu0
        %v1199 = vadd.f32 %v993, %v1198
        %v1200 = vpop.f32.mrb[0].mxu0
        %1201 = vmatprep.mubr.bf16.mxu0 0
        %1202 = vmatmul.mubr.bf16.gmra.mrb[0].mxu0 %v1047
        %v1203 = vpop.f32.mrb[0].mxu0
        %v1204 = vadd.f32 %v993, %v1203
        %v1205 = vpop.f32.mrb[0].mxu0
        %v1206 = vpop.f32.mrb[0].mxu0
        %v1207 = vadd.f32 %v993, %v1206
        %v1208 = vpop.f32.mrb[0].mxu0
        %1209 = vdwg.mxu0
        %v1210 = vpack.c.bf16 %v1087, %v1084
        %v1211 = vpack.c.bf16 %v1095, %v1092
        %v1212 = vpack.c.bf16 %v1103, %v1100
        %v1213 = vpack.c.bf16 %v1111, %v1108
        %v1214 = vpack.c.bf16 %v1119, %v1116
        %v1215 = vpack.c.bf16 %v1127, %v1124
        %v1216 = vpack.c.bf16 %v1135, %v1132
        %v1217 = vpack.c.bf16 %v1143, %v1140
        %v1218 = vpack.c.bf16 %v1151, %v1148
        %v1219 = vpack.c.bf16 %v1159, %v1156
        %v1220 = vpack.c.bf16 %v1167, %v1164
        %v1221 = vpack.c.bf16 %v1175, %v1172
        %v1222 = vpack.c.bf16 %v1183, %v1180
        %v1223 = vpack.c.bf16 %v1191, %v1188
        %v1224 = vpack.c.bf16 %v1199, %v1196
        %v1225 = vpack.c.bf16 %v1207, %v1204
        %v1226 = vpack.c.bf16 %v981, %v981
        %v1228 = vsel %vm692, %v1210, 0
        %v1231 = vsel %vm692, %v1211, 0
        %v1234 = vsel %vm692, %v1212, 0
        %v1237 = vsel %vm692, %v1213, 0
        %v1240 = vsel %vm692, %v1214, 0
        %v1243 = vsel %vm692, %v1215, 0
        %v1246 = vsel %vm692, %v1216, 0
        %v1249 = vsel %vm692, %v1217, 0
        %v1252 = vsel %vm692, %v1218, 0
        %v1255 = vsel %vm692, %v1219, 0
        %v1258 = vsel %vm692, %v1220, 0
        %v1261 = vsel %vm692, %v1221, 0
        %v1264 = vsel %vm692, %v1222, 0
        %v1267 = vsel %vm692, %v1223, 0
        %v1270 = vsel %vm692, %v1224, 0
        %v1273 = vsel %vm692, %v1225, 0
        %v1276 = vsel %vm692, %v1226, 0
        %1278 = vmatprep.subr.bf16.mxu0 0
        %1279 = vmatpush1.bf16.xpose.msra.mxu0 %v1276
        %1280 = vmatprep.subr.bf16.mxu0 0
        %1281 = vmatpush1.bf16.xpose.msra.mxu0 0
        %1282 = vmatprep.subr.bf16.mxu0 0
        %1283 = vmatpush1.bf16.xpose.msra.mxu0 0
        %1284 = vmatprep.subr.bf16.mxu0 0
        %1285 = vmatpush1.bf16.xpose.msra.mxu0 0
        %1286 = vmatprep.subr.bf16.mxu0 0
        %1287 = vmatpush1.bf16.xpose.msra.mxu0 0
        %1288 = vmatprep.subr.bf16.mxu0 0
        %1289 = vmatpush1.bf16.xpose.msra.mxu0 0
        %1290 = vmatprep.subr.bf16.mxu0 0
        %1291 = vmatpush1.bf16.xpose.msra.mxu0 0
        %1292 = vmatprep.subr.bf16.mxu0 0
        %1293 = vmatpush1.bf16.xpose.msra.mxu0 0
        %1294 = vmatprep.subr.bf16.mxu0 0
        %1295 = vmatpush1.bf16.xpose.msra.mxu0 0
        %1296 = vmatprep.subr.bf16.mxu0 0
        %1297 = vmatpush1.bf16.xpose.msra.mxu0 0
        %1298 = vmatprep.subr.bf16.mxu0 0
        %1299 = vmatpush1.bf16.xpose.msra.mxu0 0
        %1300 = vmatprep.subr.bf16.mxu0 0
        %1301 = vmatpush1.bf16.xpose.msra.mxu0 0
        %1302 = vmatprep.subr.bf16.mxu0 0
        %1303 = vmatpush1.bf16.xpose.msra.mxu0 0
        %1304 = vmatprep.subr.bf16.mxu0 0
        %1305 = vmatpush1.bf16.xpose.msra.mxu0 0
        %1306 = vmatprep.subr.bf16.mxu0 0
        %1307 = vmatpush1.bf16.xpose.msra.mxu0 0
        %1308 = vmatprep.subr.bf16.mxu0 0
        %1309 = vmatpush1.bf16.xpose.msra.mxu0 0
        %1310 = vmatprep.mubr.bf16.mxu0 0
        %1311 = vmatmul.mubr.bf16.gmra.mrb[0].mxu0 %v1228
        %v1312 = vpop.f32.mrb[0].mxu0
        %v1313 = vadd.f32 0.0, %v1312
        %v1314 = vpop.f32.mrb[0].mxu0
        %v1315 = vpop.f32.mrb[0].mxu0
        %v1316 = vadd.f32 0.0, %v1315
        %v1317 = vpop.f32.mrb[0].mxu0
        %1318 = vmatprep.mubr.bf16.mxu0 0
        %1319 = vmatmul.mubr.bf16.gmra.mrb[0].mxu0 %v1231
        %v1320 = vpop.f32.mrb[0].mxu0
        %v1321 = vadd.f32 0.0, %v1320
        %v1322 = vpop.f32.mrb[0].mxu0
        %v1323 = vpop.f32.mrb[0].mxu0
        %v1324 = vadd.f32 0.0, %v1323
        %v1325 = vpop.f32.mrb[0].mxu0
        %1326 = vmatprep.mubr.bf16.mxu0 0
        %1327 = vmatmul.mubr.bf16.gmra.mrb[0].mxu0 %v1234
        %v1328 = vpop.f32.mrb[0].mxu0
        %v1329 = vadd.f32 0.0, %v1328
        %v1330 = vpop.f32.mrb[0].mxu0
        %v1331 = vpop.f32.mrb[0].mxu0
        %v1332 = vadd.f32 0.0, %v1331
        %v1333 = vpop.f32.mrb[0].mxu0
        %1334 = vmatprep.mubr.bf16.mxu0 0
        %1335 = vmatmul.mubr.bf16.gmra.mrb[0].mxu0 %v1237
        %v1336 = vpop.f32.mrb[0].mxu0
        %v1337 = vadd.f32 0.0, %v1336
        %v1338 = vpop.f32.mrb[0].mxu0
        %v1339 = vpop.f32.mrb[0].mxu0
        %v1340 = vadd.f32 0.0, %v1339
        %v1341 = vpop.f32.mrb[0].mxu0
        %1342 = vmatprep.mubr.bf16.mxu0 0
        %1343 = vmatmul.mubr.bf16.gmra.mrb[0].mxu0 %v1240
        %v1344 = vpop.f32.mrb[0].mxu0
        %v1345 = vadd.f32 0.0, %v1344
        %v1346 = vpop.f32.mrb[0].mxu0
        %v1347 = vpop.f32.mrb[0].mxu0
        %v1348 = vadd.f32 0.0, %v1347
        %v1349 = vpop.f32.mrb[0].mxu0
        %1350 = vmatprep.mubr.bf16.mxu0 0
        %1351 = vmatmul.mubr.bf16.gmra.mrb[0].mxu0 %v1243
        %v1352 = vpop.f32.mrb[0].mxu0
        %v1353 = vadd.f32 0.0, %v1352
        %v1354 = vpop.f32.mrb[0].mxu0
        %v1355 = vpop.f32.mrb[0].mxu0
        %v1356 = vadd.f32 0.0, %v1355
        %v1357 = vpop.f32.mrb[0].mxu0
        %1358 = vmatprep.mubr.bf16.mxu0 0
        %1359 = vmatmul.mubr.bf16.gmra.mrb[0].mxu0 %v1246
        %v1360 = vpop.f32.mrb[0].mxu0
        %v1361 = vadd.f32 0.0, %v1360
        %v1362 = vpop.f32.mrb[0].mxu0
        %v1363 = vpop.f32.mrb[0].mxu0
        %v1364 = vadd.f32 0.0, %v1363
        %v1365 = vpop.f32.mrb[0].mxu0
        %1366 = vmatprep.mubr.bf16.mxu0 0
        %1367 = vmatmul.mubr.bf16.gmra.mrb[0].mxu0 %v1249
        %v1368 = vpop.f32.mrb[0].mxu0
        %v1369 = vadd.f32 0.0, %v1368
        %v1370 = vpop.f32.mrb[0].mxu0
        %v1371 = vpop.f32.mrb[0].mxu0
        %v1372 = vadd.f32 0.0, %v1371
        %v1373 = vpop.f32.mrb[0].mxu0
        %1374 = vmatprep.mubr.bf16.mxu0 0
        %1375 = vmatmul.mubr.bf16.gmra.mrb[0].mxu0 %v1252
        %v1376 = vpop.f32.mrb[0].mxu0
        %v1377 = vadd.f32 0.0, %v1376
        %v1378 = vpop.f32.mrb[0].mxu0
        %v1379 = vpop.f32.mrb[0].mxu0
        %v1380 = vadd.f32 0.0, %v1379
        %v1381 = vpop.f32.mrb[0].mxu0
        %1382 = vmatprep.mubr.bf16.mxu0 0
        %1383 = vmatmul.mubr.bf16.gmra.mrb[0].mxu0 %v1255
        %v1384 = vpop.f32.mrb[0].mxu0
        %v1385 = vadd.f32 0.0, %v1384
        %v1386 = vpop.f32.mrb[0].mxu0
        %v1387 = vpop.f32.mrb[0].mxu0
        %v1388 = vadd.f32 0.0, %v1387
        %v1389 = vpop.f32.mrb[0].mxu0
        %1390 = vmatprep.mubr.bf16.mxu0 0
        %1391 = vmatmul.mubr.bf16.gmra.mrb[0].mxu0 %v1258
        %v1392 = vpop.f32.mrb[0].mxu0
        %v1393 = vadd.f32 0.0, %v1392
        %v1394 = vpop.f32.mrb[0].mxu0
        %v1395 = vpop.f32.mrb[0].mxu0
        %v1396 = vadd.f32 0.0, %v1395
        %v1397 = vpop.f32.mrb[0].mxu0
        %1398 = vmatprep.mubr.bf16.mxu0 0
        %1399 = vmatmul.mubr.bf16.gmra.mrb[0].mxu0 %v1261
        %v1400 = vpop.f32.mrb[0].mxu0
        %v1401 = vadd.f32 0.0, %v1400
        %v1402 = vpop.f32.mrb[0].mxu0
        %v1403 = vpop.f32.mrb[0].mxu0
        %v1404 = vadd.f32 0.0, %v1403
        %v1405 = vpop.f32.mrb[0].mxu0
        %1406 = vmatprep.mubr.bf16.mxu0 0
        %1407 = vmatmul.mubr.bf16.gmra.mrb[0].mxu0 %v1264
        %v1408 = vpop.f32.mrb[0].mxu0
        %v1409 = vadd.f32 0.0, %v1408
        %v1410 = vpop.f32.mrb[0].mxu0
        %v1411 = vpop.f32.mrb[0].mxu0
        %v1412 = vadd.f32 0.0, %v1411
        %v1413 = vpop.f32.mrb[0].mxu0
        %1414 = vmatprep.mubr.bf16.mxu0 0
        %1415 = vmatmul.mubr.bf16.gmra.mrb[0].mxu0 %v1267
        %v1416 = vpop.f32.mrb[0].mxu0
        %v1417 = vadd.f32 0.0, %v1416
        %v1418 = vpop.f32.mrb[0].mxu0
        %v1419 = vpop.f32.mrb[0].mxu0
        %v1420 = vadd.f32 0.0, %v1419
        %v1421 = vpop.f32.mrb[0].mxu0
        %1422 = vmatprep.mubr.bf16.mxu0 0
        %1423 = vmatmul.mubr.bf16.gmra.mrb[0].mxu0 %v1270
        %v1424 = vpop.f32.mrb[0].mxu0
        %v1425 = vadd.f32 0.0, %v1424
        %v1426 = vpop.f32.mrb[0].mxu0
        %v1427 = vpop.f32.mrb[0].mxu0
        %v1428 = vadd.f32 0.0, %v1427
        %v1429 = vpop.f32.mrb[0].mxu0
        %1430 = vmatprep.mubr.bf16.mxu0 0
        %1431 = vmatmul.mubr.bf16.gmra.mrb[0].mxu0 %v1273
        %v1432 = vpop.f32.mrb[0].mxu0
        %v1433 = vadd.f32 0.0, %v1432
        %v1434 = vpop.f32.mrb[0].mxu0
        %v1435 = vpop.f32.mrb[0].mxu0
        %v1436 = vadd.f32 0.0, %v1435
        %v1437 = vpop.f32.mrb[0].mxu0
        %1438 = vdwg.mxu0
        %vm1439 = vcmask 64512
        %v1440 = vsel %vm1439, %v1313, -inf
        %1441 = vmax.xlane.f32.xlu0 %v1440
        %v1442 = vpop.xlane.xlu0 %1441
        %v1443 = vsel %vm1439, %v1316, -inf
        %1444 = vmax.xlane.f32.xlu0 %v1443
        %v1445 = vpop.xlane.xlu0 %1444
        %v1446 = vsel %vm1439, %v1321, -inf
        %1447 = vmax.xlane.f32.xlu0 %v1446
        %v1448 = vpop.xlane.xlu0 %1447
        %v1449 = vsel %vm1439, %v1324, -inf
        %1450 = vmax.xlane.f32.xlu0 %v1449
        %v1451 = vpop.xlane.xlu0 %1450
        %v1452 = vsel %vm1439, %v1329, -inf
        %1453 = vmax.xlane.f32.xlu0 %v1452
        %v1454 = vpop.xlane.xlu0 %1453
        %v1455 = vsel %vm1439, %v1332, -inf
        %1456 = vmax.xlane.f32.xlu0 %v1455
        %v1457 = vpop.xlane.xlu0 %1456
        %v1458 = vsel %vm1439, %v1337, -inf
        %1459 = vmax.xlane.f32.xlu0 %v1458
        %v1460 = vpop.xlane.xlu0 %1459
        %v1461 = vsel %vm1439, %v1340, -inf
        %1462 = vmax.xlane.f32.xlu0 %v1461
        %v1463 = vpop.xlane.xlu0 %1462
        %v1464 = vsel %vm1439, %v1345, -inf
        %1465 = vmax.xlane.f32.xlu0 %v1464
        %v1466 = vpop.xlane.xlu0 %1465
        %v1467 = vsel %vm1439, %v1348, -inf
        %1468 = vmax.xlane.f32.xlu0 %v1467
        %v1469 = vpop.xlane.xlu0 %1468
        %v1470 = vsel %vm1439, %v1353, -inf
        %1471 = vmax.xlane.f32.xlu0 %v1470
        %v1472 = vpop.xlane.xlu0 %1471
        %v1473 = vsel %vm1439, %v1356, -inf
        %1474 = vmax.xlane.f32.xlu0 %v1473
        %v1475 = vpop.xlane.xlu0 %1474
        %v1476 = vsel %vm1439, %v1361, -inf
        %1477 = vmax.xlane.f32.xlu0 %v1476
        %v1478 = vpop.xlane.xlu0 %1477
        %v1479 = vsel %vm1439, %v1364, -inf
        %1480 = vmax.xlane.f32.xlu0 %v1479
        %v1481 = vpop.xlane.xlu0 %1480
        %v1482 = vsel %vm1439, %v1369, -inf
        %1483 = vmax.xlane.f32.xlu0 %v1482
        %v1484 = vpop.xlane.xlu0 %1483
        %v1485 = vsel %vm1439, %v1372, -inf
        %1486 = vmax.xlane.f32.xlu0 %v1485
        %v1487 = vpop.xlane.xlu0 %1486
        %v1488 = vsel %vm1439, %v1377, -inf
        %1489 = vmax.xlane.f32.xlu0 %v1488
        %v1490 = vpop.xlane.xlu0 %1489
        %v1491 = vsel %vm1439, %v1380, -inf
        %1492 = vmax.xlane.f32.xlu0 %v1491
        %v1493 = vpop.xlane.xlu0 %1492
        %v1494 = vsel %vm1439, %v1385, -inf
        %1495 = vmax.xlane.f32.xlu0 %v1494
        %v1496 = vpop.xlane.xlu0 %1495
        %v1497 = vsel %vm1439, %v1388, -inf
        %1498 = vmax.xlane.f32.xlu0 %v1497
        %v1499 = vpop.xlane.xlu0 %1498
        %v1500 = vsel %vm1439, %v1393, -inf
        %1501 = vmax.xlane.f32.xlu0 %v1500
        %v1502 = vpop.xlane.xlu0 %1501
        %v1503 = vsel %vm1439, %v1396, -inf
        %1504 = vmax.xlane.f32.xlu0 %v1503
        %v1505 = vpop.xlane.xlu0 %1504
        %v1506 = vsel %vm1439, %v1401, -inf
        %1507 = vmax.xlane.f32.xlu0 %v1506
        %v1508 = vpop.xlane.xlu0 %1507
        %v1509 = vsel %vm1439, %v1404, -inf
        %1510 = vmax.xlane.f32.xlu0 %v1509
        %v1511 = vpop.xlane.xlu0 %1510
        %v1512 = vsel %vm1439, %v1409, -inf
        %1513 = vmax.xlane.f32.xlu0 %v1512
        %v1514 = vpop.xlane.xlu0 %1513
        %v1515 = vsel %vm1439, %v1412, -inf
        %1516 = vmax.xlane.f32.xlu0 %v1515
        %v1517 = vpop.xlane.xlu0 %1516
        %v1518 = vsel %vm1439, %v1417, -inf
        %1519 = vmax.xlane.f32.xlu0 %v1518
        %v1520 = vpop.xlane.xlu0 %1519
        %v1521 = vsel %vm1439, %v1420, -inf
        %1522 = vmax.xlane.f32.xlu0 %v1521
        %v1523 = vpop.xlane.xlu0 %1522
        %v1524 = vsel %vm1439, %v1425, -inf
        %1525 = vmax.xlane.f32.xlu0 %v1524
        %v1526 = vpop.xlane.xlu0 %1525
        %v1527 = vsel %vm1439, %v1428, -inf
        %1528 = vmax.xlane.f32.xlu0 %v1527
        %v1529 = vpop.xlane.xlu0 %1528
        %v1530 = vsel %vm1439, %v1433, -inf
        %1531 = vmax.xlane.f32.xlu0 %v1530
        %v1532 = vpop.xlane.xlu0 %1531
        %v1533 = vsel %vm1439, %v1436, -inf
        %1534 = vmax.xlane.f32.xlu0 %v1533
        %v1535 = vpop.xlane.xlu0 %1534
        %1552 = vrot.lane.b32.xlu0 %v1210, 112
        %v1553 = vpop.permute.xlu0 %1552
        %1554 = vrot.lane.b32.xlu0 %v1211, 112
        %v1555 = vpop.permute.xlu0 %1554
        %1556 = vrot.lane.b32.xlu0 %v1212, 112
        %v1557 = vpop.permute.xlu0 %1556
        %1558 = vrot.lane.b32.xlu0 %v1213, 112
        %v1559 = vpop.permute.xlu0 %1558
        %1560 = vrot.lane.b32.xlu0 %v1214, 112
        %v1561 = vpop.permute.xlu0 %1560
        %1562 = vrot.lane.b32.xlu0 %v1215, 112
        %v1563 = vpop.permute.xlu0 %1562
        %1564 = vrot.lane.b32.xlu0 %v1216, 112
        %v1565 = vpop.permute.xlu0 %1564
        %1566 = vrot.lane.b32.xlu0 %v1217, 112
        %v1567 = vpop.permute.xlu0 %1566
        %1568 = vrot.lane.b32.xlu0 %v1218, 112
        %v1569 = vpop.permute.xlu0 %1568
        %1570 = vrot.lane.b32.xlu0 %v1219, 112
        %v1571 = vpop.permute.xlu0 %1570
        %1572 = vrot.lane.b32.xlu0 %v1220, 112
        %v1573 = vpop.permute.xlu0 %1572
        %1574 = vrot.lane.b32.xlu0 %v1221, 112
        %v1575 = vpop.permute.xlu0 %1574
        %1576 = vrot.lane.b32.xlu0 %v1222, 112
        %v1577 = vpop.permute.xlu0 %1576
        %1578 = vrot.lane.b32.xlu0 %v1223, 112
        %v1579 = vpop.permute.xlu0 %1578
        %1580 = vrot.lane.b32.xlu0 %v1224, 112
        %v1581 = vpop.permute.xlu0 %1580
        %1582 = vrot.lane.b32.xlu0 %v1225, 112
        %v1583 = vpop.permute.xlu0 %1582
        %1585 = vrot.lane.b32.xlu0 %v1226, 112
        %v1586 = vpop.permute.xlu0 %1585
        %v1588 = vsel %vm692, %v1553, 0
        %v1591 = vsel %vm692, %v1555, 0
        %v1594 = vsel %vm692, %v1557, 0
        %v1597 = vsel %vm692, %v1559, 0
        %v1600 = vsel %vm692, %v1561, 0
        %v1603 = vsel %vm692, %v1563, 0
        %v1606 = vsel %vm692, %v1565, 0
        %v1609 = vsel %vm692, %v1567, 0
        %v1612 = vsel %vm692, %v1569, 0
        %v1615 = vsel %vm692, %v1571, 0
        %v1618 = vsel %vm692, %v1573, 0
        %v1621 = vsel %vm692, %v1575, 0
        %v1624 = vsel %vm692, %v1577, 0
        %v1627 = vsel %vm692, %v1579, 0
        %v1630 = vsel %vm692, %v1581, 0
        %v1633 = vsel %vm692, %v1583, 0
        %v1636 = vsel %vm692, %v1586, 0
        %1638 = vmatprep.subr.bf16.mxu0 0
        %1639 = vmatpush1.bf16.xpose.msra.mxu0 %v1636
        %1640 = vmatprep.subr.bf16.mxu0 0
        %1641 = vmatpush1.bf16.xpose.msra.mxu0 0
        %1642 = vmatprep.subr.bf16.mxu0 0
        %1643 = vmatpush1.bf16.xpose.msra.mxu0 0
        %1644 = vmatprep.subr.bf16.mxu0 0
        %1645 = vmatpush1.bf16.xpose.msra.mxu0 0
        %1646 = vmatprep.subr.bf16.mxu0 0
        %1647 = vmatpush1.bf16.xpose.msra.mxu0 0
        %1648 = vmatprep.subr.bf16.mxu0 0
        %1649 = vmatpush1.bf16.xpose.msra.mxu0 0
        %1650 = vmatprep.subr.bf16.mxu0 0
        %1651 = vmatpush1.bf16.xpose.msra.mxu0 0
        %1652 = vmatprep.subr.bf16.mxu0 0
        %1653 = vmatpush1.bf16.xpose.msra.mxu0 0
        %1654 = vmatprep.subr.bf16.mxu0 0
        %1655 = vmatpush1.bf16.xpose.msra.mxu0 0
        %1656 = vmatprep.subr.bf16.mxu0 0
        %1657 = vmatpush1.bf16.xpose.msra.mxu0 0
        %1658 = vmatprep.subr.bf16.mxu0 0
        %1659 = vmatpush1.bf16.xpose.msra.mxu0 0
        %1660 = vmatprep.subr.bf16.mxu0 0
        %1661 = vmatpush1.bf16.xpose.msra.mxu0 0
        %1662 = vmatprep.subr.bf16.mxu0 0
        %1663 = vmatpush1.bf16.xpose.msra.mxu0 0
        %1664 = vmatprep.subr.bf16.mxu0 0
        %1665 = vmatpush1.bf16.xpose.msra.mxu0 0
        %1666 = vmatprep.subr.bf16.mxu0 0
        %1667 = vmatpush1.bf16.xpose.msra.mxu0 0
        %1668 = vmatprep.subr.bf16.mxu0 0
        %1669 = vmatpush1.bf16.xpose.msra.mxu0 0
        %1670 = vmatprep.mubr.bf16.mxu0 0
        %1671 = vmatmul.mubr.bf16.gmra.mrb[0].mxu0 %v1588
        %v1672 = vpop.f32.mrb[0].mxu0
        %v1673 = vadd.f32 0.0, %v1672
        %v1674 = vpop.f32.mrb[0].mxu0
        %v1675 = vpop.f32.mrb[0].mxu0
        %v1676 = vadd.f32 0.0, %v1675
        %v1677 = vpop.f32.mrb[0].mxu0
        %1678 = vmatprep.mubr.bf16.mxu0 0
        %1679 = vmatmul.mubr.bf16.gmra.mrb[0].mxu0 %v1591
        %v1680 = vpop.f32.mrb[0].mxu0
        %v1681 = vadd.f32 0.0, %v1680
        %v1682 = vpop.f32.mrb[0].mxu0
        %v1683 = vpop.f32.mrb[0].mxu0
        %v1684 = vadd.f32 0.0, %v1683
        %v1685 = vpop.f32.mrb[0].mxu0
        %1686 = vmatprep.mubr.bf16.mxu0 0
        %1687 = vmatmul.mubr.bf16.gmra.mrb[0].mxu0 %v1594
        %v1688 = vpop.f32.mrb[0].mxu0
        %v1689 = vadd.f32 0.0, %v1688
        %v1690 = vpop.f32.mrb[0].mxu0
        %v1691 = vpop.f32.mrb[0].mxu0
        %v1692 = vadd.f32 0.0, %v1691
        %v1693 = vpop.f32.mrb[0].mxu0
        %1694 = vmatprep.mubr.bf16.mxu0 0
        %1695 = vmatmul.mubr.bf16.gmra.mrb[0].mxu0 %v1597
        %v1696 = vpop.f32.mrb[0].mxu0
        %v1697 = vadd.f32 0.0, %v1696
        %v1698 = vpop.f32.mrb[0].mxu0
        %v1699 = vpop.f32.mrb[0].mxu0
        %v1700 = vadd.f32 0.0, %v1699
        %v1701 = vpop.f32.mrb[0].mxu0
        %1702 = vmatprep.mubr.bf16.mxu0 0
        %1703 = vmatmul.mubr.bf16.gmra.mrb[0].mxu0 %v1600
        %v1704 = vpop.f32.mrb[0].mxu0
        %v1705 = vadd.f32 0.0, %v1704
        %v1706 = vpop.f32.mrb[0].mxu0
        %v1707 = vpop.f32.mrb[0].mxu0
        %v1708 = vadd.f32 0.0, %v1707
        %v1709 = vpop.f32.mrb[0].mxu0
        %1710 = vmatprep.mubr.bf16.mxu0 0
        %1711 = vmatmul.mubr.bf16.gmra.mrb[0].mxu0 %v1603
        %v1712 = vpop.f32.mrb[0].mxu0
        %v1713 = vadd.f32 0.0, %v1712
        %v1714 = vpop.f32.mrb[0].mxu0
        %v1715 = vpop.f32.mrb[0].mxu0
        %v1716 = vadd.f32 0.0, %v1715
        %v1717 = vpop.f32.mrb[0].mxu0
        %1718 = vmatprep.mubr.bf16.mxu0 0
        %1719 = vmatmul.mubr.bf16.gmra.mrb[0].mxu0 %v1606
        %v1720 = vpop.f32.mrb[0].mxu0
        %v1721 = vadd.f32 0.0, %v1720
        %v1722 = vpop.f32.mrb[0].mxu0
        %v1723 = vpop.f32.mrb[0].mxu0
        %v1724 = vadd.f32 0.0, %v1723
        %v1725 = vpop.f32.mrb[0].mxu0
        %1726 = vmatprep.mubr.bf16.mxu0 0
        %1727 = vmatmul.mubr.bf16.gmra.mrb[0].mxu0 %v1609
        %v1728 = vpop.f32.mrb[0].mxu0
        %v1729 = vadd.f32 0.0, %v1728
        %v1730 = vpop.f32.mrb[0].mxu0
        %v1731 = vpop.f32.mrb[0].mxu0
        %v1732 = vadd.f32 0.0, %v1731
        %v1733 = vpop.f32.mrb[0].mxu0
        %1734 = vmatprep.mubr.bf16.mxu0 0
        %1735 = vmatmul.mubr.bf16.gmra.mrb[0].mxu0 %v1612
        %v1736 = vpop.f32.mrb[0].mxu0
        %v1737 = vadd.f32 0.0, %v1736
        %v1738 = vpop.f32.mrb[0].mxu0
        %v1739 = vpop.f32.mrb[0].mxu0
        %v1740 = vadd.f32 0.0, %v1739
        %v1741 = vpop.f32.mrb[0].mxu0
        %1742 = vmatprep.mubr.bf16.mxu0 0
        %1743 = vmatmul.mubr.bf16.gmra.mrb[0].mxu0 %v1615
        %v1744 = vpop.f32.mrb[0].mxu0
        %v1745 = vadd.f32 0.0, %v1744
        %v1746 = vpop.f32.mrb[0].mxu0
        %v1747 = vpop.f32.mrb[0].mxu0
        %v1748 = vadd.f32 0.0, %v1747
        %v1749 = vpop.f32.mrb[0].mxu0
        %1750 = vmatprep.mubr.bf16.mxu0 0
        %1751 = vmatmul.mubr.bf16.gmra.mrb[0].mxu0 %v1618
        %v1752 = vpop.f32.mrb[0].mxu0
        %v1753 = vadd.f32 0.0, %v1752
        %v1754 = vpop.f32.mrb[0].mxu0
        %v1755 = vpop.f32.mrb[0].mxu0
        %v1756 = vadd.f32 0.0, %v1755
        %v1757 = vpop.f32.mrb[0].mxu0
        %1758 = vmatprep.mubr.bf16.mxu0 0
        %1759 = vmatmul.mubr.bf16.gmra.mrb[0].mxu0 %v1621
        %v1760 = vpop.f32.mrb[0].mxu0
        %v1761 = vadd.f32 0.0, %v1760
        %v1762 = vpop.f32.mrb[0].mxu0
        %v1763 = vpop.f32.mrb[0].mxu0
        %v1764 = vadd.f32 0.0, %v1763
        %v1765 = vpop.f32.mrb[0].mxu0
        %1766 = vmatprep.mubr.bf16.mxu0 0
        %1767 = vmatmul.mubr.bf16.gmra.mrb[0].mxu0 %v1624
        %v1768 = vpop.f32.mrb[0].mxu0
        %v1769 = vadd.f32 0.0, %v1768
        %v1770 = vpop.f32.mrb[0].mxu0
        %v1771 = vpop.f32.mrb[0].mxu0
        %v1772 = vadd.f32 0.0, %v1771
        %v1773 = vpop.f32.mrb[0].mxu0
        %1774 = vmatprep.mubr.bf16.mxu0 0
        %1775 = vmatmul.mubr.bf16.gmra.mrb[0].mxu0 %v1627
        %v1776 = vpop.f32.mrb[0].mxu0
        %v1777 = vadd.f32 0.0, %v1776
        %v1778 = vpop.f32.mrb[0].mxu0
        %v1779 = vpop.f32.mrb[0].mxu0
        %v1780 = vadd.f32 0.0, %v1779
        %v1781 = vpop.f32.mrb[0].mxu0
        %1782 = vmatprep.mubr.bf16.mxu0 0
        %1783 = vmatmul.mubr.bf16.gmra.mrb[0].mxu0 %v1630
        %v1784 = vpop.f32.mrb[0].mxu0
        %v1785 = vadd.f32 0.0, %v1784
        %v1786 = vpop.f32.mrb[0].mxu0
        %v1787 = vpop.f32.mrb[0].mxu0
        %v1788 = vadd.f32 0.0, %v1787
        %v1789 = vpop.f32.mrb[0].mxu0
        %1790 = vmatprep.mubr.bf16.mxu0 0
        %1791 = vmatmul.mubr.bf16.gmra.mrb[0].mxu0 %v1633
        %v1792 = vpop.f32.mrb[0].mxu0
        %v1793 = vadd.f32 0.0, %v1792
        %v1794 = vpop.f32.mrb[0].mxu0
        %v1795 = vpop.f32.mrb[0].mxu0
        %v1796 = vadd.f32 0.0, %v1795
        %v1797 = vpop.f32.mrb[0].mxu0
        %1798 = vdwg.mxu0
        %v1799 = vsel %vm1439, %v1673, -inf
        %1800 = vmax.xlane.f32.xlu0 %v1799
        %v1801 = vpop.xlane.xlu0 %1800
        %v1802 = vsel %vm1439, %v1676, -inf
        %1803 = vmax.xlane.f32.xlu0 %v1802
        %v1804 = vpop.xlane.xlu0 %1803
        %v1805 = vsel %vm1439, %v1681, -inf
        %1806 = vmax.xlane.f32.xlu0 %v1805
        %v1807 = vpop.xlane.xlu0 %1806
        %v1808 = vsel %vm1439, %v1684, -inf
        %1809 = vmax.xlane.f32.xlu0 %v1808
        %v1810 = vpop.xlane.xlu0 %1809
        %v1811 = vsel %vm1439, %v1689, -inf
        %1812 = vmax.xlane.f32.xlu0 %v1811
        %v1813 = vpop.xlane.xlu0 %1812
        %v1814 = vsel %vm1439, %v1692, -inf
        %1815 = vmax.xlane.f32.xlu0 %v1814
        %v1816 = vpop.xlane.xlu0 %1815
        %v1817 = vsel %vm1439, %v1697, -inf
        %1818 = vmax.xlane.f32.xlu0 %v1817
        %v1819 = vpop.xlane.xlu0 %1818
        %v1820 = vsel %vm1439, %v1700, -inf
        %1821 = vmax.xlane.f32.xlu0 %v1820
        %v1822 = vpop.xlane.xlu0 %1821
        %v1823 = vsel %vm1439, %v1705, -inf
        %1824 = vmax.xlane.f32.xlu0 %v1823
        %v1825 = vpop.xlane.xlu0 %1824
        %v1826 = vsel %vm1439, %v1708, -inf
        %1827 = vmax.xlane.f32.xlu0 %v1826
        %v1828 = vpop.xlane.xlu0 %1827
        %v1829 = vsel %vm1439, %v1713, -inf
        %1830 = vmax.xlane.f32.xlu0 %v1829
        %v1831 = vpop.xlane.xlu0 %1830
        %v1832 = vsel %vm1439, %v1716, -inf
        %1833 = vmax.xlane.f32.xlu0 %v1832
        %v1834 = vpop.xlane.xlu0 %1833
        %v1835 = vsel %vm1439, %v1721, -inf
        %1836 = vmax.xlane.f32.xlu0 %v1835
        %v1837 = vpop.xlane.xlu0 %1836
        %v1838 = vsel %vm1439, %v1724, -inf
        %1839 = vmax.xlane.f32.xlu0 %v1838
        %v1840 = vpop.xlane.xlu0 %1839
        %v1841 = vsel %vm1439, %v1729, -inf
        %1842 = vmax.xlane.f32.xlu0 %v1841
        %v1843 = vpop.xlane.xlu0 %1842
        %v1844 = vsel %vm1439, %v1732, -inf
        %1845 = vmax.xlane.f32.xlu0 %v1844
        %v1846 = vpop.xlane.xlu0 %1845
        %v1847 = vsel %vm1439, %v1737, -inf
        %1848 = vmax.xlane.f32.xlu0 %v1847
        %v1849 = vpop.xlane.xlu0 %1848
        %v1850 = vsel %vm1439, %v1740, -inf
        %1851 = vmax.xlane.f32.xlu0 %v1850
        %v1852 = vpop.xlane.xlu0 %1851
        %v1853 = vsel %vm1439, %v1745, -inf
        %1854 = vmax.xlane.f32.xlu0 %v1853
        %v1855 = vpop.xlane.xlu0 %1854
        %v1856 = vsel %vm1439, %v1748, -inf
        %1857 = vmax.xlane.f32.xlu0 %v1856
        %v1858 = vpop.xlane.xlu0 %1857
        %v1859 = vsel %vm1439, %v1753, -inf
        %1860 = vmax.xlane.f32.xlu0 %v1859
        %v1861 = vpop.xlane.xlu0 %1860
        %v1862 = vsel %vm1439, %v1756, -inf
        %1863 = vmax.xlane.f32.xlu0 %v1862
        %v1864 = vpop.xlane.xlu0 %1863
        %v1865 = vsel %vm1439, %v1761, -inf
        %1866 = vmax.xlane.f32.xlu0 %v1865
        %v1867 = vpop.xlane.xlu0 %1866
        %v1868 = vsel %vm1439, %v1764, -inf
        %1869 = vmax.xlane.f32.xlu0 %v1868
        %v1870 = vpop.xlane.xlu0 %1869
        %v1871 = vsel %vm1439, %v1769, -inf
        %1872 = vmax.xlane.f32.xlu0 %v1871
        %v1873 = vpop.xlane.xlu0 %1872
        %v1874 = vsel %vm1439, %v1772, -inf
        %1875 = vmax.xlane.f32.xlu0 %v1874
        %v1876 = vpop.xlane.xlu0 %1875
        %v1877 = vsel %vm1439, %v1777, -inf
        %1878 = vmax.xlane.f32.xlu0 %v1877
        %v1879 = vpop.xlane.xlu0 %1878
        %v1880 = vsel %vm1439, %v1780, -inf
        %1881 = vmax.xlane.f32.xlu0 %v1880
        %v1882 = vpop.xlane.xlu0 %1881
        %v1883 = vsel %vm1439, %v1785, -inf
        %1884 = vmax.xlane.f32.xlu0 %v1883
        %v1885 = vpop.xlane.xlu0 %1884
        %v1886 = vsel %vm1439, %v1788, -inf
        %1887 = vmax.xlane.f32.xlu0 %v1886
        %v1888 = vpop.xlane.xlu0 %1887
        %v1889 = vsel %vm1439, %v1793, -inf
        %1890 = vmax.xlane.f32.xlu0 %v1889
        %v1891 = vpop.xlane.xlu0 %1890
        %v1892 = vsel %vm1439, %v1796, -inf
        %1893 = vmax.xlane.f32.xlu0 %v1892
        %v1894 = vpop.xlane.xlu0 %1893
        %vm1895 = vcmask 7168
        %v1896 = vsel %vm1895, %v1442, %v1801
        %v1897 = vsel %vm1895, %v1445, %v1804
        %v1898 = vsel %vm1895, %v1448, %v1807
        %v1899 = vsel %vm1895, %v1451, %v1810
        %v1900 = vsel %vm1895, %v1454, %v1813
        %v1901 = vsel %vm1895, %v1457, %v1816
        %v1902 = vsel %vm1895, %v1460, %v1819
        %v1903 = vsel %vm1895, %v1463, %v1822
        %v1904 = vsel %vm1895, %v1466, %v1825
        %v1905 = vsel %vm1895, %v1469, %v1828
        %v1906 = vsel %vm1895, %v1472, %v1831
        %v1907 = vsel %vm1895, %v1475, %v1834
        %v1908 = vsel %vm1895, %v1478, %v1837
        %v1909 = vsel %vm1895, %v1481, %v1840
        %v1910 = vsel %vm1895, %v1484, %v1843
        %v1911 = vsel %vm1895, %v1487, %v1846
        %v1912 = vsel %vm1895, %v1490, %v1849
        %v1913 = vsel %vm1895, %v1493, %v1852
        %v1914 = vsel %vm1895, %v1496, %v1855
        %v1915 = vsel %vm1895, %v1499, %v1858
        %v1916 = vsel %vm1895, %v1502, %v1861
        %v1917 = vsel %vm1895, %v1505, %v1864
        %v1918 = vsel %vm1895, %v1508, %v1867
        %v1919 = vsel %vm1895, %v1511, %v1870
        %v1920 = vsel %vm1895, %v1514, %v1873
        %v1921 = vsel %vm1895, %v1517, %v1876
        %v1922 = vsel %vm1895, %v1520, %v1879
        %v1923 = vsel %vm1895, %v1523, %v1882
        %v1924 = vsel %vm1895, %v1526, %v1885
        %v1925 = vsel %vm1895, %v1529, %v1888
        %v1926 = vsel %vm1895, %v1532, %v1891
        %v1927 = vsel %vm1895, %v1535, %v1894
        %v1928 = vmul.f32 %v1896, 0.25
        %v1929 = vmul.f32 %v1897, 0.25
        %v1930 = vmul.f32 %v1898, 0.25
        %v1931 = vmul.f32 %v1899, 0.25
        %v1932 = vmul.f32 %v1900, 0.25
        %v1933 = vmul.f32 %v1901, 0.25
        %v1934 = vmul.f32 %v1902, 0.25
        %v1935 = vmul.f32 %v1903, 0.25
        %v1936 = vmul.f32 %v1904, 0.25
        %v1937 = vmul.f32 %v1905, 0.25
        %v1938 = vmul.f32 %v1906, 0.25
        %v1939 = vmul.f32 %v1907, 0.25
        %v1940 = vmul.f32 %v1908, 0.25
        %v1941 = vmul.f32 %v1909, 0.25
        %v1942 = vmul.f32 %v1910, 0.25
        %v1943 = vmul.f32 %v1911, 0.25
        %v1944 = vmul.f32 %v1912, 0.25
        %v1945 = vmul.f32 %v1913, 0.25
        %v1946 = vmul.f32 %v1914, 0.25
        %v1947 = vmul.f32 %v1915, 0.25
        %v1948 = vmul.f32 %v1916, 0.25
        %v1949 = vmul.f32 %v1917, 0.25
        %v1950 = vmul.f32 %v1918, 0.25
        %v1951 = vmul.f32 %v1919, 0.25
        %v1952 = vmul.f32 %v1920, 0.25
        %v1953 = vmul.f32 %v1921, 0.25
        %v1954 = vmul.f32 %v1922, 0.25
        %v1955 = vmul.f32 %v1923, 0.25
        %v1956 = vmul.f32 %v1924, 0.25
        %v1957 = vmul.f32 %v1925, 0.25
        %v1958 = vmul.f32 %v1926, 0.25
        %v1959 = vmul.f32 %v1927, 0.25
        %v1960 = vld [vmem:[%s9] sm:$0x1]
        %v1962 = vlaneseq
        %v1963 = vshrl.u32 %v1962, 7
        %v1964 = vsub.s32 0, %v1963
        %v1965 = vrot.slane %v1960, %v1964
        %v1967 = vadd.f32 %v1928, %v1965
        %v1968 = vadd.f32 %v1929, %v1965
        %v1969 = vadd.f32 %v1930, %v1965
        %v1970 = vadd.f32 %v1931, %v1965
        %v1971 = vadd.f32 %v1932, %v1965
        %v1972 = vadd.f32 %v1933, %v1965
        %v1973 = vadd.f32 %v1934, %v1965
        %v1974 = vadd.f32 %v1935, %v1965
        %v1975 = vadd.f32 %v1936, %v1965
        %v1976 = vadd.f32 %v1937, %v1965
        %v1977 = vadd.f32 %v1938, %v1965
        %v1978 = vadd.f32 %v1939, %v1965
        %v1979 = vadd.f32 %v1940, %v1965
        %v1980 = vadd.f32 %v1941, %v1965
        %v1981 = vadd.f32 %v1942, %v1965
        %v1982 = vadd.f32 %v1943, %v1965
        %v1983 = vadd.f32 %v1944, %v1965
        %v1984 = vadd.f32 %v1945, %v1965
        %v1985 = vadd.f32 %v1946, %v1965
        %v1986 = vadd.f32 %v1947, %v1965
        %v1987 = vadd.f32 %v1948, %v1965
        %v1988 = vadd.f32 %v1949, %v1965
        %v1989 = vadd.f32 %v1950, %v1965
        %v1990 = vadd.f32 %v1951, %v1965
        %v1991 = vadd.f32 %v1952, %v1965
        %v1992 = vadd.f32 %v1953, %v1965
        %v1993 = vadd.f32 %v1954, %v1965
        %v1994 = vadd.f32 %v1955, %v1965
        %v1995 = vadd.f32 %v1956, %v1965
        %v1996 = vadd.f32 %v1957, %v1965
        %v1997 = vadd.f32 %v1958, %v1965
        %v1998 = vadd.f32 %v1959, %v1965
        %v1999 = vsub.f32 0.0, %v1967
        %v2000 = vsub.f32 0.0, %v1968
        %v2001 = vsub.f32 0.0, %v1969
        %v2002 = vsub.f32 0.0, %v1970
        %v2003 = vsub.f32 0.0, %v1971
        %v2004 = vsub.f32 0.0, %v1972
        %v2005 = vsub.f32 0.0, %v1973
        %v2006 = vsub.f32 0.0, %v1974
        %v2007 = vsub.f32 0.0, %v1975
        %v2008 = vsub.f32 0.0, %v1976
        %v2009 = vsub.f32 0.0, %v1977
        %v2010 = vsub.f32 0.0, %v1978
        %v2011 = vsub.f32 0.0, %v1979
        %v2012 = vsub.f32 0.0, %v1980
        %v2013 = vsub.f32 0.0, %v1981
        %v2014 = vsub.f32 0.0, %v1982
        %v2015 = vsub.f32 0.0, %v1983
        %v2016 = vsub.f32 0.0, %v1984
        %v2017 = vsub.f32 0.0, %v1985
        %v2018 = vsub.f32 0.0, %v1986
        %v2019 = vsub.f32 0.0, %v1987
        %v2020 = vsub.f32 0.0, %v1988
        %v2021 = vsub.f32 0.0, %v1989
        %v2022 = vsub.f32 0.0, %v1990
        %v2023 = vsub.f32 0.0, %v1991
        %v2024 = vsub.f32 0.0, %v1992
        %v2025 = vsub.f32 0.0, %v1993
        %v2026 = vsub.f32 0.0, %v1994
        %v2027 = vsub.f32 0.0, %v1995
        %v2028 = vsub.f32 0.0, %v1996
        %v2029 = vsub.f32 0.0, %v1997
        %v2030 = vsub.f32 0.0, %v1998
        %v2031 = vmul.f32 %v1999, 1.442695
        %v2032 = vpow.pop %v2031
        %v2033 = vmul.f32 %v2000, 1.442695
        %v2034 = vpow.pop %v2033
        %v2035 = vmul.f32 %v2001, 1.442695
        %v2036 = vpow.pop %v2035
        %v2037 = vmul.f32 %v2002, 1.442695
        %v2038 = vpow.pop %v2037
        %v2039 = vmul.f32 %v2003, 1.442695
        %v2040 = vpow.pop %v2039
        %v2041 = vmul.f32 %v2004, 1.442695
        %v2042 = vpow.pop %v2041
        %v2043 = vmul.f32 %v2005, 1.442695
        %v2044 = vpow.pop %v2043
        %v2045 = vmul.f32 %v2006, 1.442695
        %v2046 = vpow.pop %v2045
        %v2047 = vmul.f32 %v2007, 1.442695
        %v2048 = vpow.pop %v2047
        %v2049 = vmul.f32 %v2008, 1.442695
        %v2050 = vpow.pop %v2049
        %v2051 = vmul.f32 %v2009, 1.442695
        %v2052 = vpow.pop %v2051
        %v2053 = vmul.f32 %v2010, 1.442695
        %v2054 = vpow.pop %v2053
        %v2055 = vmul.f32 %v2011, 1.442695
        %v2056 = vpow.pop %v2055
        %v2057 = vmul.f32 %v2012, 1.442695
        %v2058 = vpow.pop %v2057
        %v2059 = vmul.f32 %v2013, 1.442695
        %v2060 = vpow.pop %v2059
        %v2061 = vmul.f32 %v2014, 1.442695
        %v2062 = vpow.pop %v2061
        %v2063 = vmul.f32 %v2015, 1.442695
        %v2064 = vpow.pop %v2063
        %v2065 = vmul.f32 %v2016, 1.442695
        %v2066 = vpow.pop %v2065
        %v2067 = vmul.f32 %v2017, 1.442695
        %v2068 = vpow.pop %v2067
        %v2069 = vmul.f32 %v2018, 1.442695
        %v2070 = vpow.pop %v2069
        %v2071 = vmul.f32 %v2019, 1.442695
        %v2072 = vpow.pop %v2071
        %v2073 = vmul.f32 %v2020, 1.442695
        %v2074 = vpow.pop %v2073
        %v2075 = vmul.f32 %v2021, 1.442695
        %v2076 = vpow.pop %v2075
        %v2077 = vmul.f32 %v2022, 1.442695
        %v2078 = vpow.pop %v2077
        %v2079 = vmul.f32 %v2023, 1.442695
        %v2080 = vpow.pop %v2079
        %v2081 = vmul.f32 %v2024, 1.442695
        %v2082 = vpow.pop %v2081
        %v2083 = vmul.f32 %v2025, 1.442695
        %v2084 = vpow.pop %v2083
        %v2085 = vmul.f32 %v2026, 1.442695
        %v2086 = vpow.pop %v2085
        %v2087 = vmul.f32 %v2027, 1.442695
        %v2088 = vpow.pop %v2087
        %v2089 = vmul.f32 %v2028, 1.442695
        %v2090 = vpow.pop %v2089
        %v2091 = vmul.f32 %v2029, 1.442695
        %v2092 = vpow.pop %v2091
        %v2093 = vmul.f32 %v2030, 1.442695
        %v2094 = vpow.pop %v2093
        %v2095 = vadd.f32 %v2032, 1.0
        %v2096 = vadd.f32 %v2034, 1.0
        %v2097 = vadd.f32 %v2036, 1.0
        %v2098 = vadd.f32 %v2038, 1.0
        %v2099 = vadd.f32 %v2040, 1.0
        %v2100 = vadd.f32 %v2042, 1.0
        %v2101 = vadd.f32 %v2044, 1.0
        %v2102 = vadd.f32 %v2046, 1.0
        %v2103 = vadd.f32 %v2048, 1.0
        %v2104 = vadd.f32 %v2050, 1.0
        %v2105 = vadd.f32 %v2052, 1.0
        %v2106 = vadd.f32 %v2054, 1.0
        %v2107 = vadd.f32 %v2056, 1.0
        %v2108 = vadd.f32 %v2058, 1.0
        %v2109 = vadd.f32 %v2060, 1.0
        %v2110 = vadd.f32 %v2062, 1.0
        %v2111 = vadd.f32 %v2064, 1.0
        %v2112 = vadd.f32 %v2066, 1.0
        %v2113 = vadd.f32 %v2068, 1.0
        %v2114 = vadd.f32 %v2070, 1.0
        %v2115 = vadd.f32 %v2072, 1.0
        %v2116 = vadd.f32 %v2074, 1.0
        %v2117 = vadd.f32 %v2076, 1.0
        %v2118 = vadd.f32 %v2078, 1.0
        %v2119 = vadd.f32 %v2080, 1.0
        %v2120 = vadd.f32 %v2082, 1.0
        %v2121 = vadd.f32 %v2084, 1.0
        %v2122 = vadd.f32 %v2086, 1.0
        %v2123 = vadd.f32 %v2088, 1.0
        %v2124 = vadd.f32 %v2090, 1.0
        %v2125 = vadd.f32 %v2092, 1.0
        %v2126 = vadd.f32 %v2094, 1.0
        %v2127 = vrcp.pop %v2095
        %v2128 = vrcp.pop %v2096
        %v2129 = vrcp.pop %v2097
        %v2130 = vrcp.pop %v2098
        %v2131 = vrcp.pop %v2099
        %v2132 = vrcp.pop %v2100
        %v2133 = vrcp.pop %v2101
        %v2134 = vrcp.pop %v2102
        %v2135 = vrcp.pop %v2103
        %v2136 = vrcp.pop %v2104
        %v2137 = vrcp.pop %v2105
        %v2138 = vrcp.pop %v2106
        %v2139 = vrcp.pop %v2107
        %v2140 = vrcp.pop %v2108
        %v2141 = vrcp.pop %v2109
        %v2142 = vrcp.pop %v2110
        %v2143 = vrcp.pop %v2111
        %v2144 = vrcp.pop %v2112
        %v2145 = vrcp.pop %v2113
        %v2146 = vrcp.pop %v2114
        %v2147 = vrcp.pop %v2115
        %v2148 = vrcp.pop %v2116
        %v2149 = vrcp.pop %v2117
        %v2150 = vrcp.pop %v2118
        %v2151 = vrcp.pop %v2119
        %v2152 = vrcp.pop %v2120
        %v2153 = vrcp.pop %v2121
        %v2154 = vrcp.pop %v2122
        %v2155 = vrcp.pop %v2123
        %v2156 = vrcp.pop %v2124
        %v2157 = vrcp.pop %v2125
        %v2158 = vrcp.pop %v2126
        %v2159 = vld [vmem:[%s10] sm:$0x1]
        %v2161 = vlaneseq
        %v2162 = vshrl.u32 %v2161, 7
        %v2163 = vsub.s32 0, %v2162
        %v2164 = vrot.slane %v2159, %v2163
        %v2166 = vmul.f32 %v2127, %v2164
        %v2167 = vmul.f32 %v2128, %v2164
        %v2168 = vmul.f32 %v2129, %v2164
        %v2169 = vmul.f32 %v2130, %v2164
        %v2170 = vmul.f32 %v2131, %v2164
        %v2171 = vmul.f32 %v2132, %v2164
        %v2172 = vmul.f32 %v2133, %v2164
        %v2173 = vmul.f32 %v2134, %v2164
        %v2174 = vmul.f32 %v2135, %v2164
        %v2175 = vmul.f32 %v2136, %v2164
        %v2176 = vmul.f32 %v2137, %v2164
        %v2177 = vmul.f32 %v2138, %v2164
        %v2178 = vmul.f32 %v2139, %v2164
        %v2179 = vmul.f32 %v2140, %v2164
        %v2180 = vmul.f32 %v2141, %v2164
        %v2181 = vmul.f32 %v2142, %v2164
        %v2182 = vmul.f32 %v2143, %v2164
        %v2183 = vmul.f32 %v2144, %v2164
        %v2184 = vmul.f32 %v2145, %v2164
        %v2185 = vmul.f32 %v2146, %v2164
        %v2186 = vmul.f32 %v2147, %v2164
        %v2187 = vmul.f32 %v2148, %v2164
        %v2188 = vmul.f32 %v2149, %v2164
        %v2189 = vmul.f32 %v2150, %v2164
        %v2190 = vmul.f32 %v2151, %v2164
        %v2191 = vmul.f32 %v2152, %v2164
        %v2192 = vmul.f32 %v2153, %v2164
        %v2193 = vmul.f32 %v2154, %v2164
        %v2194 = vmul.f32 %v2155, %v2164
        %v2195 = vmul.f32 %v2156, %v2164
        %v2196 = vmul.f32 %v2157, %v2164
        %v2197 = vmul.f32 %v2158, %v2164
        %v2198 = vld [vmem:[%s8] sm:$0x3]
        %vm2199 = vcmask 15360
        %v2201 = vsel %vm2199, %v2166, 0
        %v2204 = vsel %vm2199, %v2167, 0
        %v2207 = vsel %vm2199, %v2168, 0
        %v2210 = vsel %vm2199, %v2169, 0
        %v2213 = vsel %vm2199, %v2170, 0
        %v2216 = vsel %vm2199, %v2171, 0
        %v2219 = vsel %vm2199, %v2172, 0
        %v2222 = vsel %vm2199, %v2173, 0
        %v2225 = vsel %vm2199, %v2174, 0
        %v2228 = vsel %vm2199, %v2175, 0
        %v2231 = vsel %vm2199, %v2176, 0
        %v2234 = vsel %vm2199, %v2177, 0
        %v2237 = vsel %vm2199, %v2178, 0
        %v2240 = vsel %vm2199, %v2179, 0
        %v2243 = vsel %vm2199, %v2180, 0
        %v2246 = vsel %vm2199, %v2181, 0
        %v2249 = vsel %vm2199, %v2182, 0
        %v2252 = vsel %vm2199, %v2183, 0
        %v2255 = vsel %vm2199, %v2184, 0
        %v2258 = vsel %vm2199, %v2185, 0
        %v2261 = vsel %vm2199, %v2186, 0
        %v2264 = vsel %vm2199, %v2187, 0
        %v2267 = vsel %vm2199, %v2188, 0
        %v2270 = vsel %vm2199, %v2189, 0
        %v2273 = vsel %vm2199, %v2190, 0
        %v2276 = vsel %vm2199, %v2191, 0
        %v2279 = vsel %vm2199, %v2192, 0
        %v2282 = vsel %vm2199, %v2193, 0
        %v2285 = vsel %vm2199, %v2194, 0
        %v2288 = vsel %vm2199, %v2195, 0
        %v2291 = vsel %vm2199, %v2196, 0
        %v2294 = vsel %vm2199, %v2197, 0
        %vm2296 = vcmask 1041408
        %v2298 = vsel %vm2296, %v2198, 0
        %2300 = vmatprep.subr.mxu0 0.0
        %2301 = vmatpush1.msra.mxu0 %v2298
        %2302 = vmatprep.subr.mxu0 0.0
        %2303 = vmatpush1.msra.mxu0 0.0
        %2304 = vmatprep.subr.mxu0 0.0
        %2305 = vmatpush1.msra.mxu0 0.0
        %2306 = vmatprep.subr.mxu0 0.0
        %2307 = vmatpush1.msra.mxu0 0.0
        %2308 = vmatprep.subr.mxu0 0.0
        %2309 = vmatpush1.msra.mxu0 0.0
        %2310 = vmatprep.subr.mxu0 0.0
        %2311 = vmatpush1.msra.mxu0 0.0
        %2312 = vmatprep.subr.mxu0 0.0
        %2313 = vmatpush1.msra.mxu0 0.0
        %2314 = vmatprep.subr.mxu0 0.0
        %2315 = vmatpush1.msra.mxu0 0.0
        %2316 = vmatprep.subr.mxu0 0.0
        %2317 = vmatpush1.msra.mxu0 0.0
        %2318 = vmatprep.subr.mxu0 0.0
        %2319 = vmatpush1.msra.mxu0 0.0
        %2320 = vmatprep.subr.mxu0 0.0
        %2321 = vmatpush1.msra.mxu0 0.0
        %2322 = vmatprep.subr.mxu0 0.0
        %2323 = vmatpush1.msra.mxu0 0.0
        %2324 = vmatprep.subr.mxu0 0.0
        %2325 = vmatpush1.msra.mxu0 0.0
        %2326 = vmatprep.subr.mxu0 0.0
        %2327 = vmatpush1.msra.mxu0 0.0
        %2328 = vmatprep.subr.mxu0 0.0
        %2329 = vmatpush1.msra.mxu0 0.0
        %2330 = vmatprep.subr.mxu0 0.0
        %2331 = vmatpush1.msra.mxu0 0.0
        %2332 = vmatprep.subr.mxu0 0.0
        %2333 = vmatpush1.msra.mxu0 0.0
        %2334 = vmatprep.subr.mxu0 0.0
        %2335 = vmatpush1.msra.mxu0 0.0
        %2336 = vmatprep.subr.mxu0 0.0
        %2337 = vmatpush1.msra.mxu0 0.0
        %2338 = vmatprep.subr.mxu0 0.0
        %2339 = vmatpush1.msra.mxu0 0.0
        %2340 = vmatprep.subr.mxu0 0.0
        %2341 = vmatpush1.msra.mxu0 0.0
        %2342 = vmatprep.subr.mxu0 0.0
        %2343 = vmatpush1.msra.mxu0 0.0
        %2344 = vmatprep.subr.mxu0 0.0
        %2345 = vmatpush1.msra.mxu0 0.0
        %2346 = vmatprep.subr.mxu0 0.0
        %2347 = vmatpush1.msra.mxu0 0.0
        %2348 = vmatprep.subr.mxu0 0.0
        %2349 = vmatpush1.msra.mxu0 0.0
        %2350 = vmatprep.subr.mxu0 0.0
        %2351 = vmatpush1.msra.mxu0 0.0
        %2352 = vmatprep.subr.mxu0 0.0
        %2353 = vmatpush1.msra.mxu0 0.0
        %2354 = vmatprep.subr.mxu0 0.0
        %2355 = vmatpush1.msra.mxu0 0.0
        %2356 = vmatprep.subr.mxu0 0.0
        %2357 = vmatpush1.msra.mxu0 0.0
        %2358 = vmatprep.subr.mxu0 0.0
        %2359 = vmatpush1.msra.mxu0 0.0
        %2360 = vmatprep.subr.mxu0 0.0
        %2361 = vmatpush1.msra.mxu0 0.0
        %2362 = vmatprep.subr.mxu0 0.0
        %2363 = vmatpush1.msra.mxu0 0.0
        %2364 = vmatprep.mubr.f32.mxu0 0.0
        %2365 = vmatmul.mubr.f32.gmra.mrb[0].mxu0 %v2201
        %v2366 = vpop.f32.mrb[0].mxu0
        %v2367 = vadd.f32 0.0, %v2366
        %v2368 = vpop.f32.mrb[0].mxu0
        %2369 = vmatprep.mubr.f32.mxu0 0.0
        %2370 = vmatmul.mubr.f32.gmra.mrb[0].mxu0 %v2204
        %v2371 = vpop.f32.mrb[0].mxu0
        %v2372 = vadd.f32 0.0, %v2371
        %v2373 = vpop.f32.mrb[0].mxu0
        %2374 = vmatprep.mubr.f32.mxu0 0.0
        %2375 = vmatmul.mubr.f32.gmra.mrb[0].mxu0 %v2207
        %v2376 = vpop.f32.mrb[0].mxu0
        %v2377 = vadd.f32 0.0, %v2376
        %v2378 = vpop.f32.mrb[0].mxu0
        %2379 = vmatprep.mubr.f32.mxu0 0.0
        %2380 = vmatmul.mubr.f32.gmra.mrb[0].mxu0 %v2210
        %v2381 = vpop.f32.mrb[0].mxu0
        %v2382 = vadd.f32 0.0, %v2381
        %v2383 = vpop.f32.mrb[0].mxu0
        %2384 = vmatprep.mubr.f32.mxu0 0.0
        %2385 = vmatmul.mubr.f32.gmra.mrb[0].mxu0 %v2213
        %v2386 = vpop.f32.mrb[0].mxu0
        %v2387 = vadd.f32 0.0, %v2386
        %v2388 = vpop.f32.mrb[0].mxu0
        %2389 = vmatprep.mubr.f32.mxu0 0.0
        %2390 = vmatmul.mubr.f32.gmra.mrb[0].mxu0 %v2216
        %v2391 = vpop.f32.mrb[0].mxu0
        %v2392 = vadd.f32 0.0, %v2391
        %v2393 = vpop.f32.mrb[0].mxu0
        %2394 = vmatprep.mubr.f32.mxu0 0.0
        %2395 = vmatmul.mubr.f32.gmra.mrb[0].mxu0 %v2219
        %v2396 = vpop.f32.mrb[0].mxu0
        %v2397 = vadd.f32 0.0, %v2396
        %v2398 = vpop.f32.mrb[0].mxu0
        %2399 = vmatprep.mubr.f32.mxu0 0.0
        %2400 = vmatmul.mubr.f32.gmra.mrb[0].mxu0 %v2222
        %v2401 = vpop.f32.mrb[0].mxu0
        %v2402 = vadd.f32 0.0, %v2401
        %v2403 = vpop.f32.mrb[0].mxu0
        %2404 = vmatprep.mubr.f32.mxu0 0.0
        %2405 = vmatmul.mubr.f32.gmra.mrb[0].mxu0 %v2225
        %v2406 = vpop.f32.mrb[0].mxu0
        %v2407 = vadd.f32 0.0, %v2406
        %v2408 = vpop.f32.mrb[0].mxu0
        %2409 = vmatprep.mubr.f32.mxu0 0.0
        %2410 = vmatmul.mubr.f32.gmra.mrb[0].mxu0 %v2228
        %v2411 = vpop.f32.mrb[0].mxu0
        %v2412 = vadd.f32 0.0, %v2411
        %v2413 = vpop.f32.mrb[0].mxu0
        %2414 = vmatprep.mubr.f32.mxu0 0.0
        %2415 = vmatmul.mubr.f32.gmra.mrb[0].mxu0 %v2231
        %v2416 = vpop.f32.mrb[0].mxu0
        %v2417 = vadd.f32 0.0, %v2416
        %v2418 = vpop.f32.mrb[0].mxu0
        %2419 = vmatprep.mubr.f32.mxu0 0.0
        %2420 = vmatmul.mubr.f32.gmra.mrb[0].mxu0 %v2234
        %v2421 = vpop.f32.mrb[0].mxu0
        %v2422 = vadd.f32 0.0, %v2421
        %v2423 = vpop.f32.mrb[0].mxu0
        %2424 = vmatprep.mubr.f32.mxu0 0.0
        %2425 = vmatmul.mubr.f32.gmra.mrb[0].mxu0 %v2237
        %v2426 = vpop.f32.mrb[0].mxu0
        %v2427 = vadd.f32 0.0, %v2426
        %v2428 = vpop.f32.mrb[0].mxu0
        %2429 = vmatprep.mubr.f32.mxu0 0.0
        %2430 = vmatmul.mubr.f32.gmra.mrb[0].mxu0 %v2240
        %v2431 = vpop.f32.mrb[0].mxu0
        %v2432 = vadd.f32 0.0, %v2431
        %v2433 = vpop.f32.mrb[0].mxu0
        %2434 = vmatprep.mubr.f32.mxu0 0.0
        %2435 = vmatmul.mubr.f32.gmra.mrb[0].mxu0 %v2243
        %v2436 = vpop.f32.mrb[0].mxu0
        %v2437 = vadd.f32 0.0, %v2436
        %v2438 = vpop.f32.mrb[0].mxu0
        %2439 = vmatprep.mubr.f32.mxu0 0.0
        %2440 = vmatmul.mubr.f32.gmra.mrb[0].mxu0 %v2246
        %v2441 = vpop.f32.mrb[0].mxu0
        %v2442 = vadd.f32 0.0, %v2441
        %v2443 = vpop.f32.mrb[0].mxu0
        %2444 = vmatprep.mubr.f32.mxu0 0.0
        %2445 = vmatmul.mubr.f32.gmra.mrb[0].mxu0 %v2249
        %v2446 = vpop.f32.mrb[0].mxu0
        %v2447 = vadd.f32 0.0, %v2446
        %v2448 = vpop.f32.mrb[0].mxu0
        %2449 = vmatprep.mubr.f32.mxu0 0.0
        %2450 = vmatmul.mubr.f32.gmra.mrb[0].mxu0 %v2252
        %v2451 = vpop.f32.mrb[0].mxu0
        %v2452 = vadd.f32 0.0, %v2451
        %v2453 = vpop.f32.mrb[0].mxu0
        %2454 = vmatprep.mubr.f32.mxu0 0.0
        %2455 = vmatmul.mubr.f32.gmra.mrb[0].mxu0 %v2255
        %v2456 = vpop.f32.mrb[0].mxu0
        %v2457 = vadd.f32 0.0, %v2456
        %v2458 = vpop.f32.mrb[0].mxu0
        %2459 = vmatprep.mubr.f32.mxu0 0.0
        %2460 = vmatmul.mubr.f32.gmra.mrb[0].mxu0 %v2258
        %v2461 = vpop.f32.mrb[0].mxu0
        %v2462 = vadd.f32 0.0, %v2461
        %v2463 = vpop.f32.mrb[0].mxu0
        %2464 = vmatprep.mubr.f32.mxu0 0.0
        %2465 = vmatmul.mubr.f32.gmra.mrb[0].mxu0 %v2261
        %v2466 = vpop.f32.mrb[0].mxu0
        %v2467 = vadd.f32 0.0, %v2466
        %v2468 = vpop.f32.mrb[0].mxu0
        %2469 = vmatprep.mubr.f32.mxu0 0.0
        %2470 = vmatmul.mubr.f32.gmra.mrb[0].mxu0 %v2264
        %v2471 = vpop.f32.mrb[0].mxu0
        %v2472 = vadd.f32 0.0, %v2471
        %v2473 = vpop.f32.mrb[0].mxu0
        %2474 = vmatprep.mubr.f32.mxu0 0.0
        %2475 = vmatmul.mubr.f32.gmra.mrb[0].mxu0 %v2267
        %v2476 = vpop.f32.mrb[0].mxu0
        %v2477 = vadd.f32 0.0, %v2476
        %v2478 = vpop.f32.mrb[0].mxu0
        %2479 = vmatprep.mubr.f32.mxu0 0.0
        %2480 = vmatmul.mubr.f32.gmra.mrb[0].mxu0 %v2270
        %v2481 = vpop.f32.mrb[0].mxu0
        %v2482 = vadd.f32 0.0, %v2481
        %v2483 = vpop.f32.mrb[0].mxu0
        %2484 = vmatprep.mubr.f32.mxu0 0.0
        %2485 = vmatmul.mubr.f32.gmra.mrb[0].mxu0 %v2273
        %v2486 = vpop.f32.mrb[0].mxu0
        %v2487 = vadd.f32 0.0, %v2486
        %v2488 = vpop.f32.mrb[0].mxu0
        %2489 = vmatprep.mubr.f32.mxu0 0.0
        %2490 = vmatmul.mubr.f32.gmra.mrb[0].mxu0 %v2276
        %v2491 = vpop.f32.mrb[0].mxu0
        %v2492 = vadd.f32 0.0, %v2491
        %v2493 = vpop.f32.mrb[0].mxu0
        %2494 = vmatprep.mubr.f32.mxu0 0.0
        %2495 = vmatmul.mubr.f32.gmra.mrb[0].mxu0 %v2279
        %v2496 = vpop.f32.mrb[0].mxu0
        %v2497 = vadd.f32 0.0, %v2496
        %v2498 = vpop.f32.mrb[0].mxu0
        %2499 = vmatprep.mubr.f32.mxu0 0.0
        %2500 = vmatmul.mubr.f32.gmra.mrb[0].mxu0 %v2282
        %v2501 = vpop.f32.mrb[0].mxu0
        %v2502 = vadd.f32 0.0, %v2501
        %v2503 = vpop.f32.mrb[0].mxu0
        %2504 = vmatprep.mubr.f32.mxu0 0.0
        %2505 = vmatmul.mubr.f32.gmra.mrb[0].mxu0 %v2285
        %v2506 = vpop.f32.mrb[0].mxu0
        %v2507 = vadd.f32 0.0, %v2506
        %v2508 = vpop.f32.mrb[0].mxu0
        %2509 = vmatprep.mubr.f32.mxu0 0.0
        %2510 = vmatmul.mubr.f32.gmra.mrb[0].mxu0 %v2288
        %v2511 = vpop.f32.mrb[0].mxu0
        %v2512 = vadd.f32 0.0, %v2511
        %v2513 = vpop.f32.mrb[0].mxu0
        %2514 = vmatprep.mubr.f32.mxu0 0.0
        %2515 = vmatmul.mubr.f32.gmra.mrb[0].mxu0 %v2291
        %v2516 = vpop.f32.mrb[0].mxu0
        %v2517 = vadd.f32 0.0, %v2516
        %v2518 = vpop.f32.mrb[0].mxu0
        %2519 = vmatprep.mubr.f32.mxu0 0.0
        %2520 = vmatmul.mubr.f32.gmra.mrb[0].mxu0 %v2294
        %v2521 = vpop.f32.mrb[0].mxu0
        %v2522 = vadd.f32 0.0, %v2521
        %v2523 = vpop.f32.mrb[0].mxu0
        %2524 = vdwg.mxu0
        %v2525 = vmul.f32 %v776, %v2367
        %v2526 = vmul.f32 %v779, %v2372
        %v2527 = vmul.f32 %v784, %v2377
        %v2528 = vmul.f32 %v787, %v2382
        %v2529 = vmul.f32 %v792, %v2387
        %v2530 = vmul.f32 %v795, %v2392
        %v2531 = vmul.f32 %v800, %v2397
        %v2532 = vmul.f32 %v803, %v2402
        %v2533 = vmul.f32 %v808, %v2407
        %v2534 = vmul.f32 %v811, %v2412
        %v2535 = vmul.f32 %v816, %v2417
        %v2536 = vmul.f32 %v819, %v2422
        %v2537 = vmul.f32 %v824, %v2427
        %v2538 = vmul.f32 %v827, %v2432
        %v2539 = vmul.f32 %v832, %v2437
        %v2540 = vmul.f32 %v835, %v2442
        %v2541 = vmul.f32 %v840, %v2447
        %v2542 = vmul.f32 %v843, %v2452
        %v2543 = vmul.f32 %v848, %v2457
        %v2544 = vmul.f32 %v851, %v2462
        %v2545 = vmul.f32 %v856, %v2467
        %v2546 = vmul.f32 %v859, %v2472
        %v2547 = vmul.f32 %v864, %v2477
        %v2548 = vmul.f32 %v867, %v2482
        %v2549 = vmul.f32 %v872, %v2487
        %v2550 = vmul.f32 %v875, %v2492
        %v2551 = vmul.f32 %v880, %v2497
        %v2552 = vmul.f32 %v883, %v2502
        %v2553 = vmul.f32 %v888, %v2507
        %v2554 = vmul.f32 %v891, %v2512
        %v2555 = vmul.f32 %v896, %v2517
        %v2556 = vmul.f32 %v899, %v2522
        %2557 = vst [vmem:[%s419] sm:$0xff] %v2525
        %2558 = vst [vmem:[%s419 + $0x8] sm:$0xff] %v2526
        %2559 = vst [vmem:[%s419 + $0x10] sm:$0xff] %v2527
        %2560 = vst [vmem:[%s419 + $0x18] sm:$0xff] %v2528
        %2561 = vst [vmem:[%s419 + $0x20] sm:$0xff] %v2529
        %2562 = vst [vmem:[%s419 + $0x28] sm:$0xff] %v2530
        %2563 = vst [vmem:[%s419 + $0x30] sm:$0xff] %v2531
        %2564 = vst [vmem:[%s419 + $0x38] sm:$0xff] %v2532
        %2565 = vst [vmem:[%s419 + $0x40] sm:$0xff] %v2533
        %2566 = vst [vmem:[%s419 + $0x48] sm:$0xff] %v2534
        %2567 = vst [vmem:[%s419 + $0x50] sm:$0xff] %v2535
        %2568 = vst [vmem:[%s419 + $0x58] sm:$0xff] %v2536
        %2569 = vst [vmem:[%s419 + $0x60] sm:$0xff] %v2537
        %2570 = vst [vmem:[%s419 + $0x68] sm:$0xff] %v2538
        %2571 = vst [vmem:[%s419 + $0x70] sm:$0xff] %v2539
        %2572 = vst [vmem:[%s419 + $0x78] sm:$0xff] %v2540
        %2573 = vst [vmem:[%s419 + $0x80] sm:$0xff] %v2541
        %2574 = vst [vmem:[%s419 + $0x88] sm:$0xff] %v2542
        %2575 = vst [vmem:[%s419 + $0x90] sm:$0xff] %v2543
        %2576 = vst [vmem:[%s419 + $0x98] sm:$0xff] %v2544
        %2577 = vst [vmem:[%s419 + $0xa0] sm:$0xff] %v2545
        %2578 = vst [vmem:[%s419 + $0xa8] sm:$0xff] %v2546
        %2579 = vst [vmem:[%s419 + $0xb0] sm:$0xff] %v2547
        %2580 = vst [vmem:[%s419 + $0xb8] sm:$0xff] %v2548
        %2581 = vst [vmem:[%s419 + $0xc0] sm:$0xff] %v2549
        %2582 = vst [vmem:[%s419 + $0xc8] sm:$0xff] %v2550
        %2583 = vst [vmem:[%s419 + $0xd0] sm:$0xff] %v2551
        %2584 = vst [vmem:[%s419 + $0xd8] sm:$0xff] %v2552
        %2585 = vst [vmem:[%s419 + $0xe0] sm:$0xff] %v2553
        %2586 = vst [vmem:[%s419 + $0xe8] sm:$0xff] %v2554
        %2587 = vst [vmem:[%s419 + $0xf0] sm:$0xff] %v2555
        %2588 = vst [vmem:[%s419 + $0xf8] sm:$0xff] %v2556
        %s2589 = sand.u32 %s290, 1
        %s2590 = scalar_lea.sflag [#allocation3], %s2589
        %s2591 = sand.u32 %s290, 1
        %s2592 = smul.addr %s2591, 256
        %s2593 = scalar_lea.vmem [#allocation2], %s2592
        // Predicated region
        $region65: #{tpu_custom_call.1} parent=63 // pred_check
          %p2594 = pneg %p300
        $region66: #{tpu_custom_call.1} parent=63 // pred_check_branch
          %2596 = sbr.rel (%p2594) target = $region68
        $region67: #{tpu_custom_call.1} parent=63 // pred_region
          %s2597 = smul.u32 32, %s30
          %s2599 = ssub.s32 4096, 4096
          %2600 = vsyncadd %s2590, %s2599
          %s2601 = smul.addr %s29, 32
          %s2602 = sadd.s32 %s2597, %s2601
          %s2603 = smul.addr %s2602, 128
          %s2604 = scalar_lea.hbm %s11, %s2603
          %s2605 = sshll.u32 %s2593, 4
          %s2606 = int_to_ptr.vmem [resolvable:$true] %s2605
          %2611 = dma.vmem_to_hbm [thread:$0]  %s2606, 4096, %s2604, %s2590, 128, 128, 8
        $region68: #{tpu_custom_call.1} parent=63 // pred_fallthru
          _
      $region64: #{tpu_custom_call.1} parent=5 // pred_fallthru
        _
      %p2612 = scmp.le.s32.totalorder 2, %s20
      // Predicated region
      $region69: #{tpu_custom_call.1} parent=5 // pred_check
        %p2613 = pneg %p2612
      $region70: #{tpu_custom_call.1} parent=5 // pred_check_branch
        %2615 = sbr.rel (%p2613) target = $region72
      $region71: #{tpu_custom_call.1} parent=5 // pred_region
        %s2616 = ssub.s32 %s20, 2
        // Predicated region
        $region73: #{tpu_custom_call.1} parent=71 // pred_check
          %p2617 = pneg %p306
        $region74: #{tpu_custom_call.1} parent=71 // pred_check_branch
          %2619 = sbr.rel (%p2617) target = $region76
        $region75: #{tpu_custom_call.1} parent=71 // pred_region
          %s2620 = sand.u32 %s291, 1
          %s2621 = scalar_lea.sflag [#allocation3], %s2620
          %s2622 = sand.u32 %s291, 1
          %s2623 = smul.addr %s2622, 256
          %s2624 = scalar_lea.vmem [#allocation2], %s2623
          %2625 = dma.done %s2621, 4096
        $region76: #{tpu_custom_call.1} parent=71 // pred_fallthru
          _
      $region72: #{tpu_custom_call.1} parent=5 // pred_fallthru
        _
    $region6: #{tpu_custom_call.1} parent=1 // loop_footer
      %s24 = sadd.s32 1, %s20
    $region7: #{tpu_custom_call.1} parent=1 // loop_footer_branch
      %19 = sbr.rel target = $region3
    $region8: #{tpu_custom_call.1} parent=1 // loop_exit
      _
    %2626 = vsyncpa [#allocation3], 1
    %s2627 = scalar_lea.sflag [#allocation3], 1
    %2628 = vsyncpa %s2627, 1

// kernel: tpu_custom_call.1
$region0: #{tpu_custom_call.1}
  #allocation0 [shape = 'u32[]', space=smem, size = 0x4, offset = 0x4, fixed_abs, tag = 'smem constant byte address 0x4 - core index']
  #allocation1 [shape = 'u32[144,128]{1,0:T(1,128)}', space=vmem, size = 0x12000, scoped, tag = 'internal scratch']
  %s0 = inlined_call_operand.vmem [shape: bf16[2,256,144], index: 0, kind: input, shape index: {}]
  %s1 = inlined_call_operand.vmem [shape: bf16[2,8,64], index: 1, kind: input, shape index: {}]
  %s2 = inlined_call_operand.vmem [shape: bf16[64,32], index: 2, kind: input, shape index: {}]
  %s3 = inlined_call_operand.vmem [shape: f32[1,32], index: 3, kind: input, shape index: {}]
  %s4 = inlined_call_operand.vmem [shape: bf16[16,32], index: 4, kind: input, shape index: {}]
  %s5 = inlined_call_operand.vmem [shape: f32[1,32], index: 5, kind: input, shape index: {}]
  %s6 = inlined_call_operand.vmem [shape: bf16[144,128], index: 6, kind: input, shape index: {}]
  %s7 = inlined_call_operand.vmem [shape: f32[1,128], index: 7, kind: input, shape index: {}]
  %s8 = inlined_call_operand.vmem [shape: f32[2,128], index: 8, kind: input, shape index: {}]
  %s9 = inlined_call_operand.vmem [shape: f32[1,2], index: 9, kind: input, shape index: {}]
  %s10 = inlined_call_operand.vmem [shape: f32[1,2], index: 10, kind: input, shape index: {}]
  %s11 = inlined_call_operand.hbm [shape: f32[2,256,128], index: 11, kind: output, shape index: {}]
  %s12 = sld [smem:[#allocation0]]
  $region77: #{tpu_custom_call.1} parent=0
    _
  %s14 = ssub.s32 1, %s12
  %s15 = scalar_select 0, %s14, %s12
  $region1: #{tpu_custom_call.1} parent=0
    #allocation2 [shape = 'u8[262144]{0}', space=vmem, size = 0x40000, scoped, tag = 'output window, operand 0']
    #allocation3 [shape = 's32[2]{0}', space=sflag, size = 0x8, scoped, tag = 'scoped memory for tpu_custom_call.1']
    %16 = vsyncpa [#allocation3], 0
    %s17 = scalar_lea.sflag [#allocation3], 1
    %18 = vsyncpa %s17, 0
    loop: start=0, step=1, limit=4
    $region2: #{tpu_custom_call.1} parent=1 // loop_pre_header
      _
    $region3: #{tpu_custom_call.1} parent=1 // loop_header
      %s20 = sphi 0, %s24
      %p21 = scmp.ge.s32.totalorder %s20, 4
      %s27 = sphi 0, %s39
      %s28 = sphi 0, %s35
      %s29 = sphi 0, %s27
      %s30 = sphi 0, %s28
      %s31 = sphi 0, %s29
      %s32 = sphi 0, %s30
      %s44 = sphi 0, %s46
      %s47 = sphi 0, %s44
      %s48 = sphi 0, %s47
      %s64 = sphi 0, %s48
      %s70 = sphi 0, %s72
      %s73 = sphi 0, %s70
      %s74 = sphi 0, %s73
      %s90 = sphi 0, %s74
      %s94 = sphi 0, %s94
      %s96 = sphi 0, %s94
      %s97 = sphi 0, %s96
      %s111 = sphi 0, %s97
      %s115 = sphi 0, %s115
      %s117 = sphi 0, %s115
      %s118 = sphi 0, %s117
      %s132 = sphi 0, %s118
      %s136 = sphi 0, %s136
      %s138 = sphi 0, %s136
      %s139 = sphi 0, %s138
      %s153 = sphi 0, %s139
      %s157 = sphi 0, %s157
      %s159 = sphi 0, %s157
      %s160 = sphi 0, %s159
      %s174 = sphi 0, %s160
      %s178 = sphi 0, %s178
      %s180 = sphi 0, %s178
      %s181 = sphi 0, %s180
      %s195 = sphi 0, %s181
      %s199 = sphi 0, %s199
      %s201 = sphi 0, %s199
      %s202 = sphi 0, %s201
      %s216 = sphi 0, %s202
      %s220 = sphi 0, %s220
      %s222 = sphi 0, %s220
      %s223 = sphi 0, %s222
      %s237 = sphi 0, %s223
      %s241 = sphi 0, %s241
      %s243 = sphi 0, %s241
      %s244 = sphi 0, %s243
      %s258 = sphi 0, %s244
      %s262 = sphi 0, %s262
      %s264 = sphi 0, %s262
      %s265 = sphi 0, %s264
      %s279 = sphi 0, %s265
      %s287 = sphi 0, %s289
      %s290 = sphi 0, %s287
      %s291 = sphi 0, %s290
      %s307 = sphi 0, %s291
    $region4: #{tpu_custom_call.1} parent=1 // loop_header_branch
      %23 = sbr.rel (%p21) target = $region8
    $region5: #{tpu_custom_call.1} parent=1 // loop_body
      %s25 = ssub.s32 %s20, 1
      %s26 = ssub.s32 %s20, 2
      %s33 = sadd.s32 1, %s28
      %p34 = scmp.ge.s32.totalorder %s33, 1
      %s35 = scalar_select %p34, 0, %s33
      %s36 = sadd.s32 1, %s27
      %s37 = scalar_select %p34, %s36, %s27
      %p38 = scmp.ge.s32.totalorder %s37, 2
      %s39 = scalar_select %p38, 0, %s37
      %s40 = ssub.s32 %s27, %s39
      %s41 = ssub.s32 %s28, %s35
      %s42 = sor.u32 %s40, %s41
      %p43 = scmp.eq.s32.totalorder %s42, 0
      %s45 = sadd.s32 %s44, 1
      %s46 = scalar_select %p43, %s44, %s45
      %p49 = pneg %p43
      %p50 = scmp.eq.s32.totalorder %s20, 1
      %p51 = por %p49, %p50
      %p52 = scmp.ne.s32.totalorder %s44, %s47
      %p53 = scmp.eq.s32.totalorder %s20, 0
      %p54 = por %p52, %p53
      %p55 = scmp.ne.s32.totalorder %s44, %s47
      %p56 = scmp.eq.s32.totalorder %s25, 1
      %p57 = por %p55, %p56
      %p58 = scmp.ne.s32.totalorder %s47, %s48
      %p59 = scmp.eq.s32.totalorder %s25, 0
      %p60 = por %p58, %p59
      %p61 = scmp.ne.s32.totalorder %s47, %s48
      %p62 = scmp.eq.s32.totalorder %s26, 1
      %p63 = por %p61, %p62
      %p65 = scmp.ne.s32.totalorder %s48, %s64
      %p66 = scmp.eq.s32.totalorder %s26, 0
      %p67 = por %p65, %p66
      %s68 = ssub.s32 %s27, %s39
      %p69 = scmp.eq.s32.totalorder %s68, 0
      %s71 = sadd.s32 %s70, 1
      %s72 = scalar_select %p69, %s70, %s71
      %p75 = pneg %p69
      %p76 = scmp.eq.s32.totalorder %s20, 1
      %p77 = por %p75, %p76
      %p78 = scmp.ne.s32.totalorder %s70, %s73
      %p79 = scmp.eq.s32.totalorder %s20, 0
      %p80 = por %p78, %p79
      %p81 = scmp.ne.s32.totalorder %s70, %s73
      %p82 = scmp.eq.s32.totalorder %s25, 1
      %p83 = por %p81, %p82
      %p84 = scmp.ne.s32.totalorder %s73, %s74
      %p85 = scmp.eq.s32.totalorder %s25, 0
      %p86 = por %p84, %p85
      %p87 = scmp.ne.s32.totalorder %s73, %s74
      %p88 = scmp.eq.s32.totalorder %s26, 1
      %p89 = por %p87, %p88
      %p91 = scmp.ne.s32.totalorder %s74, %s90
      %p92 = scmp.eq.s32.totalorder %s26, 0
      %p93 = por %p91, %p92
      %s95 = sadd.s32 %s94, 1
      %p98 = scmp.eq.s32.totalorder %s20, 1
      %p99 = scmp.ne.s32.totalorder %s94, %s96
      %p100 = scmp.eq.s32.totalorder %s20, 0
      %p101 = por %p99, %p100
      %p102 = scmp.ne.s32.totalorder %s94, %s96
      %p103 = scmp.eq.s32.totalorder %s25, 1
      %p104 = por %p102, %p103
      %p105 = scmp.ne.s32.totalorder %s96, %s97
      %p106 = scmp.eq.s32.totalorder %s25, 0
      %p107 = por %p105, %p106
      %p108 = scmp.ne.s32.totalorder %s96, %s97
      %p109 = scmp.eq.s32.totalorder %s26, 1
      %p110 = por %p108, %p109
      %p112 = scmp.ne.s32.totalorder %s97, %s111
      %p113 = scmp.eq.s32.totalorder %s26, 0
      %p114 = por %p112, %p113
      %s116 = sadd.s32 %s115, 1
      %p119 = scmp.eq.s32.totalorder %s20, 1
      %p120 = scmp.ne.s32.totalorder %s115, %s117
      %p121 = scmp.eq.s32.totalorder %s20, 0
      %p122 = por %p120, %p121
      %p123 = scmp.ne.s32.totalorder %s115, %s117
      %p124 = scmp.eq.s32.totalorder %s25, 1
      %p125 = por %p123, %p124
      %p126 = scmp.ne.s32.totalorder %s117, %s118
      %p127 = scmp.eq.s32.totalorder %s25, 0
      %p128 = por %p126, %p127
      %p129 = scmp.ne.s32.totalorder %s117, %s118
      %p130 = scmp.eq.s32.totalorder %s26, 1
      %p131 = por %p129, %p130
      %p133 = scmp.ne.s32.totalorder %s118, %s132
      %p134 = scmp.eq.s32.totalorder %s26, 0
      %p135 = por %p133, %p134
      %s137 = sadd.s32 %s136, 1
      %p140 = scmp.eq.s32.totalorder %s20, 1
      %p141 = scmp.ne.s32.totalorder %s136, %s138
      %p142 = scmp.eq.s32.totalorder %s20, 0
      %p143 = por %p141, %p142
      %p144 = scmp.ne.s32.totalorder %s136, %s138
      %p145 = scmp.eq.s32.totalorder %s25, 1
      %p146 = por %p144, %p145
      %p147 = scmp.ne.s32.totalorder %s138, %s139
      %p148 = scmp.eq.s32.totalorder %s25, 0
      %p149 = por %p147, %p148
      %p150 = scmp.ne.s32.totalorder %s138, %s139
      %p151 = scmp.eq.s32.totalorder %s26, 1
      %p152 = por %p150, %p151
      %p154 = scmp.ne.s32.totalorder %s139, %s153
      %p155 = scmp.eq.s32.totalorder %s26, 0
      %p156 = por %p154, %p155
      %s158 = sadd.s32 %s157, 1
      %p161 = scmp.eq.s32.totalorder %s20, 1
      %p162 = scmp.ne.s32.totalorder %s157, %s159
      %p163 = scmp.eq.s32.totalorder %s20, 0
      %p164 = por %p162, %p163
      %p165 = scmp.ne.s32.totalorder %s157, %s159
      %p166 = scmp.eq.s32.totalorder %s25, 1
      %p167 = por %p165, %p166
      %p168 = scmp.ne.s32.totalorder %s159, %s160
      %p169 = scmp.eq.s32.totalorder %s25, 0
      %p170 = por %p168, %p169
      %p171 = scmp.ne.s32.totalorder %s159, %s160
      %p172 = scmp.eq.s32.totalorder %s26, 1
      %p173 = por %p171, %p172
      %p175 = scmp.ne.s32.totalorder %s160, %s174
      %p176 = scmp.eq.s32.totalorder %s26, 0
      %p177 = por %p175, %p176
      %s179 = sadd.s32 %s178, 1
      %p182 = scmp.eq.s32.totalorder %s20, 1
      %p183 = scmp.ne.s32.totalorder %s178, %s180
      %p184 = scmp.eq.s32.totalorder %s20, 0
      %p185 = por %p183, %p184
      %p186 = scmp.ne.s32.totalorder %s178, %s180
      %p187 = scmp.eq.s32.totalorder %s25, 1
      %p188 = por %p186, %p187
      %p189 = scmp.ne.s32.totalorder %s180, %s181
      %p190 = scmp.eq.s32.totalorder %s25, 0
      %p191 = por %p189, %p190
      %p192 = scmp.ne.s32.totalorder %s180, %s181
      %p193 = scmp.eq.s32.totalorder %s26, 1
      %p194 = por %p192, %p193
      %p196 = scmp.ne.s32.totalorder %s181, %s195
      %p197 = scmp.eq.s32.totalorder %s26, 0
      %p198 = por %p196, %p197
      %s200 = sadd.s32 %s199, 1
      %p203 = scmp.eq.s32.totalorder %s20, 1
      %p204 = scmp.ne.s32.totalorder %s199, %s201
      %p205 = scmp.eq.s32.totalorder %s20, 0
      %p206 = por %p204, %p205
      %p207 = scmp.ne.s32.totalorder %s199, %s201
      %p208 = scmp.eq.s32.totalorder %s25, 1
      %p209 = por %p207, %p208
      %p210 = scmp.ne.s32.totalorder %s201, %s202
      %p211 = scmp.eq.s32.totalorder %s25, 0
      %p212 = por %p210, %p211
      %p213 = scmp.ne.s32.totalorder %s201, %s202
      %p214 = scmp.eq.s32.totalorder %s26, 1
      %p215 = por %p213, %p214
      %p217 = scmp.ne.s32.totalorder %s202, %s216
      %p218 = scmp.eq.s32.totalorder %s26, 0
      %p219 = por %p217, %p218
      %s221 = sadd.s32 %s220, 1
      %p224 = scmp.eq.s32.totalorder %s20, 1
      %p225 = scmp.ne.s32.totalorder %s220, %s222
      %p226 = scmp.eq.s32.totalorder %s20, 0
      %p227 = por %p225, %p226
      %p228 = scmp.ne.s32.totalorder %s220, %s222
      %p229 = scmp.eq.s32.totalorder %s25, 1
      %p230 = por %p228, %p229
      %p231 = scmp.ne.s32.totalorder %s222, %s223
      %p232 = scmp.eq.s32.totalorder %s25, 0
      %p233 = por %p231, %p232
      %p234 = scmp.ne.s32.totalorder %s222, %s223
      %p235 = scmp.eq.s32.totalorder %s26, 1
      %p236 = por %p234, %p235
      %p238 = scmp.ne.s32.totalorder %s223, %s237
      %p239 = scmp.eq.s32.totalorder %s26, 0
      %p240 = por %p238, %p239
      %s242 = sadd.s32 %s241, 1
      %p245 = scmp.eq.s32.totalorder %s20, 1
      %p246 = scmp.ne.s32.totalorder %s241, %s243
      %p247 = scmp.eq.s32.totalorder %s20, 0
      %p248 = por %p246, %p247
      %p249 = scmp.ne.s32.totalorder %s241, %s243
      %p250 = scmp.eq.s32.totalorder %s25, 1
      %p251 = por %p249, %p250
      %p252 = scmp.ne.s32.totalorder %s243, %s244
      %p253 = scmp.eq.s32.totalorder %s25, 0
      %p254 = por %p252, %p253
      %p255 = scmp.ne.s32.totalorder %s243, %s244
      %p256 = scmp.eq.s32.totalorder %s26, 1
      %p257 = por %p255, %p256
      %p259 = scmp.ne.s32.totalorder %s244, %s258
      %p260 = scmp.eq.s32.totalorder %s26, 0
      %p261 = por %p259, %p260
      %s263 = sadd.s32 %s262, 1
      %p266 = scmp.eq.s32.totalorder %s20, 1
      %p267 = scmp.ne.s32.totalorder %s262, %s264
      %p268 = scmp.eq.s32.totalorder %s20, 0
      %p269 = por %p267, %p268
      %p270 = scmp.ne.s32.totalorder %s262, %s264
      %p271 = scmp.eq.s32.totalorder %s25, 1
      %p272 = por %p270, %p271
      %p273 = scmp.ne.s32.totalorder %s264, %s265
      %p274 = scmp.eq.s32.totalorder %s25, 0
      %p275 = por %p273, %p274
      %p276 = scmp.ne.s32.totalorder %s264, %s265
      %p277 = scmp.eq.s32.totalorder %s26, 1
      %p278 = por %p276, %p277
      %p280 = scmp.ne.s32.totalorder %s265, %s279
      %p281 = scmp.eq.s32.totalorder %s26, 0
      %p282 = por %p280, %p281
      %s283 = ssub.s32 %s27, %s39
      %s284 = ssub.s32 %s28, %s35
      %s285 = sor.u32 %s283, %s284
      %p286 = scmp.eq.s32.totalorder %s285, 0
      %s288 = sadd.s32 %s287, 1
      %s289 = scalar_select %p286, %s287, %s288
      %p292 = pneg %p286
      %p293 = scmp.eq.s32.totalorder %s20, 1
      %p294 = por %p292, %p293
      %p295 = scmp.ne.s32.totalorder %s287, %s290
      %p296 = scmp.eq.s32.totalorder %s20, 0
      %p297 = por %p295, %p296
      %p298 = scmp.ne.s32.totalorder %s287, %s290
      %p299 = scmp.eq.s32.totalorder %s25, 1
      %p300 = por %p298, %p299
      %p301 = scmp.ne.s32.totalorder %s290, %s291
      %p302 = scmp.eq.s32.totalorder %s25, 0
      %p303 = por %p301, %p302
      %p304 = scmp.ne.s32.totalorder %s290, %s291
      %p305 = scmp.eq.s32.totalorder %s26, 1
      %p306 = por %p304, %p305
      %p308 = scmp.ne.s32.totalorder %s291, %s307
      %p309 = scmp.eq.s32.totalorder %s26, 0
      %p310 = por %p308, %p309
      %p311 = scmp.le.s32.totalorder 1, %s20
      %p312 = scmp.lt.s32.totalorder %s20, 3
      %p313 = pnand %p311, %p312
      %p314 = pneg %p313
      // Predicated region
      $region9: #{tpu_custom_call.1} parent=5 // pred_check
        _
      $region10: #{tpu_custom_call.1} parent=5 // pred_check_branch
        %316 = sbr.rel (%p313) target = $region12
      $region11: #{tpu_custom_call.1} parent=5 // pred_region
        %s317 = ssub.s32 %s20, 1
        // Predicated region
        $region13: #{tpu_custom_call.1} parent=11 // pred_check
          %p318 = pneg %p107
        $region14: #{tpu_custom_call.1} parent=11 // pred_check_branch
          %320 = sbr.rel (%p318) target = $region16
        $region15: #{tpu_custom_call.1} parent=11 // pred_region
          _
        $region16: #{tpu_custom_call.1} parent=11 // pred_fallthru
          _
        // Predicated region
        $region17: #{tpu_custom_call.1} parent=11 // pred_check
          %p321 = pneg %p128
        $region18: #{tpu_custom_call.1} parent=11 // pred_check_branch
          %323 = sbr.rel (%p321) target = $region20
        $region19: #{tpu_custom_call.1} parent=11 // pred_region
          _
        $region20: #{tpu_custom_call.1} parent=11 // pred_fallthru
          _
        // Predicated region
        $region21: #{tpu_custom_call.1} parent=11 // pred_check
          %p324 = pneg %p149
        $region22: #{tpu_custom_call.1} parent=11 // pred_check_branch
          %326 = sbr.rel (%p324) target = $region24
        $region23: #{tpu_custom_call.1} parent=11 // pred_region
          _
        $region24: #{tpu_custom_call.1} parent=11 // pred_fallthru
          _
        // Predicated region
        $region25: #{tpu_custom_call.1} parent=11 // pred_check
          %p327 = pneg %p170
        $region26: #{tpu_custom_call.1} parent=11 // pred_check_branch
          %329 = sbr.rel (%p327) target = $region28
        $region27: #{tpu_custom_call.1} parent=11 // pred_region
          _
        $region28: #{tpu_custom_call.1} parent=11 // pred_fallthru
          _
        // Predicated region
        $region29: #{tpu_custom_call.1} parent=11 // pred_check
          %p330 = pneg %p191
        $region30: #{tpu_custom_call.1} parent=11 // pred_check_branch
          %332 = sbr.rel (%p330) target = $region32
        $region31: #{tpu_custom_call.1} parent=11 // pred_region
          _
        $region32: #{tpu_custom_call.1} parent=11 // pred_fallthru
          _
        // Predicated region
        $region33: #{tpu_custom_call.1} parent=11 // pred_check
          %p333 = pneg %p212
        $region34: #{tpu_custom_call.1} parent=11 // pred_check_branch
          %335 = sbr.rel (%p333) target = $region36
        $region35: #{tpu_custom_call.1} parent=11 // pred_region
          _
        $region36: #{tpu_custom_call.1} parent=11 // pred_fallthru
          _
        // Predicated region
        $region37: #{tpu_custom_call.1} parent=11 // pred_check
          %p336 = pneg %p233
        $region38: #{tpu_custom_call.1} parent=11 // pred_check_branch
          %338 = sbr.rel (%p336) target = $region40
        $region39: #{tpu_custom_call.1} parent=11 // pred_region
          _
        $region40: #{tpu_custom_call.1} parent=11 // pred_fallthru
          _
        // Predicated region
        $region41: #{tpu_custom_call.1} parent=11 // pred_check
          %p339 = pneg %p254
        $region42: #{tpu_custom_call.1} parent=11 // pred_check_branch
          %341 = sbr.rel (%p339) target = $region44
        $region43: #{tpu_custom_call.1} parent=11 // pred_region
          _
        $region44: #{tpu_custom_call.1} parent=11 // pred_fallthru
          _
        // Predicated region
        $region45: #{tpu_custom_call.1} parent=11 // pred_check
          %p342 = pneg %p275
        $region46: #{tpu_custom_call.1} parent=11 // pred_check_branch
          %344 = sbr.rel (%p342) target = $region48
        $region47: #{tpu_custom_call.1} parent=11 // pred_region
          _
        $region48: #{tpu_custom_call.1} parent=11 // pred_fallthru
          _
      $region12: #{tpu_custom_call.1} parent=5 // pred_fallthru
        _
      %p345 = scmp.lt.s32.totalorder %s20, 2
      // Predicated region
      $region49: #{tpu_custom_call.1} parent=5 // pred_check
        %p346 = pneg %p345
      $region50: #{tpu_custom_call.1} parent=5 // pred_check_branch
        %348 = sbr.rel (%p346) target = $region52
      $region51: #{tpu_custom_call.1} parent=5 // pred_region
        // Predicated region
        $region53: #{tpu_custom_call.1} parent=51 // pred_check
          %p349 = pneg %p54
        $region54: #{tpu_custom_call.1} parent=51 // pred_check_branch
          %351 = sbr.rel (%p349) target = $region56
        $region55: #{tpu_custom_call.1} parent=51 // pred_region
          %s352 = smul.u32 32, %s28
          %p353 = scmp.lt.s32.totalorder %s27, 1
          %s354 = scalar_select %p353, %s27, 1
          %p355 = scmp.lt.s32.totalorder %s352, 31
          %s356 = scalar_select %p355, %s352, 31
          %s357 = smul.addr %s356, 2
          %s358 = smul.addr %s354, 64
          %s359 = sadd.s32 %s357, %s358
          %s360 = smul.addr %s359, 4
          %s361 = scalar_lea.vmem %s0, %s360
          %s362 = smul.u32 32, %s28
        $region56: #{tpu_custom_call.1} parent=51 // pred_fallthru
          _
        // Predicated region
        $region57: #{tpu_custom_call.1} parent=51 // pred_check
          %p363 = pneg %p80
        $region58: #{tpu_custom_call.1} parent=51 // pred_check_branch
          %365 = sbr.rel (%p363) target = $region60
        $region59: #{tpu_custom_call.1} parent=51 // pred_region
          %p366 = scmp.lt.s32.totalorder %s27, 1
          %s367 = scalar_select %p366, %s27, 1
          %s368 = smul.addr %s367, 4
          %s369 = scalar_lea.vmem %s1, %s368
        $region60: #{tpu_custom_call.1} parent=51 // pred_fallthru
          _
      $region52: #{tpu_custom_call.1} parent=5 // pred_fallthru
        _
      %p370 = scmp.le.s32.totalorder 1, %s20
      %p371 = scmp.lt.s32.totalorder %s20, 3
      %p372 = pnand %p370, %p371
      %p373 = pneg %p372
      // Predicated region
      $region61: #{tpu_custom_call.1} parent=5 // pred_check
        _
      $region62: #{tpu_custom_call.1} parent=5 // pred_check_branch
        %375 = sbr.rel (%p372) target = $region64
      $region63: #{tpu_custom_call.1} parent=5 // pred_region
        %s376 = ssub.s32 %s20, 1
        %s377 = smul.u32 32, %s30
        %p378 = scmp.lt.s32.totalorder %s29, 1
        %s379 = scalar_select %p378, %s29, 1
        %p380 = scmp.lt.s32.totalorder %s377, 31
        %s381 = scalar_select %p380, %s377, 31
        %s382 = smul.addr %s381, 2
        %s383 = smul.addr %s379, 64
        %s384 = sadd.s32 %s382, %s383
        %s385 = smul.addr %s384, 4
        %s386 = scalar_lea.vmem %s0, %s385
        %p387 = pneg %p60
        %p388 = pneg %p57
        %p389 = scmp.lt.s32.totalorder %s29, 1
        %s390 = scalar_select %p389, %s29, 1
        %s391 = smul.addr %s390, 4
        %s392 = scalar_lea.vmem %s1, %s391
        %p393 = pneg %p86
        %p394 = pneg %p83
        %p395 = pneg %p107
        %p396 = pneg %p104
        %p397 = pneg %p128
        %p398 = pneg %p125
        %p399 = pneg %p149
        %p400 = pneg %p146
        %p401 = pneg %p170
        %p402 = pneg %p167
        %p403 = pneg %p191
        %p404 = pneg %p188
        %p405 = pneg %p212
        %p406 = pneg %p209
        %p407 = pneg %p233
        %p408 = pneg %p230
        %p409 = pneg %p254
        %p410 = pneg %p251
        %p411 = pneg %p275
        %p412 = pneg %p272
        %p413 = pneg %p303
        %p414 = pneg %p300
        %s415 = sand.u32 %s290, 1
        %s416 = scalar_lea.sflag [#allocation3], %s415
        %s417 = sand.u32 %s290, 1
        %s418 = smul.addr %s417, 256
        %s419 = scalar_lea.vmem [#allocation2], %s418
        %s420 = smul.u32 32, %s30
        %p421 = scmp.lt.s32.totalorder %s29, 1
        %s422 = scalar_select %p421, %s29, 1
        %p423 = scmp.lt.s32.totalorder %s420, 31
        %s424 = scalar_select %p423, %s420, 31
        %s425 = smul.addr %s424, 2
        %s426 = smul.addr %s422, 64
        %s427 = sadd.s32 %s425, %s426
        %s428 = smul.addr %s427, 4
        %s429 = scalar_lea.vmem %s0, %s428
        %s430 = smul.u32 32, %s30
        %p431 = scmp.lt.s32.totalorder %s29, 1
        %s432 = scalar_select %p431, %s29, 1
        %s433 = smul.addr %s432, 4
        %s434 = scalar_lea.vmem %s1, %s433
        %s435 = smul.u32 32, %s30
        %v437 = vld [vmem:[%s429] sm:$0xff]
        %v438 = vld [vmem:[%s429 + $0x8] sm:$0xff]
        %v439 = vld [vmem:[%s429 + $0x10] sm:$0xff]
        %v440 = vld [vmem:[%s429 + $0x18] sm:$0xff]
        %v441 = vld [vmem:[%s429 + $0x20] sm:$0xff]
        %v442 = vld [vmem:[%s429 + $0x28] sm:$0xff]
        %v443 = vld [vmem:[%s429 + $0x30] sm:$0xff]
        %v444 = vld [vmem:[%s429 + $0x38] sm:$0xff]
        %v445 = vld [vmem:[%s429 + $0x40] sm:$0xff]
        %v446 = vld [vmem:[%s429 + $0x48] sm:$0xff]
        %v447 = vld [vmem:[%s429 + $0x50] sm:$0xff]
        %v448 = vld [vmem:[%s429 + $0x58] sm:$0xff]
        %v449 = vld [vmem:[%s429 + $0x60] sm:$0xff]
        %v450 = vld [vmem:[%s429 + $0x68] sm:$0xff]
        %v451 = vld [vmem:[%s429 + $0x70] sm:$0xff]
        %v452 = vld [vmem:[%s429 + $0x78] sm:$0xff]
        %v453 = vld [vmem:[%s429 + $0x80] sm:$0xff]
        %v454 = vld [vmem:[%s429 + $0x88] sm:$0xff]
        %v455 = vld [vmem:[%s429 + $0x90] sm:$0xff]
        %v456 = vld [vmem:[%s429 + $0x98] sm:$0xff]
        %v457 = vld [vmem:[%s429 + $0xa0] sm:$0xff]
        %v458 = vld [vmem:[%s429 + $0xa8] sm:$0xff]
        %v459 = vld [vmem:[%s429 + $0xb0] sm:$0xff]
        %v460 = vld [vmem:[%s429 + $0xb8] sm:$0xff]
        %v461 = vld [vmem:[%s429 + $0xc0] sm:$0xff]
        %v462 = vld [vmem:[%s429 + $0xc8] sm:$0xff]
        %v463 = vld [vmem:[%s429 + $0xd0] sm:$0xff]
        %v464 = vld [vmem:[%s429 + $0xd8] sm:$0xff]
        %v465 = vld [vmem:[%s429 + $0xe0] sm:$0xff]
        %v466 = vld [vmem:[%s429 + $0xe8] sm:$0xff]
        %v467 = vld [vmem:[%s429 + $0xf0] sm:$0xff]
        %v468 = vld [vmem:[%s429 + $0xf8] sm:$0xff]
        %v469 = vld [vmem:[%s6] sm:$0xf]
        %v470 = vld [vmem:[%s6 + $0x4] sm:$0xf]
        %v471 = vld [vmem:[%s6 + $0x8] sm:$0xf]
        %v472 = vld [vmem:[%s6 + $0xc] sm:$0xf]
        %v473 = vld [vmem:[%s6 + $0x10] sm:$0xf]
        %v474 = vld [vmem:[%s6 + $0x14] sm:$0xf]
        %v475 = vld [vmem:[%s6 + $0x18] sm:$0xf]
        %v476 = vld [vmem:[%s6 + $0x1c] sm:$0xf]
        %v477 = vld [vmem:[%s6 + $0x20] sm:$0xf]
        %v478 = vld [vmem:[%s6 + $0x24] sm:$0xf]
        %v479 = vld [vmem:[%s6 + $0x28] sm:$0xf]
        %v480 = vld [vmem:[%s6 + $0x2c] sm:$0xf]
        %v481 = vld [vmem:[%s6 + $0x30] sm:$0xf]
        %v482 = vld [vmem:[%s6 + $0x34] sm:$0xf]
        %v483 = vld [vmem:[%s6 + $0x38] sm:$0xf]
        %v484 = vld [vmem:[%s6 + $0x3c] sm:$0xf]
        %v485 = vld [vmem:[%s6 + $0x40] sm:$0xf]
        %v486 = vld [vmem:[%s6 + $0x44] sm:$0xf]
        %v487 = vld [vmem:[%s7] sm:$0x1]
        %v489 = vlaneseq
        %v490 = vshrl.u32 %v489, 7
        %v491 = vsub.s32 0, %v490
        %v492 = vrot.slane %v487, %v491
        %v526 = vunpack.c.l.b16 %v437
        %v527 = vunpack.c.h.b16 %v437
        %v528 = vunpack.c.l.b16 %v438
        %v529 = vunpack.c.h.b16 %v438
        %v530 = vunpack.c.l.b16 %v439
        %v531 = vunpack.c.h.b16 %v439
        %v532 = vunpack.c.l.b16 %v440
        %v533 = vunpack.c.h.b16 %v440
        %v534 = vunpack.c.l.b16 %v441
        %v535 = vunpack.c.h.b16 %v441
        %v536 = vunpack.c.l.b16 %v442
        %v537 = vunpack.c.h.b16 %v442
        %v538 = vunpack.c.l.b16 %v443
        %v539 = vunpack.c.h.b16 %v443
        %v540 = vunpack.c.l.b16 %v444
        %v541 = vunpack.c.h.b16 %v444
        %v542 = vunpack.c.l.b16 %v445
        %v543 = vunpack.c.h.b16 %v445
        %v544 = vunpack.c.l.b16 %v446
        %v545 = vunpack.c.h.b16 %v446
        %v546 = vunpack.c.l.b16 %v447
        %v547 = vunpack.c.h.b16 %v447
        %v548 = vunpack.c.l.b16 %v448
        %v549 = vunpack.c.h.b16 %v448
        %v550 = vunpack.c.l.b16 %v449
        %v551 = vunpack.c.h.b16 %v449
        %v552 = vunpack.c.l.b16 %v450
        %v553 = vunpack.c.h.b16 %v450
        %v554 = vunpack.c.l.b16 %v451
        %v555 = vunpack.c.h.b16 %v451
        %v556 = vunpack.c.l.b16 %v452
        %v557 = vunpack.c.h.b16 %v452
        %v558 = vunpack.c.l.b16 %v453
        %v559 = vunpack.c.h.b16 %v453
        %v560 = vunpack.c.l.b16 %v454
        %v561 = vunpack.c.h.b16 %v454
        %v562 = vunpack.c.l.b16 %v455
        %v563 = vunpack.c.h.b16 %v455
        %v564 = vunpack.c.l.b16 %v456
        %v565 = vunpack.c.h.b16 %v456
        %v566 = vunpack.c.l.b16 %v457
        %v567 = vunpack.c.h.b16 %v457
        %v568 = vunpack.c.l.b16 %v458
        %v569 = vunpack.c.h.b16 %v458
        %v570 = vunpack.c.l.b16 %v459
        %v571 = vunpack.c.h.b16 %v459
        %v572 = vunpack.c.l.b16 %v460
        %v573 = vunpack.c.h.b16 %v460
        %v574 = vunpack.c.l.b16 %v461
        %v575 = vunpack.c.h.b16 %v461
        %v576 = vunpack.c.l.b16 %v462
        %v577 = vunpack.c.h.b16 %v462
        %v578 = vunpack.c.l.b16 %v463
        %v579 = vunpack.c.h.b16 %v463
        %v580 = vunpack.c.l.b16 %v464
        %v581 = vunpack.c.h.b16 %v464
        %v582 = vunpack.c.l.b16 %v465
        %v583 = vunpack.c.h.b16 %v465
        %v584 = vunpack.c.l.b16 %v466
        %v585 = vunpack.c.h.b16 %v466
        %v586 = vunpack.c.l.b16 %v467
        %v587 = vunpack.c.h.b16 %v467
        %v588 = vunpack.c.l.b16 %v468
        %v589 = vunpack.c.h.b16 %v468
        %v590 = vpack.c.b16 %v528, %v526
        %v591 = vpack.c.b16 %v529, %v527
        %v592 = vpack.c.b16 %v532, %v530
        %v593 = vpack.c.b16 %v533, %v531
        %v594 = vpack.c.b16 %v536, %v534
        %v595 = vpack.c.b16 %v537, %v535
        %v596 = vpack.c.b16 %v540, %v538
        %v597 = vpack.c.b16 %v541, %v539
        %v598 = vpack.c.b16 %v544, %v542
        %v599 = vpack.c.b16 %v545, %v543
        %v600 = vpack.c.b16 %v548, %v546
        %v601 = vpack.c.b16 %v549, %v547
        %v602 = vpack.c.b16 %v552, %v550
        %v603 = vpack.c.b16 %v553, %v551
        %v604 = vpack.c.b16 %v556, %v554
        %v605 = vpack.c.b16 %v557, %v555
        %v606 = vpack.c.b16 %v560, %v558
        %v607 = vpack.c.b16 %v561, %v559
        %v608 = vpack.c.b16 %v564, %v562
        %v609 = vpack.c.b16 %v565, %v563
        %v610 = vpack.c.b16 %v568, %v566
        %v611 = vpack.c.b16 %v569, %v567
        %v612 = vpack.c.b16 %v572, %v570
        %v613 = vpack.c.b16 %v573, %v571
        %v614 = vpack.c.b16 %v576, %v574
        %v615 = vpack.c.b16 %v577, %v575
        %v616 = vpack.c.b16 %v580, %v578
        %v617 = vpack.c.b16 %v581, %v579
        %v618 = vpack.c.b16 %v584, %v582
        %v619 = vpack.c.b16 %v585, %v583
        %v620 = vpack.c.b16 %v588, %v586
        %v621 = vpack.c.b16 %v589, %v587
        %v656 = vunpack.c.l.b16 %v469
        %v657 = vunpack.c.l.b16 %v470
        %v658 = vunpack.c.l.b16 %v471
        %v659 = vunpack.c.l.b16 %v472
        %v660 = vunpack.c.l.b16 %v473
        %v661 = vunpack.c.l.b16 %v474
        %v662 = vunpack.c.l.b16 %v475
        %v663 = vunpack.c.l.b16 %v476
        %v664 = vunpack.c.l.b16 %v477
        %v665 = vunpack.c.l.b16 %v478
        %v666 = vunpack.c.l.b16 %v479
        %v667 = vunpack.c.l.b16 %v480
        %v668 = vunpack.c.l.b16 %v481
        %v669 = vunpack.c.l.b16 %v482
        %v670 = vunpack.c.l.b16 %v483
        %v671 = vunpack.c.l.b16 %v484
        %v672 = vunpack.c.l.b16 %v485
        %v673 = vunpack.c.l.b16 %v486
        %v674 = vpack.c.b16 %v657, %v656
        %v675 = vpack.c.b16 %v659, %v658
        %v676 = vpack.c.b16 %v661, %v660
        %v677 = vpack.c.b16 %v663, %v662
        %v678 = vpack.c.b16 %v665, %v664
        %v679 = vpack.c.b16 %v667, %v666
        %v680 = vpack.c.b16 %v669, %v668
        %v681 = vpack.c.b16 %v671, %v670
        %v682 = vpack.c.b16 %v673, %v672
        %vm692 = vcmask 130048
        %v694 = vsel %vm692, %v591, 0
        %v697 = vsel %vm692, %v593, 0
        %v700 = vsel %vm692, %v595, 0
        %v703 = vsel %vm692, %v597, 0
        %v706 = vsel %vm692, %v599, 0
        %v709 = vsel %vm692, %v601, 0
        %v712 = vsel %vm692, %v603, 0
        %v715 = vsel %vm692, %v605, 0
        %v718 = vsel %vm692, %v607, 0
        %v721 = vsel %vm692, %v609, 0
        %v724 = vsel %vm692, %v611, 0
        %v727 = vsel %vm692, %v613, 0
        %v730 = vsel %vm692, %v615, 0
        %v733 = vsel %vm692, %v617, 0
        %v736 = vsel %vm692, %v619, 0
        %v739 = vsel %vm692, %v621, 0
        %741 = vmatprep.subr.bf16.mxu0 0
        %742 = vmatpush1.bf16.msra.mxu0 %v674
        %743 = vmatprep.subr.bf16.mxu0 0
        %744 = vmatpush1.bf16.msra.mxu0 %v675
        %745 = vmatprep.subr.bf16.mxu0 0
        %746 = vmatpush1.bf16.msra.mxu0 %v676
        %747 = vmatprep.subr.bf16.mxu0 0
        %748 = vmatpush1.bf16.msra.mxu0 %v677
        %749 = vmatprep.subr.bf16.mxu0 0
        %750 = vmatpush1.bf16.msra.mxu0 %v678
        %751 = vmatprep.subr.bf16.mxu0 0
        %752 = vmatpush1.bf16.msra.mxu0 %v679
        %753 = vmatprep.subr.bf16.mxu0 0
        %754 = vmatpush1.bf16.msra.mxu0 %v680
        %755 = vmatprep.subr.bf16.mxu0 0
        %756 = vmatpush1.bf16.msra.mxu0 %v681
        %757 = vmatprep.subr.bf16.mxu0 0
        %758 = vmatpush1.bf16.msra.mxu0 %v682
        %759 = vmatprep.subr.bf16.mxu0 0
        %760 = vmatpush1.bf16.msra.mxu0 0
        %761 = vmatprep.subr.bf16.mxu0 0
        %762 = vmatpush1.bf16.msra.mxu0 0
        %763 = vmatprep.subr.bf16.mxu0 0
        %764 = vmatpush1.bf16.msra.mxu0 0
        %765 = vmatprep.subr.bf16.mxu0 0
        %766 = vmatpush1.bf16.msra.mxu0 0
        %767 = vmatprep.subr.bf16.mxu0 0
        %768 = vmatpush1.bf16.msra.mxu0 0
        %769 = vmatprep.subr.bf16.mxu0 0
        %770 = vmatpush1.bf16.msra.mxu0 0
        %771 = vmatprep.subr.bf16.mxu0 0
        %772 = vmatpush1.bf16.msra.mxu0 0
        %773 = vmatprep.mubr.bf16.mxu0 %v694
        %774 = vmatmul.mubr.bf16.gmra.mrb[0].mxu0 %v590
        %v775 = vpop.f32.mrb[0].mxu0
        %v776 = vadd.f32 %v492, %v775
        %v777 = vpop.f32.mrb[0].mxu0
        %v778 = vpop.f32.mrb[0].mxu0
        %v779 = vadd.f32 %v492, %v778
        %v780 = vpop.f32.mrb[0].mxu0
        %781 = vmatprep.mubr.bf16.mxu0 %v697
        %782 = vmatmul.mubr.bf16.gmra.mrb[0].mxu0 %v592
        %v783 = vpop.f32.mrb[0].mxu0
        %v784 = vadd.f32 %v492, %v783
        %v785 = vpop.f32.mrb[0].mxu0
        %v786 = vpop.f32.mrb[0].mxu0
        %v787 = vadd.f32 %v492, %v786
        %v788 = vpop.f32.mrb[0].mxu0
        %789 = vmatprep.mubr.bf16.mxu0 %v700
        %790 = vmatmul.mubr.bf16.gmra.mrb[0].mxu0 %v594
        %v791 = vpop.f32.mrb[0].mxu0
        %v792 = vadd.f32 %v492, %v791
        %v793 = vpop.f32.mrb[0].mxu0
        %v794 = vpop.f32.mrb[0].mxu0
        %v795 = vadd.f32 %v492, %v794
        %v796 = vpop.f32.mrb[0].mxu0
        %797 = vmatprep.mubr.bf16.mxu0 %v703
        %798 = vmatmul.mubr.bf16.gmra.mrb[0].mxu0 %v596
        %v799 = vpop.f32.mrb[0].mxu0
        %v800 = vadd.f32 %v492, %v799
        %v801 = vpop.f32.mrb[0].mxu0
        %v802 = vpop.f32.mrb[0].mxu0
        %v803 = vadd.f32 %v492, %v802
        %v804 = vpop.f32.mrb[0].mxu0
        %805 = vmatprep.mubr.bf16.mxu0 %v706
        %806 = vmatmul.mubr.bf16.gmra.mrb[0].mxu0 %v598
        %v807 = vpop.f32.mrb[0].mxu0
        %v808 = vadd.f32 %v492, %v807
        %v809 = vpop.f32.mrb[0].mxu0
        %v810 = vpop.f32.mrb[0].mxu0
        %v811 = vadd.f32 %v492, %v810
        %v812 = vpop.f32.mrb[0].mxu0
        %813 = vmatprep.mubr.bf16.mxu0 %v709
        %814 = vmatmul.mubr.bf16.gmra.mrb[0].mxu0 %v600
        %v815 = vpop.f32.mrb[0].mxu0
        %v816 = vadd.f32 %v492, %v815
        %v817 = vpop.f32.mrb[0].mxu0
        %v818 = vpop.f32.mrb[0].mxu0
        %v819 = vadd.f32 %v492, %v818
        %v820 = vpop.f32.mrb[0].mxu0
        %821 = vmatprep.mubr.bf16.mxu0 %v712
        %822 = vmatmul.mubr.bf16.gmra.mrb[0].mxu0 %v602
        %v823 = vpop.f32.mrb[0].mxu0
        %v824 = vadd.f32 %v492, %v823
        %v825 = vpop.f32.mrb[0].mxu0
        %v826 = vpop.f32.mrb[0].mxu0
        %v827 = vadd.f32 %v492, %v826
        %v828 = vpop.f32.mrb[0].mxu0
        %829 = vmatprep.mubr.bf16.mxu0 %v715
        %830 = vmatmul.mubr.bf16.gmra.mrb[0].mxu0 %v604
        %v831 = vpop.f32.mrb[0].mxu0
        %v832 = vadd.f32 %v492, %v831
        %v833 = vpop.f32.mrb[0].mxu0
        %v834 = vpop.f32.mrb[0].mxu0
        %v835 = vadd.f32 %v492, %v834
        %v836 = vpop.f32.mrb[0].mxu0
        %837 = vmatprep.mubr.bf16.mxu0 %v718
        %838 = vmatmul.mubr.bf16.gmra.mrb[0].mxu0 %v606
        %v839 = vpop.f32.mrb[0].mxu0
        %v840 = vadd.f32 %v492, %v839
        %v841 = vpop.f32.mrb[0].mxu0
        %v842 = vpop.f32.mrb[0].mxu0
        %v843 = vadd.f32 %v492, %v842
        %v844 = vpop.f32.mrb[0].mxu0
        %845 = vmatprep.mubr.bf16.mxu0 %v721
        %846 = vmatmul.mubr.bf16.gmra.mrb[0].mxu0 %v608
        %v847 = vpop.f32.mrb[0].mxu0
        %v848 = vadd.f32 %v492, %v847
        %v849 = vpop.f32.mrb[0].mxu0
        %v850 = vpop.f32.mrb[0].mxu0
        %v851 = vadd.f32 %v492, %v850
        %v852 = vpop.f32.mrb[0].mxu0
        %853 = vmatprep.mubr.bf16.mxu0 %v724
        %854 = vmatmul.mubr.bf16.gmra.mrb[0].mxu0 %v610
        %v855 = vpop.f32.mrb[0].mxu0
        %v856 = vadd.f32 %v492, %v855
        %v857 = vpop.f32.mrb[0].mxu0
        %v858 = vpop.f32.mrb[0].mxu0
        %v859 = vadd.f32 %v492, %v858
        %v860 = vpop.f32.mrb[0].mxu0
        %861 = vmatprep.mubr.bf16.mxu0 %v727
        %862 = vmatmul.mubr.bf16.gmra.mrb[0].mxu0 %v612
        %v863 = vpop.f32.mrb[0].mxu0
        %v864 = vadd.f32 %v492, %v863
        %v865 = vpop.f32.mrb[0].mxu0
        %v866 = vpop.f32.mrb[0].mxu0
        %v867 = vadd.f32 %v492, %v866
        %v868 = vpop.f32.mrb[0].mxu0
        %869 = vmatprep.mubr.bf16.mxu0 %v730
        %870 = vmatmul.mubr.bf16.gmra.mrb[0].mxu0 %v614
        %v871 = vpop.f32.mrb[0].mxu0
        %v872 = vadd.f32 %v492, %v871
        %v873 = vpop.f32.mrb[0].mxu0
        %v874 = vpop.f32.mrb[0].mxu0
        %v875 = vadd.f32 %v492, %v874
        %v876 = vpop.f32.mrb[0].mxu0
        %877 = vmatprep.mubr.bf16.mxu0 %v733
        %878 = vmatmul.mubr.bf16.gmra.mrb[0].mxu0 %v616
        %v879 = vpop.f32.mrb[0].mxu0
        %v880 = vadd.f32 %v492, %v879
        %v881 = vpop.f32.mrb[0].mxu0
        %v882 = vpop.f32.mrb[0].mxu0
        %v883 = vadd.f32 %v492, %v882
        %v884 = vpop.f32.mrb[0].mxu0
        %885 = vmatprep.mubr.bf16.mxu0 %v736
        %886 = vmatmul.mubr.bf16.gmra.mrb[0].mxu0 %v618
        %v887 = vpop.f32.mrb[0].mxu0
        %v888 = vadd.f32 %v492, %v887
        %v889 = vpop.f32.mrb[0].mxu0
        %v890 = vpop.f32.mrb[0].mxu0
        %v891 = vadd.f32 %v492, %v890
        %v892 = vpop.f32.mrb[0].mxu0
        %893 = vmatprep.mubr.bf16.mxu0 %v739
        %894 = vmatmul.mubr.bf16.gmra.mrb[0].mxu0 %v620
        %v895 = vpop.f32.mrb[0].mxu0
        %v896 = vadd.f32 %v492, %v895
        %v897 = vpop.f32.mrb[0].mxu0
        %v898 = vpop.f32.mrb[0].mxu0
        %v899 = vadd.f32 %v492, %v898
        %v900 = vpop.f32.mrb[0].mxu0
        %901 = vdwg.mxu0
        %v902 = vld [vmem:[%s434] sm:$0xf]
        %v903 = vld [vmem:[%s2] sm:$0xf]
        %v904 = vld [vmem:[%s2 + $0x4] sm:$0xf]
        %v905 = vld [vmem:[%s2 + $0x8] sm:$0xf]
        %v906 = vld [vmem:[%s2 + $0xc] sm:$0xf]
        %v907 = vld [vmem:[%s2 + $0x10] sm:$0xf]
        %v908 = vld [vmem:[%s2 + $0x14] sm:$0xf]
        %v909 = vld [vmem:[%s2 + $0x18] sm:$0xf]
        %v910 = vld [vmem:[%s2 + $0x1c] sm:$0xf]
        %v911 = vld [vmem:[%s3] sm:$0x1]
        %v913 = vlaneseq
        %v914 = vshrl.u32 %v913, 7
        %v915 = vsub.s32 0, %v914
        %v916 = vrot.slane %v911, %v915
        %v926 = vunpack.c.l.b16 %v903
        %v927 = vunpack.c.l.b16 %v904
        %v928 = vunpack.c.l.b16 %v905
        %v929 = vunpack.c.l.b16 %v906
        %v930 = vunpack.c.l.b16 %v907
        %v931 = vunpack.c.l.b16 %v908
        %v932 = vunpack.c.l.b16 %v909
        %v933 = vunpack.c.l.b16 %v910
        %v934 = vpack.c.b16 %v927, %v926
        %v935 = vpack.c.b16 %v929, %v928
        %v936 = vpack.c.b16 %v931, %v930
        %v937 = vpack.c.b16 %v933, %v932
        %vm942 = vcmask 523264
        %v944 = vsel %vm942, %v902, 0
        %946 = vmatprep.subr.bf16.mxu0 0
        %947 = vmatpush1.bf16.msra.mxu0 %v934
        %948 = vmatprep.subr.bf16.mxu0 0
        %949 = vmatpush1.bf16.msra.mxu0 %v935
        %950 = vmatprep.subr.bf16.mxu0 0
        %951 = vmatpush1.bf16.msra.mxu0 %v936
        %952 = vmatprep.subr.bf16.mxu0 0
        %953 = vmatpush1.bf16.msra.mxu0 %v937
        %954 = vmatprep.subr.bf16.mxu0 0
        %955 = vmatpush1.bf16.msra.mxu0 0
        %956 = vmatprep.subr.bf16.mxu0 0
        %957 = vmatpush1.bf16.msra.mxu0 0
        %958 = vmatprep.subr.bf16.mxu0 0
        %959 = vmatpush1.bf16.msra.mxu0 0
        %960 = vmatprep.subr.bf16.mxu0 0
        %961 = vmatpush1.bf16.msra.mxu0 0
        %962 = vmatprep.subr.bf16.mxu0 0
        %963 = vmatpush1.bf16.msra.mxu0 0
        %964 = vmatprep.subr.bf16.mxu0 0
        %965 = vmatpush1.bf16.msra.mxu0 0
        %966 = vmatprep.subr.bf16.mxu0 0
        %967 = vmatpush1.bf16.msra.mxu0 0
        %968 = vmatprep.subr.bf16.mxu0 0
        %969 = vmatpush1.bf16.msra.mxu0 0
        %970 = vmatprep.subr.bf16.mxu0 0
        %971 = vmatpush1.bf16.msra.mxu0 0
        %972 = vmatprep.subr.bf16.mxu0 0
        %973 = vmatpush1.bf16.msra.mxu0 0
        %974 = vmatprep.subr.bf16.mxu0 0
        %975 = vmatpush1.bf16.msra.mxu0 0
        %976 = vmatprep.subr.bf16.mxu0 0
        %977 = vmatpush1.bf16.msra.mxu0 0
        %978 = vmatprep.mubr.bf16.mxu0 0
        %979 = vmatmul.mubr.bf16.gmra.mrb[0].mxu0 %v944
        %v980 = vpop.f32.mrb[0].mxu0
        %v981 = vadd.f32 %v916, %v980
        %v982 = vpop.f32.mrb[0].mxu0
        %v983 = vpop.f32.mrb[0].mxu0
        %v984 = vpop.f32.mrb[0].mxu0
        %985 = vdwg.mxu0
        %v986 = vld [vmem:[%s4] sm:$0xf]
        %v987 = vld [vmem:[%s4 + $0x4] sm:$0xf]
        %v988 = vld [vmem:[%s5] sm:$0x1]
        %v990 = vlaneseq
        %v991 = vshrl.u32 %v990, 7
        %v992 = vsub.s32 0, %v991
        %v993 = vrot.slane %v988, %v992
        %v997 = vunpack.c.l.b16 %v986
        %v998 = vunpack.c.l.b16 %v987
        %v999 = vpack.c.b16 %v998, %v997
        %v1002 = vsel %vm692, %v590, 0
        %v1005 = vsel %vm692, %v592, 0
        %v1008 = vsel %vm692, %v594, 0
        %v1011 = vsel %vm692, %v596, 0
        %v1014 = vsel %vm692, %v598, 0
        %v1017 = vsel %vm692, %v600, 0
        %v1020 = vsel %vm692, %v602, 0
        %v1023 = vsel %vm692, %v604, 0
        %v1026 = vsel %vm692, %v606, 0
        %v1029 = vsel %vm692, %v608, 0
        %v1032 = vsel %vm692, %v610, 0
        %v1035 = vsel %vm692, %v612, 0
        %v1038 = vsel %vm692, %v614, 0
        %v1041 = vsel %vm692, %v616, 0
        %v1044 = vsel %vm692, %v618, 0
        %v1047 = vsel %vm692, %v620, 0
        %1049 = vmatprep.subr.bf16.mxu0 0
        %1050 = vmatpush1.bf16.msra.mxu0 %v999
        %1051 = vmatprep.subr.bf16.mxu0 0
        %1052 = vmatpush1.bf16.msra.mxu0 0
        %1053 = vmatprep.subr.bf16.mxu0 0
        %1054 = vmatpush1.bf16.msra.mxu0 0
        %1055 = vmatprep.subr.bf16.mxu0 0
        %1056 = vmatpush1.bf16.msra.mxu0 0
        %1057 = vmatprep.subr.bf16.mxu0 0
        %1058 = vmatpush1.bf16.msra.mxu0 0
        %1059 = vmatprep.subr.bf16.mxu0 0
        %1060 = vmatpush1.bf16.msra.mxu0 0
        %1061 = vmatprep.subr.bf16.mxu0 0
        %1062 = vmatpush1.bf16.msra.mxu0 0
        %1063 = vmatprep.subr.bf16.mxu0 0
        %1064 = vmatpush1.bf16.msra.mxu0 0
        %1065 = vmatprep.subr.bf16.mxu0 0
        %1066 = vmatpush1.bf16.msra.mxu0 0
        %1067 = vmatprep.subr.bf16.mxu0 0
        %1068 = vmatpush1.bf16.msra.mxu0 0
        %1069 = vmatprep.subr.bf16.mxu0 0
        %1070 = vmatpush1.bf16.msra.mxu0 0
        %1071 = vmatprep.subr.bf16.mxu0 0
        %1072 = vmatpush1.bf16.msra.mxu0 0
        %1073 = vmatprep.subr.bf16.mxu0 0
        %1074 = vmatpush1.bf16.msra.mxu0 0
        %1075 = vmatprep.subr.bf16.mxu0 0
        %1076 = vmatpush1.bf16.msra.mxu0 0
        %1077 = vmatprep.subr.bf16.mxu0 0
        %1078 = vmatpush1.bf16.msra.mxu0 0
        %1079 = vmatprep.subr.bf16.mxu0 0
        %1080 = vmatpush1.bf16.msra.mxu0 0
        %1081 = vmatprep.mubr.bf16.mxu0 0
        %1082 = vmatmul.mubr.bf16.gmra.mrb[0].mxu0 %v1002
        %v1083 = vpop.f32.mrb[0].mxu0
        %v1084 = vadd.f32 %v993, %v1083
        %v1085 = vpop.f32.mrb[0].mxu0
        %v1086 = vpop.f32.mrb[0].mxu0
        %v1087 = vadd.f32 %v993, %v1086
        %v1088 = vpop.f32.mrb[0].mxu0
        %1089 = vmatprep.mubr.bf16.mxu0 0
        %1090 = vmatmul.mubr.bf16.gmra.mrb[0].mxu0 %v1005
        %v1091 = vpop.f32.mrb[0].mxu0
        %v1092 = vadd.f32 %v993, %v1091
        %v1093 = vpop.f32.mrb[0].mxu0
        %v1094 = vpop.f32.mrb[0].mxu0
        %v1095 = vadd.f32 %v993, %v1094
        %v1096 = vpop.f32.mrb[0].mxu0
        %1097 = vmatprep.mubr.bf16.mxu0 0
        %1098 = vmatmul.mubr.bf16.gmra.mrb[0].mxu0 %v1008
        %v1099 = vpop.f32.mrb[0].mxu0
        %v1100 = vadd.f32 %v993, %v1099
        %v1101 = vpop.f32.mrb[0].mxu0
        %v1102 = vpop.f32.mrb[0].mxu0
        %v1103 = vadd.f32 %v993, %v1102
        %v1104 = vpop.f32.mrb[0].mxu0
        %1105 = vmatprep.mubr.bf16.mxu0 0
        %1106 = vmatmul.mubr.bf16.gmra.mrb[0].mxu0 %v1011
        %v1107 = vpop.f32.mrb[0].mxu0
        %v1108 = vadd.f32 %v993, %v1107
        %v1109 = vpop.f32.mrb[0].mxu0
        %v1110 = vpop.f32.mrb[0].mxu0
        %v1111 = vadd.f32 %v993, %v1110
        %v1112 = vpop.f32.mrb[0].mxu0
        %1113 = vmatprep.mubr.bf16.mxu0 0
        %1114 = vmatmul.mubr.bf16.gmra.mrb[0].mxu0 %v1014
        %v1115 = vpop.f32.mrb[0].mxu0
        %v1116 = vadd.f32 %v993, %v1115
        %v1117 = vpop.f32.mrb[0].mxu0
        %v1118 = vpop.f32.mrb[0].mxu0
        %v1119 = vadd.f32 %v993, %v1118
        %v1120 = vpop.f32.mrb[0].mxu0
        %1121 = vmatprep.mubr.bf16.mxu0 0
        %1122 = vmatmul.mubr.bf16.gmra.mrb[0].mxu0 %v1017
        %v1123 = vpop.f32.mrb[0].mxu0
        %v1124 = vadd.f32 %v993, %v1123
        %v1125 = vpop.f32.mrb[0].mxu0
        %v1126 = vpop.f32.mrb[0].mxu0
        %v1127 = vadd.f32 %v993, %v1126
        %v1128 = vpop.f32.mrb[0].mxu0
        %1129 = vmatprep.mubr.bf16.mxu0 0
        %1130 = vmatmul.mubr.bf16.gmra.mrb[0].mxu0 %v1020
        %v1131 = vpop.f32.mrb[0].mxu0
        %v1132 = vadd.f32 %v993, %v1131
        %v1133 = vpop.f32.mrb[0].mxu0
        %v1134 = vpop.f32.mrb[0].mxu0
        %v1135 = vadd.f32 %v993, %v1134
        %v1136 = vpop.f32.mrb[0].mxu0
        %1137 = vmatprep.mubr.bf16.mxu0 0
        %1138 = vmatmul.mubr.bf16.gmra.mrb[0].mxu0 %v1023
        %v1139 = vpop.f32.mrb[0].mxu0
        %v1140 = vadd.f32 %v993, %v1139
        %v1141 = vpop.f32.mrb[0].mxu0
        %v1142 = vpop.f32.mrb[0].mxu0
        %v1143 = vadd.f32 %v993, %v1142
        %v1144 = vpop.f32.mrb[0].mxu0
        %1145 = vmatprep.mubr.bf16.mxu0 0
        %1146 = vmatmul.mubr.bf16.gmra.mrb[0].mxu0 %v1026
        %v1147 = vpop.f32.mrb[0].mxu0
        %v1148 = vadd.f32 %v993, %v1147
        %v1149 = vpop.f32.mrb[0].mxu0
        %v1150 = vpop.f32.mrb[0].mxu0
        %v1151 = vadd.f32 %v993, %v1150
        %v1152 = vpop.f32.mrb[0].mxu0
        %1153 = vmatprep.mubr.bf16.mxu0 0
        %1154 = vmatmul.mubr.bf16.gmra.mrb[0].mxu0 %v1029
        %v1155 = vpop.f32.mrb[0].mxu0
        %v1156 = vadd.f32 %v993, %v1155
        %v1157 = vpop.f32.mrb[0].mxu0
        %v1158 = vpop.f32.mrb[0].mxu0
        %v1159 = vadd.f32 %v993, %v1158
        %v1160 = vpop.f32.mrb[0].mxu0
        %1161 = vmatprep.mubr.bf16.mxu0 0
        %1162 = vmatmul.mubr.bf16.gmra.mrb[0].mxu0 %v1032
        %v1163 = vpop.f32.mrb[0].mxu0
        %v1164 = vadd.f32 %v993, %v1163
        %v1165 = vpop.f32.mrb[0].mxu0
        %v1166 = vpop.f32.mrb[0].mxu0
        %v1167 = vadd.f32 %v993, %v1166
        %v1168 = vpop.f32.mrb[0].mxu0
        %1169 = vmatprep.mubr.bf16.mxu0 0
        %1170 = vmatmul.mubr.bf16.gmra.mrb[0].mxu0 %v1035
        %v1171 = vpop.f32.mrb[0].mxu0
        %v1172 = vadd.f32 %v993, %v1171
        %v1173 = vpop.f32.mrb[0].mxu0
        %v1174 = vpop.f32.mrb[0].mxu0
        %v1175 = vadd.f32 %v993, %v1174
        %v1176 = vpop.f32.mrb[0].mxu0
        %1177 = vmatprep.mubr.bf16.mxu0 0
        %1178 = vmatmul.mubr.bf16.gmra.mrb[0].mxu0 %v1038
        %v1179 = vpop.f32.mrb[0].mxu0
        %v1180 = vadd.f32 %v993, %v1179
        %v1181 = vpop.f32.mrb[0].mxu0
        %v1182 = vpop.f32.mrb[0].mxu0
        %v1183 = vadd.f32 %v993, %v1182
        %v1184 = vpop.f32.mrb[0].mxu0
        %1185 = vmatprep.mubr.bf16.mxu0 0
        %1186 = vmatmul.mubr.bf16.gmra.mrb[0].mxu0 %v1041
        %v1187 = vpop.f32.mrb[0].mxu0
        %v1188 = vadd.f32 %v993, %v1187
        %v1189 = vpop.f32.mrb[0].mxu0
        %v1190 = vpop.f32.mrb[0].mxu0
        %v1191 = vadd.f32 %v993, %v1190
        %v1192 = vpop.f32.mrb[0].mxu0
        %1193 = vmatprep.mubr.bf16.mxu0 0
        %1194 = vmatmul.mubr.bf16.gmra.mrb[0].mxu0 %v1044
        %v1195 = vpop.f32.mrb[0].mxu0
        %v1196 = vadd.f32 %v993, %v1195
        %v1197 = vpop.f32.mrb[0].mxu0
        %v1198 = vpop.f32.mrb[0].mxu0
        %v1199 = vadd.f32 %v993, %v1198
        %v1200 = vpop.f32.mrb[0].mxu0
        %1201 = vmatprep.mubr.bf16.mxu0 0
        %1202 = vmatmul.mubr.bf16.gmra.mrb[0].mxu0 %v1047
        %v1203 = vpop.f32.mrb[0].mxu0
        %v1204 = vadd.f32 %v993, %v1203
        %v1205 = vpop.f32.mrb[0].mxu0
        %v1206 = vpop.f32.mrb[0].mxu0
        %v1207 = vadd.f32 %v993, %v1206
        %v1208 = vpop.f32.mrb[0].mxu0
        %1209 = vdwg.mxu0
        %v1210 = vpack.c.bf16 %v1087, %v1084
        %v1211 = vpack.c.bf16 %v1095, %v1092
        %v1212 = vpack.c.bf16 %v1103, %v1100
        %v1213 = vpack.c.bf16 %v1111, %v1108
        %v1214 = vpack.c.bf16 %v1119, %v1116
        %v1215 = vpack.c.bf16 %v1127, %v1124
        %v1216 = vpack.c.bf16 %v1135, %v1132
        %v1217 = vpack.c.bf16 %v1143, %v1140
        %v1218 = vpack.c.bf16 %v1151, %v1148
        %v1219 = vpack.c.bf16 %v1159, %v1156
        %v1220 = vpack.c.bf16 %v1167, %v1164
        %v1221 = vpack.c.bf16 %v1175, %v1172
        %v1222 = vpack.c.bf16 %v1183, %v1180
        %v1223 = vpack.c.bf16 %v1191, %v1188
        %v1224 = vpack.c.bf16 %v1199, %v1196
        %v1225 = vpack.c.bf16 %v1207, %v1204
        %v1226 = vpack.c.bf16 %v981, %v981
        %v1228 = vsel %vm692, %v1210, 0
        %v1231 = vsel %vm692, %v1211, 0
        %v1234 = vsel %vm692, %v1212, 0
        %v1237 = vsel %vm692, %v1213, 0
        %v1240 = vsel %vm692, %v1214, 0
        %v1243 = vsel %vm692, %v1215, 0
        %v1246 = vsel %vm692, %v1216, 0
        %v1249 = vsel %vm692, %v1217, 0
        %v1252 = vsel %vm692, %v1218, 0
        %v1255 = vsel %vm692, %v1219, 0
        %v1258 = vsel %vm692, %v1220, 0
        %v1261 = vsel %vm692, %v1221, 0
        %v1264 = vsel %vm692, %v1222, 0
        %v1267 = vsel %vm692, %v1223, 0
        %v1270 = vsel %vm692, %v1224, 0
        %v1273 = vsel %vm692, %v1225, 0
        %v1276 = vsel %vm692, %v1226, 0
        %1278 = vmatprep.subr.bf16.mxu0 0
        %1279 = vmatpush1.bf16.xpose.msra.mxu0 %v1276
        %1280 = vmatprep.subr.bf16.mxu0 0
        %1281 = vmatpush1.bf16.xpose.msra.mxu0 0
        %1282 = vmatprep.subr.bf16.mxu0 0
        %1283 = vmatpush1.bf16.xpose.msra.mxu0 0
        %1284 = vmatprep.subr.bf16.mxu0 0
        %1285 = vmatpush1.bf16.xpose.msra.mxu0 0
        %1286 = vmatprep.subr.bf16.mxu0 0
        %1287 = vmatpush1.bf16.xpose.msra.mxu0 0
        %1288 = vmatprep.subr.bf16.mxu0 0
        %1289 = vmatpush1.bf16.xpose.msra.mxu0 0
        %1290 = vmatprep.subr.bf16.mxu0 0
        %1291 = vmatpush1.bf16.xpose.msra.mxu0 0
        %1292 = vmatprep.subr.bf16.mxu0 0
        %1293 = vmatpush1.bf16.xpose.msra.mxu0 0
        %1294 = vmatprep.subr.bf16.mxu0 0
        %1295 = vmatpush1.bf16.xpose.msra.mxu0 0
        %1296 = vmatprep.subr.bf16.mxu0 0
        %1297 = vmatpush1.bf16.xpose.msra.mxu0 0
        %1298 = vmatprep.subr.bf16.mxu0 0
        %1299 = vmatpush1.bf16.xpose.msra.mxu0 0
        %1300 = vmatprep.subr.bf16.mxu0 0
        %1301 = vmatpush1.bf16.xpose.msra.mxu0 0
        %1302 = vmatprep.subr.bf16.mxu0 0
        %1303 = vmatpush1.bf16.xpose.msra.mxu0 0
        %1304 = vmatprep.subr.bf16.mxu0 0
        %1305 = vmatpush1.bf16.xpose.msra.mxu0 0
        %1306 = vmatprep.subr.bf16.mxu0 0
        %1307 = vmatpush1.bf16.xpose.msra.mxu0 0
        %1308 = vmatprep.subr.bf16.mxu0 0
        %1309 = vmatpush1.bf16.xpose.msra.mxu0 0
        %1310 = vmatprep.mubr.bf16.mxu0 0
        %1311 = vmatmul.mubr.bf16.gmra.mrb[0].mxu0 %v1228
        %v1312 = vpop.f32.mrb[0].mxu0
        %v1313 = vadd.f32 0.0, %v1312
        %v1314 = vpop.f32.mrb[0].mxu0
        %v1315 = vpop.f32.mrb[0].mxu0
        %v1316 = vadd.f32 0.0, %v1315
        %v1317 = vpop.f32.mrb[0].mxu0
        %1318 = vmatprep.mubr.bf16.mxu0 0
        %1319 = vmatmul.mubr.bf16.gmra.mrb[0].mxu0 %v1231
        %v1320 = vpop.f32.mrb[0].mxu0
        %v1321 = vadd.f32 0.0, %v1320
        %v1322 = vpop.f32.mrb[0].mxu0
        %v1323 = vpop.f32.mrb[0].mxu0
        %v1324 = vadd.f32 0.0, %v1323
        %v1325 = vpop.f32.mrb[0].mxu0
        %1326 = vmatprep.mubr.bf16.mxu0 0
        %1327 = vmatmul.mubr.bf16.gmra.mrb[0].mxu0 %v1234
        %v1328 = vpop.f32.mrb[0].mxu0
        %v1329 = vadd.f32 0.0, %v1328
        %v1330 = vpop.f32.mrb[0].mxu0
        %v1331 = vpop.f32.mrb[0].mxu0
        %v1332 = vadd.f32 0.0, %v1331
        %v1333 = vpop.f32.mrb[0].mxu0
        %1334 = vmatprep.mubr.bf16.mxu0 0
        %1335 = vmatmul.mubr.bf16.gmra.mrb[0].mxu0 %v1237
        %v1336 = vpop.f32.mrb[0].mxu0
        %v1337 = vadd.f32 0.0, %v1336
        %v1338 = vpop.f32.mrb[0].mxu0
        %v1339 = vpop.f32.mrb[0].mxu0
        %v1340 = vadd.f32 0.0, %v1339
        %v1341 = vpop.f32.mrb[0].mxu0
        %1342 = vmatprep.mubr.bf16.mxu0 0
        %1343 = vmatmul.mubr.bf16.gmra.mrb[0].mxu0 %v1240
        %v1344 = vpop.f32.mrb[0].mxu0
        %v1345 = vadd.f32 0.0, %v1344
        %v1346 = vpop.f32.mrb[0].mxu0
        %v1347 = vpop.f32.mrb[0].mxu0
        %v1348 = vadd.f32 0.0, %v1347
        %v1349 = vpop.f32.mrb[0].mxu0
        %1350 = vmatprep.mubr.bf16.mxu0 0
        %1351 = vmatmul.mubr.bf16.gmra.mrb[0].mxu0 %v1243
        %v1352 = vpop.f32.mrb[0].mxu0
        %v1353 = vadd.f32 0.0, %v1352
        %v1354 = vpop.f32.mrb[0].mxu0
        %v1355 = vpop.f32.mrb[0].mxu0
        %v1356 = vadd.f32 0.0, %v1355
        %v1357 = vpop.f32.mrb[0].mxu0
        %1358 = vmatprep.mubr.bf16.mxu0 0
        %1359 = vmatmul.mubr.bf16.gmra.mrb[0].mxu0 %v1246
        %v1360 = vpop.f32.mrb[0].mxu0
        %v1361 = vadd.f32 0.0, %v1360
        %v1362 = vpop.f32.mrb[0].mxu0
        %v1363 = vpop.f32.mrb[0].mxu0
        %v1364 = vadd.f32 0.0, %v1363
        %v1365 = vpop.f32.mrb[0].mxu0
        %1366 = vmatprep.mubr.bf16.mxu0 0
        %1367 = vmatmul.mubr.bf16.gmra.mrb[0].mxu0 %v1249
        %v1368 = vpop.f32.mrb[0].mxu0
        %v1369 = vadd.f32 0.0, %v1368
        %v1370 = vpop.f32.mrb[0].mxu0
        %v1371 = vpop.f32.mrb[0].mxu0
        %v1372 = vadd.f32 0.0, %v1371
        %v1373 = vpop.f32.mrb[0].mxu0
        %1374 = vmatprep.mubr.bf16.mxu0 0
        %1375 = vmatmul.mubr.bf16.gmra.mrb[0].mxu0 %v1252
        %v1376 = vpop.f32.mrb[0].mxu0
        %v1377 = vadd.f32 0.0, %v1376
        %v1378 = vpop.f32.mrb[0].mxu0
        %v1379 = vpop.f32.mrb[0].mxu0
        %v1380 = vadd.f32 0.0, %v1379
        %v1381 = vpop.f32.mrb[0].mxu0
        %1382 = vmatprep.mubr.bf16.mxu0 0
        %1383 = vmatmul.mubr.bf16.gmra.mrb[0].mxu0 %v1255
        %v1384 = vpop.f32.mrb[0].mxu0
        %v1385 = vadd.f32 0.0, %v1384
        %v1386 = vpop.f32.mrb[0].mxu0
        %v1387 = vpop.f32.mrb[0].mxu0
        %v1388 = vadd.f32 0.0, %v1387
        %v1389 = vpop.f32.mrb[0].mxu0
        %1390 = vmatprep.mubr.bf16.mxu0 0
        %1391 = vmatmul.mubr.bf16.gmra.mrb[0].mxu0 %v1258
        %v1392 = vpop.f32.mrb[0].mxu0
        %v1393 = vadd.f32 0.0, %v1392
        %v1394 = vpop.f32.mrb[0].mxu0
        %v1395 = vpop.f32.mrb[0].mxu0
        %v1396 = vadd.f32 0.0, %v1395
        %v1397 = vpop.f32.mrb[0].mxu0
        %1398 = vmatprep.mubr.bf16.mxu0 0
        %1399 = vmatmul.mubr.bf16.gmra.mrb[0].mxu0 %v1261
        %v1400 = vpop.f32.mrb[0].mxu0
        %v1401 = vadd.f32 0.0, %v1400
        %v1402 = vpop.f32.mrb[0].mxu0
        %v1403 = vpop.f32.mrb[0].mxu0
        %v1404 = vadd.f32 0.0, %v1403
        %v1405 = vpop.f32.mrb[0].mxu0
        %1406 = vmatprep.mubr.bf16.mxu0 0
        %1407 = vmatmul.mubr.bf16.gmra.mrb[0].mxu0 %v1264
        %v1408 = vpop.f32.mrb[0].mxu0
        %v1409 = vadd.f32 0.0, %v1408
        %v1410 = vpop.f32.mrb[0].mxu0
        %v1411 = vpop.f32.mrb[0].mxu0
        %v1412 = vadd.f32 0.0, %v1411
        %v1413 = vpop.f32.mrb[0].mxu0
        %1414 = vmatprep.mubr.bf16.mxu0 0
        %1415 = vmatmul.mubr.bf16.gmra.mrb[0].mxu0 %v1267
        %v1416 = vpop.f32.mrb[0].mxu0
        %v1417 = vadd.f32 0.0, %v1416
        %v1418 = vpop.f32.mrb[0].mxu0
        %v1419 = vpop.f32.mrb[0].mxu0
        %v1420 = vadd.f32 0.0, %v1419
        %v1421 = vpop.f32.mrb[0].mxu0
        %1422 = vmatprep.mubr.bf16.mxu0 0
        %1423 = vmatmul.mubr.bf16.gmra.mrb[0].mxu0 %v1270
        %v1424 = vpop.f32.mrb[0].mxu0
        %v1425 = vadd.f32 0.0, %v1424
        %v1426 = vpop.f32.mrb[0].mxu0
        %v1427 = vpop.f32.mrb[0].mxu0
        %v1428 = vadd.f32 0.0, %v1427
        %v1429 = vpop.f32.mrb[0].mxu0
        %1430 = vmatprep.mubr.bf16.mxu0 0
        %1431 = vmatmul.mubr.bf16.gmra.mrb[0].mxu0 %v1273
        %v1432 = vpop.f32.mrb[0].mxu0
        %v1433 = vadd.f32 0.0, %v1432
        %v1434 = vpop.f32.mrb[0].mxu0
        %v1435 = vpop.f32.mrb[0].mxu0
        %v1436 = vadd.f32 0.0, %v1435
        %v1437 = vpop.f32.mrb[0].mxu0
        %1438 = vdwg.mxu0
        %vm1439 = vcmask 64512
        %v1440 = vsel %vm1439, %v1313, -inf
        %1441 = vmax.xlane.f32.xlu0 %v1440
        %v1442 = vpop.xlane.xlu0 %1441
        %v1443 = vsel %vm1439, %v1316, -inf
        %1444 = vmax.xlane.f32.xlu0 %v1443
        %v1445 = vpop.xlane.xlu0 %1444
        %v1446 = vsel %vm1439, %v1321, -inf
        %1447 = vmax.xlane.f32.xlu0 %v1446
        %v1448 = vpop.xlane.xlu0 %1447
        %v1449 = vsel %vm1439, %v1324, -inf
        %1450 = vmax.xlane.f32.xlu0 %v1449
        %v1451 = vpop.xlane.xlu0 %1450
        %v1452 = vsel %vm1439, %v1329, -inf
        %1453 = vmax.xlane.f32.xlu0 %v1452
        %v1454 = vpop.xlane.xlu0 %1453
        %v1455 = vsel %vm1439, %v1332, -inf
        %1456 = vmax.xlane.f32.xlu0 %v1455
        %v1457 = vpop.xlane.xlu0 %1456
        %v1458 = vsel %vm1439, %v1337, -inf
        %1459 = vmax.xlane.f32.xlu0 %v1458
        %v1460 = vpop.xlane.xlu0 %1459
        %v1461 = vsel %vm1439, %v1340, -inf
        %1462 = vmax.xlane.f32.xlu0 %v1461
        %v1463 = vpop.xlane.xlu0 %1462
        %v1464 = vsel %vm1439, %v1345, -inf
        %1465 = vmax.xlane.f32.xlu0 %v1464
        %v1466 = vpop.xlane.xlu0 %1465
        %v1467 = vsel %vm1439, %v1348, -inf
        %1468 = vmax.xlane.f32.xlu0 %v1467
        %v1469 = vpop.xlane.xlu0 %1468
        %v1470 = vsel %vm1439, %v1353, -inf
        %1471 = vmax.xlane.f32.xlu0 %v1470
        %v1472 = vpop.xlane.xlu0 %1471
        %v1473 = vsel %vm1439, %v1356, -inf
        %1474 = vmax.xlane.f32.xlu0 %v1473
        %v1475 = vpop.xlane.xlu0 %1474
        %v1476 = vsel %vm1439, %v1361, -inf
        %1477 = vmax.xlane.f32.xlu0 %v1476
        %v1478 = vpop.xlane.xlu0 %1477
        %v1479 = vsel %vm1439, %v1364, -inf
        %1480 = vmax.xlane.f32.xlu0 %v1479
        %v1481 = vpop.xlane.xlu0 %1480
        %v1482 = vsel %vm1439, %v1369, -inf
        %1483 = vmax.xlane.f32.xlu0 %v1482
        %v1484 = vpop.xlane.xlu0 %1483
        %v1485 = vsel %vm1439, %v1372, -inf
        %1486 = vmax.xlane.f32.xlu0 %v1485
        %v1487 = vpop.xlane.xlu0 %1486
        %v1488 = vsel %vm1439, %v1377, -inf
        %1489 = vmax.xlane.f32.xlu0 %v1488
        %v1490 = vpop.xlane.xlu0 %1489
        %v1491 = vsel %vm1439, %v1380, -inf
        %1492 = vmax.xlane.f32.xlu0 %v1491
        %v1493 = vpop.xlane.xlu0 %1492
        %v1494 = vsel %vm1439, %v1385, -inf
        %1495 = vmax.xlane.f32.xlu0 %v1494
        %v1496 = vpop.xlane.xlu0 %1495
        %v1497 = vsel %vm1439, %v1388, -inf
        %1498 = vmax.xlane.f32.xlu0 %v1497
        %v1499 = vpop.xlane.xlu0 %1498
        %v1500 = vsel %vm1439, %v1393, -inf
        %1501 = vmax.xlane.f32.xlu0 %v1500
        %v1502 = vpop.xlane.xlu0 %1501
        %v1503 = vsel %vm1439, %v1396, -inf
        %1504 = vmax.xlane.f32.xlu0 %v1503
        %v1505 = vpop.xlane.xlu0 %1504
        %v1506 = vsel %vm1439, %v1401, -inf
        %1507 = vmax.xlane.f32.xlu0 %v1506
        %v1508 = vpop.xlane.xlu0 %1507
        %v1509 = vsel %vm1439, %v1404, -inf
        %1510 = vmax.xlane.f32.xlu0 %v1509
        %v1511 = vpop.xlane.xlu0 %1510
        %v1512 = vsel %vm1439, %v1409, -inf
        %1513 = vmax.xlane.f32.xlu0 %v1512
        %v1514 = vpop.xlane.xlu0 %1513
        %v1515 = vsel %vm1439, %v1412, -inf
        %1516 = vmax.xlane.f32.xlu0 %v1515
        %v1517 = vpop.xlane.xlu0 %1516
        %v1518 = vsel %vm1439, %v1417, -inf
        %1519 = vmax.xlane.f32.xlu0 %v1518
        %v1520 = vpop.xlane.xlu0 %1519
        %v1521 = vsel %vm1439, %v1420, -inf
        %1522 = vmax.xlane.f32.xlu0 %v1521
        %v1523 = vpop.xlane.xlu0 %1522
        %v1524 = vsel %vm1439, %v1425, -inf
        %1525 = vmax.xlane.f32.xlu0 %v1524
        %v1526 = vpop.xlane.xlu0 %1525
        %v1527 = vsel %vm1439, %v1428, -inf
        %1528 = vmax.xlane.f32.xlu0 %v1527
        %v1529 = vpop.xlane.xlu0 %1528
        %v1530 = vsel %vm1439, %v1433, -inf
        %1531 = vmax.xlane.f32.xlu0 %v1530
        %v1532 = vpop.xlane.xlu0 %1531
        %v1533 = vsel %vm1439, %v1436, -inf
        %1534 = vmax.xlane.f32.xlu0 %v1533
        %v1535 = vpop.xlane.xlu0 %1534
        %1552 = vrot.lane.b32.xlu0 %v1210, 112
        %v1553 = vpop.permute.xlu0 %1552
        %1554 = vrot.lane.b32.xlu0 %v1211, 112
        %v1555 = vpop.permute.xlu0 %1554
        %1556 = vrot.lane.b32.xlu0 %v1212, 112
        %v1557 = vpop.permute.xlu0 %1556
        %1558 = vrot.lane.b32.xlu0 %v1213, 112
        %v1559 = vpop.permute.xlu0 %1558
        %1560 = vrot.lane.b32.xlu0 %v1214, 112
        %v1561 = vpop.permute.xlu0 %1560
        %1562 = vrot.lane.b32.xlu0 %v1215, 112
        %v1563 = vpop.permute.xlu0 %1562
        %1564 = vrot.lane.b32.xlu0 %v1216, 112
        %v1565 = vpop.permute.xlu0 %1564
        %1566 = vrot.lane.b32.xlu0 %v1217, 112
        %v1567 = vpop.permute.xlu0 %1566
        %1568 = vrot.lane.b32.xlu0 %v1218, 112
        %v1569 = vpop.permute.xlu0 %1568
        %1570 = vrot.lane.b32.xlu0 %v1219, 112
        %v1571 = vpop.permute.xlu0 %1570
        %1572 = vrot.lane.b32.xlu0 %v1220, 112
        %v1573 = vpop.permute.xlu0 %1572
        %1574 = vrot.lane.b32.xlu0 %v1221, 112
        %v1575 = vpop.permute.xlu0 %1574
        %1576 = vrot.lane.b32.xlu0 %v1222, 112
        %v1577 = vpop.permute.xlu0 %1576
        %1578 = vrot.lane.b32.xlu0 %v1223, 112
        %v1579 = vpop.permute.xlu0 %1578
        %1580 = vrot.lane.b32.xlu0 %v1224, 112
        %v1581 = vpop.permute.xlu0 %1580
        %1582 = vrot.lane.b32.xlu0 %v1225, 112
        %v1583 = vpop.permute.xlu0 %1582
        %1585 = vrot.lane.b32.xlu0 %v1226, 112
        %v1586 = vpop.permute.xlu0 %1585
        %v1588 = vsel %vm692, %v1553, 0
        %v1591 = vsel %vm692, %v1555, 0
        %v1594 = vsel %vm692, %v1557, 0
        %v1597 = vsel %vm692, %v1559, 0
        %v1600 = vsel %vm692, %v1561, 0
        %v1603 = vsel %vm692, %v1563, 0
        %v1606 = vsel %vm692, %v1565, 0
        %v1609 = vsel %vm692, %v1567, 0
        %v1612 = vsel %vm692, %v1569, 0
        %v1615 = vsel %vm692, %v1571, 0
        %v1618 = vsel %vm692, %v1573, 0
        %v1621 = vsel %vm692, %v1575, 0
        %v1624 = vsel %vm692, %v1577, 0
        %v1627 = vsel %vm692, %v1579, 0
        %v1630 = vsel %vm692, %v1581, 0
        %v1633 = vsel %vm692, %v1583, 0
        %v1636 = vsel %vm692, %v1586, 0
        %1638 = vmatprep.subr.bf16.mxu0 0
        %1639 = vmatpush1.bf16.xpose.msra.mxu0 %v1636
        %1640 = vmatprep.subr.bf16.mxu0 0
        %1641 = vmatpush1.bf16.xpose.msra.mxu0 0
        %1642 = vmatprep.subr.bf16.mxu0 0
        %1643 = vmatpush1.bf16.xpose.msra.mxu0 0
        %1644 = vmatprep.subr.bf16.mxu0 0
        %1645 = vmatpush1.bf16.xpose.msra.mxu0 0
        %1646 = vmatprep.subr.bf16.mxu0 0
        %1647 = vmatpush1.bf16.xpose.msra.mxu0 0
        %1648 = vmatprep.subr.bf16.mxu0 0
        %1649 = vmatpush1.bf16.xpose.msra.mxu0 0
        %1650 = vmatprep.subr.bf16.mxu0 0
        %1651 = vmatpush1.bf16.xpose.msra.mxu0 0
        %1652 = vmatprep.subr.bf16.mxu0 0
        %1653 = vmatpush1.bf16.xpose.msra.mxu0 0
        %1654 = vmatprep.subr.bf16.mxu0 0
        %1655 = vmatpush1.bf16.xpose.msra.mxu0 0
        %1656 = vmatprep.subr.bf16.mxu0 0
        %1657 = vmatpush1.bf16.xpose.msra.mxu0 0
        %1658 = vmatprep.subr.bf16.mxu0 0
        %1659 = vmatpush1.bf16.xpose.msra.mxu0 0
        %1660 = vmatprep.subr.bf16.mxu0 0
        %1661 = vmatpush1.bf16.xpose.msra.mxu0 0
        %1662 = vmatprep.subr.bf16.mxu0 0
        %1663 = vmatpush1.bf16.xpose.msra.mxu0 0
        %1664 = vmatprep.subr.bf16.mxu0 0
        %1665 = vmatpush1.bf16.xpose.msra.mxu0 0
        %1666 = vmatprep.subr.bf16.mxu0 0
        %1667 = vmatpush1.bf16.xpose.msra.mxu0 0
        %1668 = vmatprep.subr.bf16.mxu0 0
        %1669 = vmatpush1.bf16.xpose.msra.mxu0 0
        %1670 = vmatprep.mubr.bf16.mxu0 0
        %1671 = vmatmul.mubr.bf16.gmra.mrb[0].mxu0 %v1588
        %v1672 = vpop.f32.mrb[0].mxu0
        %v1673 = vadd.f32 0.0, %v1672
        %v1674 = vpop.f32.mrb[0].mxu0
        %v1675 = vpop.f32.mrb[0].mxu0
        %v1676 = vadd.f32 0.0, %v1675
        %v1677 = vpop.f32.mrb[0].mxu0
        %1678 = vmatprep.mubr.bf16.mxu0 0
        %1679 = vmatmul.mubr.bf16.gmra.mrb[0].mxu0 %v1591
        %v1680 = vpop.f32.mrb[0].mxu0
        %v1681 = vadd.f32 0.0, %v1680
        %v1682 = vpop.f32.mrb[0].mxu0
        %v1683 = vpop.f32.mrb[0].mxu0
        %v1684 = vadd.f32 0.0, %v1683
        %v1685 = vpop.f32.mrb[0].mxu0
        %1686 = vmatprep.mubr.bf16.mxu0 0
        %1687 = vmatmul.mubr.bf16.gmra.mrb[0].mxu0 %v1594
        %v1688 = vpop.f32.mrb[0].mxu0
        %v1689 = vadd.f32 0.0, %v1688
        %v1690 = vpop.f32.mrb[0].mxu0
        %v1691 = vpop.f32.mrb[0].mxu0
        %v1692 = vadd.f32 0.0, %v1691
        %v1693 = vpop.f32.mrb[0].mxu0
        %1694 = vmatprep.mubr.bf16.mxu0 0
        %1695 = vmatmul.mubr.bf16.gmra.mrb[0].mxu0 %v1597
        %v1696 = vpop.f32.mrb[0].mxu0
        %v1697 = vadd.f32 0.0, %v1696
        %v1698 = vpop.f32.mrb[0].mxu0
        %v1699 = vpop.f32.mrb[0].mxu0
        %v1700 = vadd.f32 0.0, %v1699
        %v1701 = vpop.f32.mrb[0].mxu0
        %1702 = vmatprep.mubr.bf16.mxu0 0
        %1703 = vmatmul.mubr.bf16.gmra.mrb[0].mxu0 %v1600
        %v1704 = vpop.f32.mrb[0].mxu0
        %v1705 = vadd.f32 0.0, %v1704
        %v1706 = vpop.f32.mrb[0].mxu0
        %v1707 = vpop.f32.mrb[0].mxu0
        %v1708 = vadd.f32 0.0, %v1707
        %v1709 = vpop.f32.mrb[0].mxu0
        %1710 = vmatprep.mubr.bf16.mxu0 0
        %1711 = vmatmul.mubr.bf16.gmra.mrb[0].mxu0 %v1603
        %v1712 = vpop.f32.mrb[0].mxu0
        %v1713 = vadd.f32 0.0, %v1712
        %v1714 = vpop.f32.mrb[0].mxu0
        %v1715 = vpop.f32.mrb[0].mxu0
        %v1716 = vadd.f32 0.0, %v1715
        %v1717 = vpop.f32.mrb[0].mxu0
        %1718 = vmatprep.mubr.bf16.mxu0 0
        %1719 = vmatmul.mubr.bf16.gmra.mrb[0].mxu0 %v1606
        %v1720 = vpop.f32.mrb[0].mxu0
        %v1721 = vadd.f32 0.0, %v1720
        %v1722 = vpop.f32.mrb[0].mxu0
        %v1723 = vpop.f32.mrb[0].mxu0
        %v1724 = vadd.f32 0.0, %v1723
        %v1725 = vpop.f32.mrb[0].mxu0
        %1726 = vmatprep.mubr.bf16.mxu0 0
        %1727 = vmatmul.mubr.bf16.gmra.mrb[0].mxu0 %v1609
        %v1728 = vpop.f32.mrb[0].mxu0
        %v1729 = vadd.f32 0.0, %v1728
        %v1730 = vpop.f32.mrb[0].mxu0
        %v1731 = vpop.f32.mrb[0].mxu0
        %v1732 = vadd.f32 0.0, %v1731
        %v1733 = vpop.f32.mrb[0].mxu0
        %1734 = vmatprep.mubr.bf16.mxu0 0
        %1735 = vmatmul.mubr.bf16.gmra.mrb[0].mxu0 %v1612
        %v1736 = vpop.f32.mrb[0].mxu0
        %v1737 = vadd.f32 0.0, %v1736
        %v1738 = vpop.f32.mrb[0].mxu0
        %v1739 = vpop.f32.mrb[0].mxu0
        %v1740 = vadd.f32 0.0, %v1739
        %v1741 = vpop.f32.mrb[0].mxu0
        %1742 = vmatprep.mubr.bf16.mxu0 0
        %1743 = vmatmul.mubr.bf16.gmra.mrb[0].mxu0 %v1615
        %v1744 = vpop.f32.mrb[0].mxu0
        %v1745 = vadd.f32 0.0, %v1744
        %v1746 = vpop.f32.mrb[0].mxu0
        %v1747 = vpop.f32.mrb[0].mxu0
        %v1748 = vadd.f32 0.0, %v1747
        %v1749 = vpop.f32.mrb[0].mxu0
        %1750 = vmatprep.mubr.bf16.mxu0 0
        %1751 = vmatmul.mubr.bf16.gmra.mrb[0].mxu0 %v1618
        %v1752 = vpop.f32.mrb[0].mxu0
        %v1753 = vadd.f32 0.0, %v1752
        %v1754 = vpop.f32.mrb[0].mxu0
        %v1755 = vpop.f32.mrb[0].mxu0
        %v1756 = vadd.f32 0.0, %v1755
        %v1757 = vpop.f32.mrb[0].mxu0
        %1758 = vmatprep.mubr.bf16.mxu0 0
        %1759 = vmatmul.mubr.bf16.gmra.mrb[0].mxu0 %v1621
        %v1760 = vpop.f32.mrb[0].mxu0
        %v1761 = vadd.f32 0.0, %v1760
        %v1762 = vpop.f32.mrb[0].mxu0
        %v1763 = vpop.f32.mrb[0].mxu0
        %v1764 = vadd.f32 0.0, %v1763
        %v1765 = vpop.f32.mrb[0].mxu0
        %1766 = vmatprep.mubr.bf16.mxu0 0
        %1767 = vmatmul.mubr.bf16.gmra.mrb[0].mxu0 %v1624
        %v1768 = vpop.f32.mrb[0].mxu0
        %v1769 = vadd.f32 0.0, %v1768
        %v1770 = vpop.f32.mrb[0].mxu0
        %v1771 = vpop.f32.mrb[0].mxu0
        %v1772 = vadd.f32 0.0, %v1771
        %v1773 = vpop.f32.mrb[0].mxu0
        %1774 = vmatprep.mubr.bf16.mxu0 0
        %1775 = vmatmul.mubr.bf16.gmra.mrb[0].mxu0 %v1627
        %v1776 = vpop.f32.mrb[0].mxu0
        %v1777 = vadd.f32 0.0, %v1776
        %v1778 = vpop.f32.mrb[0].mxu0
        %v1779 = vpop.f32.mrb[0].mxu0
        %v1780 = vadd.f32 0.0, %v1779
        %v1781 = vpop.f32.mrb[0].mxu0
        %1782 = vmatprep.mubr.bf16.mxu0 0
        %1783 = vmatmul.mubr.bf16.gmra.mrb[0].mxu0 %v1630
        %v1784 = vpop.f32.mrb[0].mxu0
        %v1785 = vadd.f32 0.0, %v1784
        %v1786 = vpop.f32.mrb[0].mxu0
        %v1787 = vpop.f32.mrb[0].mxu0
        %v1788 = vadd.f32 0.0, %v1787
        %v1789 = vpop.f32.mrb[0].mxu0
        %1790 = vmatprep.mubr.bf16.mxu0 0
        %1791 = vmatmul.mubr.bf16.gmra.mrb[0].mxu0 %v1633
        %v1792 = vpop.f32.mrb[0].mxu0
        %v1793 = vadd.f32 0.0, %v1792
        %v1794 = vpop.f32.mrb[0].mxu0
        %v1795 = vpop.f32.mrb[0].mxu0
        %v1796 = vadd.f32 0.0, %v1795
        %v1797 = vpop.f32.mrb[0].mxu0
        %1798 = vdwg.mxu0
        %v1799 = vsel %vm1439, %v1673, -inf
        %1800 = vmax.xlane.f32.xlu0 %v1799
        %v1801 = vpop.xlane.xlu0 %1800
        %v1802 = vsel %vm1439, %v1676, -inf
        %1803 = vmax.xlane.f32.xlu0 %v1802
        %v1804 = vpop.xlane.xlu0 %1803
        %v1805 = vsel %vm1439, %v1681, -inf
        %1806 = vmax.xlane.f32.xlu0 %v1805
        %v1807 = vpop.xlane.xlu0 %1806
        %v1808 = vsel %vm1439, %v1684, -inf
        %1809 = vmax.xlane.f32.xlu0 %v1808
        %v1810 = vpop.xlane.xlu0 %1809
        %v1811 = vsel %vm1439, %v1689, -inf
        %1812 = vmax.xlane.f32.xlu0 %v1811
        %v1813 = vpop.xlane.xlu0 %1812
        %v1814 = vsel %vm1439, %v1692, -inf
        %1815 = vmax.xlane.f32.xlu0 %v1814
        %v1816 = vpop.xlane.xlu0 %1815
        %v1817 = vsel %vm1439, %v1697, -inf
        %1818 = vmax.xlane.f32.xlu0 %v1817
        %v1819 = vpop.xlane.xlu0 %1818
        %v1820 = vsel %vm1439, %v1700, -inf
        %1821 = vmax.xlane.f32.xlu0 %v1820
        %v1822 = vpop.xlane.xlu0 %1821
        %v1823 = vsel %vm1439, %v1705, -inf
        %1824 = vmax.xlane.f32.xlu0 %v1823
        %v1825 = vpop.xlane.xlu0 %1824
        %v1826 = vsel %vm1439, %v1708, -inf
        %1827 = vmax.xlane.f32.xlu0 %v1826
        %v1828 = vpop.xlane.xlu0 %1827
        %v1829 = vsel %vm1439, %v1713, -inf
        %1830 = vmax.xlane.f32.xlu0 %v1829
        %v1831 = vpop.xlane.xlu0 %1830
        %v1832 = vsel %vm1439, %v1716, -inf
        %1833 = vmax.xlane.f32.xlu0 %v1832
        %v1834 = vpop.xlane.xlu0 %1833
        %v1835 = vsel %vm1439, %v1721, -inf
        %1836 = vmax.xlane.f32.xlu0 %v1835
        %v1837 = vpop.xlane.xlu0 %1836
        %v1838 = vsel %vm1439, %v1724, -inf
        %1839 = vmax.xlane.f32.xlu0 %v1838
        %v1840 = vpop.xlane.xlu0 %1839
        %v1841 = vsel %vm1439, %v1729, -inf
        %1842 = vmax.xlane.f32.xlu0 %v1841
        %v1843 = vpop.xlane.xlu0 %1842
        %v1844 = vsel %vm1439, %v1732, -inf
        %1845 = vmax.xlane.f32.xlu0 %v1844
        %v1846 = vpop.xlane.xlu0 %1845
        %v1847 = vsel %vm1439, %v1737, -inf
        %1848 = vmax.xlane.f32.xlu0 %v1847
        %v1849 = vpop.xlane.xlu0 %1848
        %v1850 = vsel %vm1439, %v1740, -inf
        %1851 = vmax.xlane.f32.xlu0 %v1850
        %v1852 = vpop.xlane.xlu0 %1851
        %v1853 = vsel %vm1439, %v1745, -inf
        %1854 = vmax.xlane.f32.xlu0 %v1853
        %v1855 = vpop.xlane.xlu0 %1854
        %v1856 = vsel %vm1439, %v1748, -inf
        %1857 = vmax.xlane.f32.xlu0 %v1856
        %v1858 = vpop.xlane.xlu0 %1857
        %v1859 = vsel %vm1439, %v1753, -inf
        %1860 = vmax.xlane.f32.xlu0 %v1859
        %v1861 = vpop.xlane.xlu0 %1860
        %v1862 = vsel %vm1439, %v1756, -inf
        %1863 = vmax.xlane.f32.xlu0 %v1862
        %v1864 = vpop.xlane.xlu0 %1863
        %v1865 = vsel %vm1439, %v1761, -inf
        %1866 = vmax.xlane.f32.xlu0 %v1865
        %v1867 = vpop.xlane.xlu0 %1866
        %v1868 = vsel %vm1439, %v1764, -inf
        %1869 = vmax.xlane.f32.xlu0 %v1868
        %v1870 = vpop.xlane.xlu0 %1869
        %v1871 = vsel %vm1439, %v1769, -inf
        %1872 = vmax.xlane.f32.xlu0 %v1871
        %v1873 = vpop.xlane.xlu0 %1872
        %v1874 = vsel %vm1439, %v1772, -inf
        %1875 = vmax.xlane.f32.xlu0 %v1874
        %v1876 = vpop.xlane.xlu0 %1875
        %v1877 = vsel %vm1439, %v1777, -inf
        %1878 = vmax.xlane.f32.xlu0 %v1877
        %v1879 = vpop.xlane.xlu0 %1878
        %v1880 = vsel %vm1439, %v1780, -inf
        %1881 = vmax.xlane.f32.xlu0 %v1880
        %v1882 = vpop.xlane.xlu0 %1881
        %v1883 = vsel %vm1439, %v1785, -inf
        %1884 = vmax.xlane.f32.xlu0 %v1883
        %v1885 = vpop.xlane.xlu0 %1884
        %v1886 = vsel %vm1439, %v1788, -inf
        %1887 = vmax.xlane.f32.xlu0 %v1886
        %v1888 = vpop.xlane.xlu0 %1887
        %v1889 = vsel %vm1439, %v1793, -inf
        %1890 = vmax.xlane.f32.xlu0 %v1889
        %v1891 = vpop.xlane.xlu0 %1890
        %v1892 = vsel %vm1439, %v1796, -inf
        %1893 = vmax.xlane.f32.xlu0 %v1892
        %v1894 = vpop.xlane.xlu0 %1893
        %vm1895 = vcmask 7168
        %v1896 = vsel %vm1895, %v1442, %v1801
        %v1897 = vsel %vm1895, %v1445, %v1804
        %v1898 = vsel %vm1895, %v1448, %v1807
        %v1899 = vsel %vm1895, %v1451, %v1810
        %v1900 = vsel %vm1895, %v1454, %v1813
        %v1901 = vsel %vm1895, %v1457, %v1816
        %v1902 = vsel %vm1895, %v1460, %v1819
        %v1903 = vsel %vm1895, %v1463, %v1822
        %v1904 = vsel %vm1895, %v1466, %v1825
        %v1905 = vsel %vm1895, %v1469, %v1828
        %v1906 = vsel %vm1895, %v1472, %v1831
        %v1907 = vsel %vm1895, %v1475, %v1834
        %v1908 = vsel %vm1895, %v1478, %v1837
        %v1909 = vsel %vm1895, %v1481, %v1840
        %v1910 = vsel %vm1895, %v1484, %v1843
        %v1911 = vsel %vm1895, %v1487, %v1846
        %v1912 = vsel %vm1895, %v1490, %v1849
        %v1913 = vsel %vm1895, %v1493, %v1852
        %v1914 = vsel %vm1895, %v1496, %v1855
        %v1915 = vsel %vm1895, %v1499, %v1858
        %v1916 = vsel %vm1895, %v1502, %v1861
        %v1917 = vsel %vm1895, %v1505, %v1864
        %v1918 = vsel %vm1895, %v1508, %v1867
        %v1919 = vsel %vm1895, %v1511, %v1870
        %v1920 = vsel %vm1895, %v1514, %v1873
        %v1921 = vsel %vm1895, %v1517, %v1876
        %v1922 = vsel %vm1895, %v1520, %v1879
        %v1923 = vsel %vm1895, %v1523, %v1882
        %v1924 = vsel %vm1895, %v1526, %v1885
        %v1925 = vsel %vm1895, %v1529, %v1888
        %v1926 = vsel %vm1895, %v1532, %v1891
        %v1927 = vsel %vm1895, %v1535, %v1894
        %v1928 = vmul.f32 %v1896, 0.25
        %v1929 = vmul.f32 %v1897, 0.25
        %v1930 = vmul.f32 %v1898, 0.25
        %v1931 = vmul.f32 %v1899, 0.25
        %v1932 = vmul.f32 %v1900, 0.25
        %v1933 = vmul.f32 %v1901, 0.25
        %v1934 = vmul.f32 %v1902, 0.25
        %v1935 = vmul.f32 %v1903, 0.25
        %v1936 = vmul.f32 %v1904, 0.25
        %v1937 = vmul.f32 %v1905, 0.25
        %v1938 = vmul.f32 %v1906, 0.25
        %v1939 = vmul.f32 %v1907, 0.25
        %v1940 = vmul.f32 %v1908, 0.25
        %v1941 = vmul.f32 %v1909, 0.25
        %v1942 = vmul.f32 %v1910, 0.25
        %v1943 = vmul.f32 %v1911, 0.25
        %v1944 = vmul.f32 %v1912, 0.25
        %v1945 = vmul.f32 %v1913, 0.25
        %v1946 = vmul.f32 %v1914, 0.25
        %v1947 = vmul.f32 %v1915, 0.25
        %v1948 = vmul.f32 %v1916, 0.25
        %v1949 = vmul.f32 %v1917, 0.25
        %v1950 = vmul.f32 %v1918, 0.25
        %v1951 = vmul.f32 %v1919, 0.25
        %v1952 = vmul.f32 %v1920, 0.25
        %v1953 = vmul.f32 %v1921, 0.25
        %v1954 = vmul.f32 %v1922, 0.25
        %v1955 = vmul.f32 %v1923, 0.25
        %v1956 = vmul.f32 %v1924, 0.25
        %v1957 = vmul.f32 %v1925, 0.25
        %v1958 = vmul.f32 %v1926, 0.25
        %v1959 = vmul.f32 %v1927, 0.25
        %v1960 = vld [vmem:[%s9] sm:$0x1]
        %v1962 = vlaneseq
        %v1963 = vshrl.u32 %v1962, 7
        %v1964 = vsub.s32 0, %v1963
        %v1965 = vrot.slane %v1960, %v1964
        %v1967 = vadd.f32 %v1928, %v1965
        %v1968 = vadd.f32 %v1929, %v1965
        %v1969 = vadd.f32 %v1930, %v1965
        %v1970 = vadd.f32 %v1931, %v1965
        %v1971 = vadd.f32 %v1932, %v1965
        %v1972 = vadd.f32 %v1933, %v1965
        %v1973 = vadd.f32 %v1934, %v1965
        %v1974 = vadd.f32 %v1935, %v1965
        %v1975 = vadd.f32 %v1936, %v1965
        %v1976 = vadd.f32 %v1937, %v1965
        %v1977 = vadd.f32 %v1938, %v1965
        %v1978 = vadd.f32 %v1939, %v1965
        %v1979 = vadd.f32 %v1940, %v1965
        %v1980 = vadd.f32 %v1941, %v1965
        %v1981 = vadd.f32 %v1942, %v1965
        %v1982 = vadd.f32 %v1943, %v1965
        %v1983 = vadd.f32 %v1944, %v1965
        %v1984 = vadd.f32 %v1945, %v1965
        %v1985 = vadd.f32 %v1946, %v1965
        %v1986 = vadd.f32 %v1947, %v1965
        %v1987 = vadd.f32 %v1948, %v1965
        %v1988 = vadd.f32 %v1949, %v1965
        %v1989 = vadd.f32 %v1950, %v1965
        %v1990 = vadd.f32 %v1951, %v1965
        %v1991 = vadd.f32 %v1952, %v1965
        %v1992 = vadd.f32 %v1953, %v1965
        %v1993 = vadd.f32 %v1954, %v1965
        %v1994 = vadd.f32 %v1955, %v1965
        %v1995 = vadd.f32 %v1956, %v1965
        %v1996 = vadd.f32 %v1957, %v1965
        %v1997 = vadd.f32 %v1958, %v1965
        %v1998 = vadd.f32 %v1959, %v1965
        %v1999 = vsub.f32 0.0, %v1967
        %v2000 = vsub.f32 0.0, %v1968
        %v2001 = vsub.f32 0.0, %v1969
        %v2002 = vsub.f32 0.0, %v1970
        %v2003 = vsub.f32 0.0, %v1971
        %v2004 = vsub.f32 0.0, %v1972
        %v2005 = vsub.f32 0.0, %v1973
        %v2006 = vsub.f32 0.0, %v1974
        %v2007 = vsub.f32 0.0, %v1975
        %v2008 = vsub.f32 0.0, %v1976
        %v2009 = vsub.f32 0.0, %v1977
        %v2010 = vsub.f32 0.0, %v1978
        %v2011 = vsub.f32 0.0, %v1979
        %v2012 = vsub.f32 0.0, %v1980
        %v2013 = vsub.f32 0.0, %v1981
        %v2014 = vsub.f32 0.0, %v1982
        %v2015 = vsub.f32 0.0, %v1983
        %v2016 = vsub.f32 0.0, %v1984
        %v2017 = vsub.f32 0.0, %v1985
        %v2018 = vsub.f32 0.0, %v1986
        %v2019 = vsub.f32 0.0, %v1987
        %v2020 = vsub.f32 0.0, %v1988
        %v2021 = vsub.f32 0.0, %v1989
        %v2022 = vsub.f32 0.0, %v1990
        %v2023 = vsub.f32 0.0, %v1991
        %v2024 = vsub.f32 0.0, %v1992
        %v2025 = vsub.f32 0.0, %v1993
        %v2026 = vsub.f32 0.0, %v1994
        %v2027 = vsub.f32 0.0, %v1995
        %v2028 = vsub.f32 0.0, %v1996
        %v2029 = vsub.f32 0.0, %v1997
        %v2030 = vsub.f32 0.0, %v1998
        %v2031 = vmul.f32 %v1999, 1.442695
        %v2032 = vpow.pop %v2031
        %v2033 = vmul.f32 %v2000, 1.442695
        %v2034 = vpow.pop %v2033
        %v2035 = vmul.f32 %v2001, 1.442695
        %v2036 = vpow.pop %v2035
        %v2037 = vmul.f32 %v2002, 1.442695
        %v2038 = vpow.pop %v2037
        %v2039 = vmul.f32 %v2003, 1.442695
        %v2040 = vpow.pop %v2039
        %v2041 = vmul.f32 %v2004, 1.442695
        %v2042 = vpow.pop %v2041
        %v2043 = vmul.f32 %v2005, 1.442695
        %v2044 = vpow.pop %v2043
        %v2045 = vmul.f32 %v2006, 1.442695
        %v2046 = vpow.pop %v2045
        %v2047 = vmul.f32 %v2007, 1.442695
        %v2048 = vpow.pop %v2047
        %v2049 = vmul.f32 %v2008, 1.442695
        %v2050 = vpow.pop %v2049
        %v2051 = vmul.f32 %v2009, 1.442695
        %v2052 = vpow.pop %v2051
        %v2053 = vmul.f32 %v2010, 1.442695
        %v2054 = vpow.pop %v2053
        %v2055 = vmul.f32 %v2011, 1.442695
        %v2056 = vpow.pop %v2055
        %v2057 = vmul.f32 %v2012, 1.442695
        %v2058 = vpow.pop %v2057
        %v2059 = vmul.f32 %v2013, 1.442695
        %v2060 = vpow.pop %v2059
        %v2061 = vmul.f32 %v2014, 1.442695
        %v2062 = vpow.pop %v2061
        %v2063 = vmul.f32 %v2015, 1.442695
        %v2064 = vpow.pop %v2063
        %v2065 = vmul.f32 %v2016, 1.442695
        %v2066 = vpow.pop %v2065
        %v2067 = vmul.f32 %v2017, 1.442695
        %v2068 = vpow.pop %v2067
        %v2069 = vmul.f32 %v2018, 1.442695
        %v2070 = vpow.pop %v2069
        %v2071 = vmul.f32 %v2019, 1.442695
        %v2072 = vpow.pop %v2071
        %v2073 = vmul.f32 %v2020, 1.442695
        %v2074 = vpow.pop %v2073
        %v2075 = vmul.f32 %v2021, 1.442695
        %v2076 = vpow.pop %v2075
        %v2077 = vmul.f32 %v2022, 1.442695
        %v2078 = vpow.pop %v2077
        %v2079 = vmul.f32 %v2023, 1.442695
        %v2080 = vpow.pop %v2079
        %v2081 = vmul.f32 %v2024, 1.442695
        %v2082 = vpow.pop %v2081
        %v2083 = vmul.f32 %v2025, 1.442695
        %v2084 = vpow.pop %v2083
        %v2085 = vmul.f32 %v2026, 1.442695
        %v2086 = vpow.pop %v2085
        %v2087 = vmul.f32 %v2027, 1.442695
        %v2088 = vpow.pop %v2087
        %v2089 = vmul.f32 %v2028, 1.442695
        %v2090 = vpow.pop %v2089
        %v2091 = vmul.f32 %v2029, 1.442695
        %v2092 = vpow.pop %v2091
        %v2093 = vmul.f32 %v2030, 1.442695
        %v2094 = vpow.pop %v2093
        %v2095 = vadd.f32 %v2032, 1.0
        %v2096 = vadd.f32 %v2034, 1.0
        %v2097 = vadd.f32 %v2036, 1.0
        %v2098 = vadd.f32 %v2038, 1.0
        %v2099 = vadd.f32 %v2040, 1.0
        %v2100 = vadd.f32 %v2042, 1.0
        %v2101 = vadd.f32 %v2044, 1.0
        %v2102 = vadd.f32 %v2046, 1.0
        %v2103 = vadd.f32 %v2048, 1.0
        %v2104 = vadd.f32 %v2050, 1.0
        %v2105 = vadd.f32 %v2052, 1.0
        %v2106 = vadd.f32 %v2054, 1.0
        %v2107 = vadd.f32 %v2056, 1.0
        %v2108 = vadd.f32 %v2058, 1.0
        %v2109 = vadd.f32 %v2060, 1.0
        %v2110 = vadd.f32 %v2062, 1.0
        %v2111 = vadd.f32 %v2064, 1.0
        %v2112 = vadd.f32 %v2066, 1.0
        %v2113 = vadd.f32 %v2068, 1.0
        %v2114 = vadd.f32 %v2070, 1.0
        %v2115 = vadd.f32 %v2072, 1.0
        %v2116 = vadd.f32 %v2074, 1.0
        %v2117 = vadd.f32 %v2076, 1.0
        %v2118 = vadd.f32 %v2078, 1.0
        %v2119 = vadd.f32 %v2080, 1.0
        %v2120 = vadd.f32 %v2082, 1.0
        %v2121 = vadd.f32 %v2084, 1.0
        %v2122 = vadd.f32 %v2086, 1.0
        %v2123 = vadd.f32 %v2088, 1.0
        %v2124 = vadd.f32 %v2090, 1.0
        %v2125 = vadd.f32 %v2092, 1.0
        %v2126 = vadd.f32 %v2094, 1.0
        %v2127 = vrcp.pop %v2095
        %v2128 = vrcp.pop %v2096
        %v2129 = vrcp.pop %v2097
        %v2130 = vrcp.pop %v2098
        %v2131 = vrcp.pop %v2099
        %v2132 = vrcp.pop %v2100
        %v2133 = vrcp.pop %v2101
        %v2134 = vrcp.pop %v2102
        %v2135 = vrcp.pop %v2103
        %v2136 = vrcp.pop %v2104
        %v2137 = vrcp.pop %v2105
        %v2138 = vrcp.pop %v2106
        %v2139 = vrcp.pop %v2107
        %v2140 = vrcp.pop %v2108
        %v2141 = vrcp.pop %v2109
        %v2142 = vrcp.pop %v2110
        %v2143 = vrcp.pop %v2111
        %v2144 = vrcp.pop %v2112
        %v2145 = vrcp.pop %v2113
        %v2146 = vrcp.pop %v2114
        %v2147 = vrcp.pop %v2115
        %v2148 = vrcp.pop %v2116
        %v2149 = vrcp.pop %v2117
        %v2150 = vrcp.pop %v2118
        %v2151 = vrcp.pop %v2119
        %v2152 = vrcp.pop %v2120
        %v2153 = vrcp.pop %v2121
        %v2154 = vrcp.pop %v2122
        %v2155 = vrcp.pop %v2123
        %v2156 = vrcp.pop %v2124
        %v2157 = vrcp.pop %v2125
        %v2158 = vrcp.pop %v2126
        %v2159 = vld [vmem:[%s10] sm:$0x1]
        %v2161 = vlaneseq
        %v2162 = vshrl.u32 %v2161, 7
        %v2163 = vsub.s32 0, %v2162
        %v2164 = vrot.slane %v2159, %v2163
        %v2166 = vmul.f32 %v2127, %v2164
        %v2167 = vmul.f32 %v2128, %v2164
        %v2168 = vmul.f32 %v2129, %v2164
        %v2169 = vmul.f32 %v2130, %v2164
        %v2170 = vmul.f32 %v2131, %v2164
        %v2171 = vmul.f32 %v2132, %v2164
        %v2172 = vmul.f32 %v2133, %v2164
        %v2173 = vmul.f32 %v2134, %v2164
        %v2174 = vmul.f32 %v2135, %v2164
        %v2175 = vmul.f32 %v2136, %v2164
        %v2176 = vmul.f32 %v2137, %v2164
        %v2177 = vmul.f32 %v2138, %v2164
        %v2178 = vmul.f32 %v2139, %v2164
        %v2179 = vmul.f32 %v2140, %v2164
        %v2180 = vmul.f32 %v2141, %v2164
        %v2181 = vmul.f32 %v2142, %v2164
        %v2182 = vmul.f32 %v2143, %v2164
        %v2183 = vmul.f32 %v2144, %v2164
        %v2184 = vmul.f32 %v2145, %v2164
        %v2185 = vmul.f32 %v2146, %v2164
        %v2186 = vmul.f32 %v2147, %v2164
        %v2187 = vmul.f32 %v2148, %v2164
        %v2188 = vmul.f32 %v2149, %v2164
        %v2189 = vmul.f32 %v2150, %v2164
        %v2190 = vmul.f32 %v2151, %v2164
        %v2191 = vmul.f32 %v2152, %v2164
        %v2192 = vmul.f32 %v2153, %v2164
        %v2193 = vmul.f32 %v2154, %v2164
        %v2194 = vmul.f32 %v2155, %v2164
        %v2195 = vmul.f32 %v2156, %v2164
        %v2196 = vmul.f32 %v2157, %v2164
        %v2197 = vmul.f32 %v2158, %v2164
        %v2198 = vld [vmem:[%s8] sm:$0x3]
        %vm2199 = vcmask 15360
        %v2201 = vsel %vm2199, %v2166, 0
        %v2204 = vsel %vm2199, %v2167, 0
        %v2207 = vsel %vm2199, %v2168, 0
        %v2210 = vsel %vm2199, %v2169, 0
        %v2213 = vsel %vm2199, %v2170, 0
        %v2216 = vsel %vm2199, %v2171, 0
        %v2219 = vsel %vm2199, %v2172, 0
        %v2222 = vsel %vm2199, %v2173, 0
        %v2225 = vsel %vm2199, %v2174, 0
        %v2228 = vsel %vm2199, %v2175, 0
        %v2231 = vsel %vm2199, %v2176, 0
        %v2234 = vsel %vm2199, %v2177, 0
        %v2237 = vsel %vm2199, %v2178, 0
        %v2240 = vsel %vm2199, %v2179, 0
        %v2243 = vsel %vm2199, %v2180, 0
        %v2246 = vsel %vm2199, %v2181, 0
        %v2249 = vsel %vm2199, %v2182, 0
        %v2252 = vsel %vm2199, %v2183, 0
        %v2255 = vsel %vm2199, %v2184, 0
        %v2258 = vsel %vm2199, %v2185, 0
        %v2261 = vsel %vm2199, %v2186, 0
        %v2264 = vsel %vm2199, %v2187, 0
        %v2267 = vsel %vm2199, %v2188, 0
        %v2270 = vsel %vm2199, %v2189, 0
        %v2273 = vsel %vm2199, %v2190, 0
        %v2276 = vsel %vm2199, %v2191, 0
        %v2279 = vsel %vm2199, %v2192, 0
        %v2282 = vsel %vm2199, %v2193, 0
        %v2285 = vsel %vm2199, %v2194, 0
        %v2288 = vsel %vm2199, %v2195, 0
        %v2291 = vsel %vm2199, %v2196, 0
        %v2294 = vsel %vm2199, %v2197, 0
        %vm2296 = vcmask 1041408
        %v2298 = vsel %vm2296, %v2198, 0
        %2300 = vmatprep.subr.mxu0 0.0
        %2301 = vmatpush1.msra.mxu0 %v2298
        %2302 = vmatprep.subr.mxu0 0.0
        %2303 = vmatpush1.msra.mxu0 0.0
        %2304 = vmatprep.subr.mxu0 0.0
        %2305 = vmatpush1.msra.mxu0 0.0
        %2306 = vmatprep.subr.mxu0 0.0
        %2307 = vmatpush1.msra.mxu0 0.0
        %2308 = vmatprep.subr.mxu0 0.0
        %2309 = vmatpush1.msra.mxu0 0.0
        %2310 = vmatprep.subr.mxu0 0.0
        %2311 = vmatpush1.msra.mxu0 0.0
        %2312 = vmatprep.subr.mxu0 0.0
        %2313 = vmatpush1.msra.mxu0 0.0
        %2314 = vmatprep.subr.mxu0 0.0
        %2315 = vmatpush1.msra.mxu0 0.0
        %2316 = vmatprep.subr.mxu0 0.0
        %2317 = vmatpush1.msra.mxu0 0.0
        %2318 = vmatprep.subr.mxu0 0.0
        %2319 = vmatpush1.msra.mxu0 0.0
        %2320 = vmatprep.subr.mxu0 0.0
        %2321 = vmatpush1.msra.mxu0 0.0
        %2322 = vmatprep.subr.mxu0 0.0
        %2323 = vmatpush1.msra.mxu0 0.0
        %2324 = vmatprep.subr.mxu0 0.0
        %2325 = vmatpush1.msra.mxu0 0.0
        %2326 = vmatprep.subr.mxu0 0.0
        %2327 = vmatpush1.msra.mxu0 0.0
        %2328 = vmatprep.subr.mxu0 0.0
        %2329 = vmatpush1.msra.mxu0 0.0
        %2330 = vmatprep.subr.mxu0 0.0
        %2331 = vmatpush1.msra.mxu0 0.0
        %2332 = vmatprep.subr.mxu0 0.0
        %2333 = vmatpush1.msra.mxu0 0.0
        %2334 = vmatprep.subr.mxu0 0.0
        %2335 = vmatpush1.msra.mxu0 0.0
        %2336 = vmatprep.subr.mxu0 0.0
        %2337 = vmatpush1.msra.mxu0 0.0
        %2338 = vmatprep.subr.mxu0 0.0
        %2339 = vmatpush1.msra.mxu0 0.0
        %2340 = vmatprep.subr.mxu0 0.0
        %2341 = vmatpush1.msra.mxu0 0.0
        %2342 = vmatprep.subr.mxu0 0.0
        %2343 = vmatpush1.msra.mxu0 0.0
        %2344 = vmatprep.subr.mxu0 0.0
        %2345 = vmatpush1.msra.mxu0 0.0
        %2346 = vmatprep.subr.mxu0 0.0
        %2347 = vmatpush1.msra.mxu0 0.0
        %2348 = vmatprep.subr.mxu0 0.0
        %2349 = vmatpush1.msra.mxu0 0.0
        %2350 = vmatprep.subr.mxu0 0.0
        %2351 = vmatpush1.msra.mxu0 0.0
        %2352 = vmatprep.subr.mxu0 0.0
        %2353 = vmatpush1.msra.mxu0 0.0
        %2354 = vmatprep.subr.mxu0 0.0
        %2355 = vmatpush1.msra.mxu0 0.0
        %2356 = vmatprep.subr.mxu0 0.0
        %2357 = vmatpush1.msra.mxu0 0.0
        %2358 = vmatprep.subr.mxu0 0.0
        %2359 = vmatpush1.msra.mxu0 0.0
        %2360 = vmatprep.subr.mxu0 0.0
        %2361 = vmatpush1.msra.mxu0 0.0
        %2362 = vmatprep.subr.mxu0 0.0
        %2363 = vmatpush1.msra.mxu0 0.0
        %2364 = vmatprep.mubr.f32.mxu0 0.0
        %2365 = vmatmul.mubr.f32.gmra.mrb[0].mxu0 %v2201
        %v2366 = vpop.f32.mrb[0].mxu0
        %v2367 = vadd.f32 0.0, %v2366
        %v2368 = vpop.f32.mrb[0].mxu0
        %2369 = vmatprep.mubr.f32.mxu0 0.0
        %2370 = vmatmul.mubr.f32.gmra.mrb[0].mxu0 %v2204
        %v2371 = vpop.f32.mrb[0].mxu0
        %v2372 = vadd.f32 0.0, %v2371
        %v2373 = vpop.f32.mrb[0].mxu0
        %2374 = vmatprep.mubr.f32.mxu0 0.0
        %2375 = vmatmul.mubr.f32.gmra.mrb[0].mxu0 %v2207
        %v2376 = vpop.f32.mrb[0].mxu0
        %v2377 = vadd.f32 0.0, %v2376
        %v2378 = vpop.f32.mrb[0].mxu0
        %2379 = vmatprep.mubr.f32.mxu0 0.0
        %2380 = vmatmul.mubr.f32.gmra.mrb[0].mxu0 %v2210
        %v2381 = vpop.f32.mrb[0].mxu0
        %v2382 = vadd.f32 0.0, %v2381
        %v2383 = vpop.f32.mrb[0].mxu0
        %2384 = vmatprep.mubr.f32.mxu0 0.0
        %2385 = vmatmul.mubr.f32.gmra.mrb[0].mxu0 %v2213
        %v2386 = vpop.f32.mrb[0].mxu0
        %v2387 = vadd.f32 0.0, %v2386
        %v2388 = vpop.f32.mrb[0].mxu0
        %2389 = vmatprep.mubr.f32.mxu0 0.0
        %2390 = vmatmul.mubr.f32.gmra.mrb[0].mxu0 %v2216
        %v2391 = vpop.f32.mrb[0].mxu0
        %v2392 = vadd.f32 0.0, %v2391
        %v2393 = vpop.f32.mrb[0].mxu0
        %2394 = vmatprep.mubr.f32.mxu0 0.0
        %2395 = vmatmul.mubr.f32.gmra.mrb[0].mxu0 %v2219
        %v2396 = vpop.f32.mrb[0].mxu0
        %v2397 = vadd.f32 0.0, %v2396
        %v2398 = vpop.f32.mrb[0].mxu0
        %2399 = vmatprep.mubr.f32.mxu0 0.0
        %2400 = vmatmul.mubr.f32.gmra.mrb[0].mxu0 %v2222
        %v2401 = vpop.f32.mrb[0].mxu0
        %v2402 = vadd.f32 0.0, %v2401
        %v2403 = vpop.f32.mrb[0].mxu0
        %2404 = vmatprep.mubr.f32.mxu0 0.0
        %2405 = vmatmul.mubr.f32.gmra.mrb[0].mxu0 %v2225
        %v2406 = vpop.f32.mrb[0].mxu0
        %v2407 = vadd.f32 0.0, %v2406
        %v2408 = vpop.f32.mrb[0].mxu0
        %2409 = vmatprep.mubr.f32.mxu0 0.0
        %2410 = vmatmul.mubr.f32.gmra.mrb[0].mxu0 %v2228
        %v2411 = vpop.f32.mrb[0].mxu0
        %v2412 = vadd.f32 0.0, %v2411
        %v2413 = vpop.f32.mrb[0].mxu0
        %2414 = vmatprep.mubr.f32.mxu0 0.0
        %2415 = vmatmul.mubr.f32.gmra.mrb[0].mxu0 %v2231
        %v2416 = vpop.f32.mrb[0].mxu0
        %v2417 = vadd.f32 0.0, %v2416
        %v2418 = vpop.f32.mrb[0].mxu0
        %2419 = vmatprep.mubr.f32.mxu0 0.0
        %2420 = vmatmul.mubr.f32.gmra.mrb[0].mxu0 %v2234
        %v2421 = vpop.f32.mrb[0].mxu0
        %v2422 = vadd.f32 0.0, %v2421
        %v2423 = vpop.f32.mrb[0].mxu0
        %2424 = vmatprep.mubr.f32.mxu0 0.0
        %2425 = vmatmul.mubr.f32.gmra.mrb[0].mxu0 %v2237
        %v2426 = vpop.f32.mrb[0].mxu0
        %v2427 = vadd.f32 0.0, %v2426
        %v2428 = vpop.f32.mrb[0].mxu0
        %2429 = vmatprep.mubr.f32.mxu0 0.0
        %2430 = vmatmul.mubr.f32.gmra.mrb[0].mxu0 %v2240
        %v2431 = vpop.f32.mrb[0].mxu0
        %v2432 = vadd.f32 0.0, %v2431
        %v2433 = vpop.f32.mrb[0].mxu0
        %2434 = vmatprep.mubr.f32.mxu0 0.0
        %2435 = vmatmul.mubr.f32.gmra.mrb[0].mxu0 %v2243
        %v2436 = vpop.f32.mrb[0].mxu0
        %v2437 = vadd.f32 0.0, %v2436
        %v2438 = vpop.f32.mrb[0].mxu0
        %2439 = vmatprep.mubr.f32.mxu0 0.0
        %2440 = vmatmul.mubr.f32.gmra.mrb[0].mxu0 %v2246
        %v2441 = vpop.f32.mrb[0].mxu0
        %v2442 = vadd.f32 0.0, %v2441
        %v2443 = vpop.f32.mrb[0].mxu0
        %2444 = vmatprep.mubr.f32.mxu0 0.0
        %2445 = vmatmul.mubr.f32.gmra.mrb[0].mxu0 %v2249
        %v2446 = vpop.f32.mrb[0].mxu0
        %v2447 = vadd.f32 0.0, %v2446
        %v2448 = vpop.f32.mrb[0].mxu0
        %2449 = vmatprep.mubr.f32.mxu0 0.0
        %2450 = vmatmul.mubr.f32.gmra.mrb[0].mxu0 %v2252
        %v2451 = vpop.f32.mrb[0].mxu0
        %v2452 = vadd.f32 0.0, %v2451
        %v2453 = vpop.f32.mrb[0].mxu0
        %2454 = vmatprep.mubr.f32.mxu0 0.0
        %2455 = vmatmul.mubr.f32.gmra.mrb[0].mxu0 %v2255
        %v2456 = vpop.f32.mrb[0].mxu0
        %v2457 = vadd.f32 0.0, %v2456
        %v2458 = vpop.f32.mrb[0].mxu0
        %2459 = vmatprep.mubr.f32.mxu0 0.0
        %2460 = vmatmul.mubr.f32.gmra.mrb[0].mxu0 %v2258
        %v2461 = vpop.f32.mrb[0].mxu0
        %v2462 = vadd.f32 0.0, %v2461
        %v2463 = vpop.f32.mrb[0].mxu0
        %2464 = vmatprep.mubr.f32.mxu0 0.0
        %2465 = vmatmul.mubr.f32.gmra.mrb[0].mxu0 %v2261
        %v2466 = vpop.f32.mrb[0].mxu0
        %v2467 = vadd.f32 0.0, %v2466
        %v2468 = vpop.f32.mrb[0].mxu0
        %2469 = vmatprep.mubr.f32.mxu0 0.0
        %2470 = vmatmul.mubr.f32.gmra.mrb[0].mxu0 %v2264
        %v2471 = vpop.f32.mrb[0].mxu0
        %v2472 = vadd.f32 0.0, %v2471
        %v2473 = vpop.f32.mrb[0].mxu0
        %2474 = vmatprep.mubr.f32.mxu0 0.0
        %2475 = vmatmul.mubr.f32.gmra.mrb[0].mxu0 %v2267
        %v2476 = vpop.f32.mrb[0].mxu0
        %v2477 = vadd.f32 0.0, %v2476
        %v2478 = vpop.f32.mrb[0].mxu0
        %2479 = vmatprep.mubr.f32.mxu0 0.0
        %2480 = vmatmul.mubr.f32.gmra.mrb[0].mxu0 %v2270
        %v2481 = vpop.f32.mrb[0].mxu0
        %v2482 = vadd.f32 0.0, %v2481
        %v2483 = vpop.f32.mrb[0].mxu0
        %2484 = vmatprep.mubr.f32.mxu0 0.0
        %2485 = vmatmul.mubr.f32.gmra.mrb[0].mxu0 %v2273
        %v2486 = vpop.f32.mrb[0].mxu0
        %v2487 = vadd.f32 0.0, %v2486
        %v2488 = vpop.f32.mrb[0].mxu0
        %2489 = vmatprep.mubr.f32.mxu0 0.0
        %2490 = vmatmul.mubr.f32.gmra.mrb[0].mxu0 %v2276
        %v2491 = vpop.f32.mrb[0].mxu0
        %v2492 = vadd.f32 0.0, %v2491
        %v2493 = vpop.f32.mrb[0].mxu0
        %2494 = vmatprep.mubr.f32.mxu0 0.0
        %2495 = vmatmul.mubr.f32.gmra.mrb[0].mxu0 %v2279
        %v2496 = vpop.f32.mrb[0].mxu0
        %v2497 = vadd.f32 0.0, %v2496
        %v2498 = vpop.f32.mrb[0].mxu0
        %2499 = vmatprep.mubr.f32.mxu0 0.0
        %2500 = vmatmul.mubr.f32.gmra.mrb[0].mxu0 %v2282
        %v2501 = vpop.f32.mrb[0].mxu0
        %v2502 = vadd.f32 0.0, %v2501
        %v2503 = vpop.f32.mrb[0].mxu0
        %2504 = vmatprep.mubr.f32.mxu0 0.0
        %2505 = vmatmul.mubr.f32.gmra.mrb[0].mxu0 %v2285
        %v2506 = vpop.f32.mrb[0].mxu0
        %v2507 = vadd.f32 0.0, %v2506
        %v2508 = vpop.f32.mrb[0].mxu0
        %2509 = vmatprep.mubr.f32.mxu0 0.0
        %2510 = vmatmul.mubr.f32.gmra.mrb[0].mxu0 %v2288
        %v2511 = vpop.f32.mrb[0].mxu0
        %v2512 = vadd.f32 0.0, %v2511
        %v2513 = vpop.f32.mrb[0].mxu0
        %2514 = vmatprep.mubr.f32.mxu0 0.0
        %2515 = vmatmul.mubr.f32.gmra.mrb[0].mxu0 %v2291
        %v2516 = vpop.f32.mrb[0].mxu0
        %v2517 = vadd.f32 0.0, %v2516
        %v2518 = vpop.f32.mrb[0].mxu0
        %2519 = vmatprep.mubr.f32.mxu0 0.0
        %2520 = vmatmul.mubr.f32.gmra.mrb[0].mxu0 %v2294
        %v2521 = vpop.f32.mrb[0].mxu0
        %v2522 = vadd.f32 0.0, %v2521
        %v2523 = vpop.f32.mrb[0].mxu0
        %2524 = vdwg.mxu0
        %v2525 = vmul.f32 %v776, %v2367
        %v2526 = vmul.f32 %v779, %v2372
        %v2527 = vmul.f32 %v784, %v2377
        %v2528 = vmul.f32 %v787, %v2382
        %v2529 = vmul.f32 %v792, %v2387
        %v2530 = vmul.f32 %v795, %v2392
        %v2531 = vmul.f32 %v800, %v2397
        %v2532 = vmul.f32 %v803, %v2402
        %v2533 = vmul.f32 %v808, %v2407
        %v2534 = vmul.f32 %v811, %v2412
        %v2535 = vmul.f32 %v816, %v2417
        %v2536 = vmul.f32 %v819, %v2422
        %v2537 = vmul.f32 %v824, %v2427
        %v2538 = vmul.f32 %v827, %v2432
        %v2539 = vmul.f32 %v832, %v2437
        %v2540 = vmul.f32 %v835, %v2442
        %v2541 = vmul.f32 %v840, %v2447
        %v2542 = vmul.f32 %v843, %v2452
        %v2543 = vmul.f32 %v848, %v2457
        %v2544 = vmul.f32 %v851, %v2462
        %v2545 = vmul.f32 %v856, %v2467
        %v2546 = vmul.f32 %v859, %v2472
        %v2547 = vmul.f32 %v864, %v2477
        %v2548 = vmul.f32 %v867, %v2482
        %v2549 = vmul.f32 %v872, %v2487
        %v2550 = vmul.f32 %v875, %v2492
        %v2551 = vmul.f32 %v880, %v2497
        %v2552 = vmul.f32 %v883, %v2502
        %v2553 = vmul.f32 %v888, %v2507
        %v2554 = vmul.f32 %v891, %v2512
        %v2555 = vmul.f32 %v896, %v2517
        %v2556 = vmul.f32 %v899, %v2522
        %2557 = vst [vmem:[%s419] sm:$0xff] %v2525
        %2558 = vst [vmem:[%s419 + $0x8] sm:$0xff] %v2526
        %2559 = vst [vmem:[%s419 + $0x10] sm:$0xff] %v2527
        %2560 = vst [vmem:[%s419 + $0x18] sm:$0xff] %v2528
        %2561 = vst [vmem:[%s419 + $0x20] sm:$0xff] %v2529
        %2562 = vst [vmem:[%s419 + $0x28] sm:$0xff] %v2530
        %2563 = vst [vmem:[%s419 + $0x30] sm:$0xff] %v2531
        %2564 = vst [vmem:[%s419 + $0x38] sm:$0xff] %v2532
        %2565 = vst [vmem:[%s419 + $0x40] sm:$0xff] %v2533
        %2566 = vst [vmem:[%s419 + $0x48] sm:$0xff] %v2534
        %2567 = vst [vmem:[%s419 + $0x50] sm:$0xff] %v2535
        %2568 = vst [vmem:[%s419 + $0x58] sm:$0xff] %v2536
        %2569 = vst [vmem:[%s419 + $0x60] sm:$0xff] %v2537
        %2570 = vst [vmem:[%s419 + $0x68] sm:$0xff] %v2538
        %2571 = vst [vmem:[%s419 + $0x70] sm:$0xff] %v2539
        %2572 = vst [vmem:[%s419 + $0x78] sm:$0xff] %v2540
        %2573 = vst [vmem:[%s419 + $0x80] sm:$0xff] %v2541
        %2574 = vst [vmem:[%s419 + $0x88] sm:$0xff] %v2542
        %2575 = vst [vmem:[%s419 + $0x90] sm:$0xff] %v2543
        %2576 = vst [vmem:[%s419 + $0x98] sm:$0xff] %v2544
        %2577 = vst [vmem:[%s419 + $0xa0] sm:$0xff] %v2545
        %2578 = vst [vmem:[%s419 + $0xa8] sm:$0xff] %v2546
        %2579 = vst [vmem:[%s419 + $0xb0] sm:$0xff] %v2547
        %2580 = vst [vmem:[%s419 + $0xb8] sm:$0xff] %v2548
        %2581 = vst [vmem:[%s419 + $0xc0] sm:$0xff] %v2549
        %2582 = vst [vmem:[%s419 + $0xc8] sm:$0xff] %v2550
        %2583 = vst [vmem:[%s419 + $0xd0] sm:$0xff] %v2551
        %2584 = vst [vmem:[%s419 + $0xd8] sm:$0xff] %v2552
        %2585 = vst [vmem:[%s419 + $0xe0] sm:$0xff] %v2553
        %2586 = vst [vmem:[%s419 + $0xe8] sm:$0xff] %v2554
        %2587 = vst [vmem:[%s419 + $0xf0] sm:$0xff] %v2555
        %2588 = vst [vmem:[%s419 + $0xf8] sm:$0xff] %v2556
        %s2589 = sand.u32 %s290, 1
        %s2590 = scalar_lea.sflag [#allocation3], %s2589
        %s2591 = sand.u32 %s290, 1
        %s2592 = smul.addr %s2591, 256
        %s2593 = scalar_lea.vmem [#allocation2], %s2592
        // Predicated region
        $region65: #{tpu_custom_call.1} parent=63 // pred_check
          %p2594 = pneg %p300
        $region66: #{tpu_custom_call.1} parent=63 // pred_check_branch
          %2596 = sbr.rel (%p2594) target = $region68
        $region67: #{tpu_custom_call.1} parent=63 // pred_region
          %s2597 = smul.u32 32, %s30
          %s2599 = ssub.s32 4096, 4096
          %2600 = vsyncadd %s2590, %s2599
          %s2601 = smul.addr %s29, 32
          %s2602 = sadd.s32 %s2597, %s2601
          %s2603 = smul.addr %s2602, 128
          %s2604 = scalar_lea.hbm %s11, %s2603
          %s2605 = sshll.u32 %s2593, 4
          %s2606 = int_to_ptr.vmem [resolvable:$true] %s2605
          %2611 = dma.vmem_to_hbm [thread:$0]  %s2606, 4096, %s2604, %s2590, 128, 128, 8
        $region68: #{tpu_custom_call.1} parent=63 // pred_fallthru
          _
      $region64: #{tpu_custom_call.1} parent=5 // pred_fallthru
        _
      %p2612 = scmp.le.s32.totalorder 2, %s20
      // Predicated region
      $region69: #{tpu_custom_call.1} parent=5 // pred_check
        %p2613 = pneg %p2612
      $region70: #{tpu_custom_call.1} parent=5 // pred_check_branch
        %2615 = sbr.rel (%p2613) target = $region72
      $region71: #{tpu_custom_call.1} parent=5 // pred_region
        %s2616 = ssub.s32 %s20, 2
        // Predicated region
        $region73: #{tpu_custom_call.1} parent=71 // pred_check
          %p2617 = pneg %p306
        $region74: #{tpu_custom_call.1} parent=71 // pred_check_branch
          %2619 = sbr.rel (%p2617) target = $region76
        $region75: #{tpu_custom_call.1} parent=71 // pred_region
          %s2620 = sand.u32 %s291, 1
          %s2621 = scalar_lea.sflag [#allocation3], %s2620
          %s2622 = sand.u32 %s291, 1
          %s2623 = smul.addr %s2622, 256
          %s2624 = scalar_lea.vmem [#allocation2], %s2623
          %2625 = dma.done %s2621, 4096
        $region76: #{tpu_custom_call.1} parent=71 // pred_fallthru
          _
      $region72: #{tpu_custom_call.1} parent=5 // pred_fallthru
        _
    $region6: #{tpu_custom_call.1} parent=1 // loop_footer
      %s24 = sadd.s32 1, %s20
    $region7: #{tpu_custom_call.1} parent=1 // loop_footer_branch
      %19 = sbr.rel target = $region3
    $region8: #{tpu_custom_call.1} parent=1 // loop_exit
      _
    %2626 = vsyncpa [#allocation3], 1
    %s2627 = scalar_lea.sflag [#allocation3], 1
    %2628 = vsyncpa %s2627, 1

</llo_original>
